<compile_context>
chip_gen: v7x
topology: tpu7x:2x2x1
jax: 0.10.0
libtpu: 0.0.40
codegen_flags: <defaults>
</compile_context>

<pallas_src>
import functools

import jax
import jax.numpy as jnp
import numpy as np
from jax import lax
from jax.experimental import pallas as pl
from jax.experimental.pallas import tpu as pltpu

EPS = 1e-5  # nn.InstanceNorm2d default eps (affine=False, biased variance)


# ---------------------------------------------------------------------------
# Fused kernel body (one grid step == one batch element)
# ---------------------------------------------------------------------------
def _resblock_kernel(x_ref, w1_ref, w2_ref, mask_ref, o_ref, *scratch,
                     H, W, stack_taps):
    C = w1_ref.shape[0]
    Wp = W + 2
    T = H * Wp                    # flat conv-output extent; 2 garbage cols/row
    inv_n = 1.0 / float(H * W)
    mask = mask_ref[...]          # (1, T) f32: 1.0 on valid columns, else 0.0

    def reflect_pad_flat(get_row):
        """Reflect-padded image as a flat (C, Hp*Wp + 2) bf16 value.

        get_row(y) returns image row y as a (C, W) bf16 value.  Columns are
        reflected per row (width -> Wp), rows are reflected by duplicating
        padded rows 1 and H-2 at top/bottom, and 2 zero lanes are appended so
        every shifted tap slice below stays in range (and stays finite).
        """
        prows = []
        for y in range(H):
            r = get_row(y)
            prows.append(jnp.concatenate(
                [r[:, 1:2], r, r[:, W - 2:W - 1]], axis=1))      # (C, Wp)
        pieces = ([prows[1]] + prows
                  + [prows[H - 2], jnp.zeros((C, 2), jnp.bfloat16)])
        return jnp.concatenate(pieces, axis=1)                   # (C, Hp*Wp+2)

    def conv3x3_instnorm(slab, w):
        """9-tap conv via shifted lane slices + masked 2-pass instance norm."""
        if stack_taps:
            # Single K = 9C matmul; taps live in one reused VMEM scratch.
            taps_scr = scratch[0]                                # (9C, T) bf16
            for k in range(9):
                ky, kx = divmod(k, 3)
                d = ky * Wp + kx
                taps_scr[k * C:(k + 1) * C, :] = slab[:, d:d + T]
            z = jnp.dot(w, taps_scr[...],
                        preferred_element_type=jnp.float32)      # (C, T) f32
        else:
            # Small / unaligned C: 9 accumulating MXU dots (K-fill irrelevant).
            z = jnp.zeros((C, T), jnp.float32)
            for k in range(9):
                ky, kx = divmod(k, 3)
                d = ky * Wp + kx
                z = z + jnp.dot(w[:, k * C:(k + 1) * C], slab[:, d:d + T],
                                preferred_element_type=jnp.float32)
        # Two-pass instance-norm statistics over the H*W valid columns only.
        mean = jnp.sum(z * mask, axis=1, keepdims=True) * inv_n  # (C, 1)
        zc = (z - mean) * mask
        var = jnp.sum(zc * zc, axis=1, keepdims=True) * inv_n
        return (z - mean) * lax.rsqrt(var + EPS)

    x = x_ref[0]                                                 # (C, H*W) f32
    xb = x.astype(jnp.bfloat16)

    # stage 1: reflect-pad -> conv3x3 -> instance norm -> ReLU (all in VMEM)
    slab1 = reflect_pad_flat(lambda y: xb[:, y * W:(y + 1) * W])
    y1 = jnp.maximum(conv3x3_instnorm(slab1, w1_ref[...]), 0.0)  # (C, T) f32
    y1b = y1.astype(jnp.bfloat16)

    # stage 2: reflect-pad -> conv3x3 -> instance norm (reads only valid lanes)
    slab2 = reflect_pad_flat(lambda y: y1b[:, y * Wp:y * Wp + W])
    y2 = conv3x3_instnorm(slab2, w2_ref[...])                    # (C, T) f32

    # residual add; assemble a lane-dense (C, H*W) value (garbage cols dropped)
    out_rows = [x[:, y * W:(y + 1) * W] + y2[:, y * Wp:y * Wp + W]
                for y in range(H)]
    o_ref[0] = jnp.concatenate(out_rows, axis=1).astype(o_ref.dtype)


# ---------------------------------------------------------------------------
# JAX glue: weight reshaping, mask, VMEM sizing
# ---------------------------------------------------------------------------
def _wmat(w):
    """(C, C, 3, 3) -> (C, 9C) bf16; column block k = 3*ky + kx is w[:,:,ky,kx]."""
    C = w.shape[0]
    return jnp.transpose(w, (0, 2, 3, 1)).reshape(C, 9 * C).astype(jnp.bfloat16)


def _vmem_limit_bytes(C, HW, T, Lp):
    blocks = 2 * (2 * C * HW * 4)        # x + out blocks (f32, double-buffered)
    blocks += 2 * (2 * 9 * C * C * 2)    # two resident (C, 9C) bf16 weight mats
    blocks += 2 * T * 4                  # resident mask
    vals = 2 * C * Lp * 2                # two padded slabs (bf16 values)
    vals += 9 * C * T * 2                # stacked taps (scratch or temporaries)
    vals += 4 * C * T * 4                # z / y1 / y2 / centered temporaries
    est = 2 * (blocks + vals)            # 2x headroom for compiler temporaries
    # Never request all of v7x's 64 MiB physical VMEM per TensorCore.
    return int(max(32 << 20, min(48 << 20, est)))


# ---------------------------------------------------------------------------
# Residual block forward (single fused Pallas call)
# ---------------------------------------------------------------------------
@jax.jit
def residual_block(x, w1, b1, w2, b2):
    # b1/b2 mirror the nn.Module parameters but are dead work: a per-channel
    # conv bias cancels exactly under affine=False InstanceNorm.
    del b1, b2
    N, C, H, W = x.shape
    Wp, Hp = W + 2, H + 2
    HW, T, Lp = H * W, H * Wp, Hp * Wp + 2
    stack_taps = (C % 16 == 0)           # bf16-aligned -> single K=9C matmul

    # Valid-column mask (flat index t = y*Wp + x is valid iff x < W),
    # precomputed once so the kernel never runs an integer modulo per step.
    mask = (jnp.arange(T, dtype=jnp.int32) % Wp < W).astype(jnp.float32)[None, :]

    kernel = functools.partial(_resblock_kernel, H=H, W=W,
                               stack_taps=stack_taps)
    out_flat = pl.pallas_call(
        kernel,
        out_shape=jax.ShapeDtypeStruct((N, C, HW), jnp.float32),
        grid=(N,),
        in_specs=[
            pl.BlockSpec((1, C, HW), lambda b: (b, 0, 0)),  # x (flat, bitcast)
            pl.BlockSpec((C, 9 * C), lambda b: (0, 0)),     # w1 (resident)
            pl.BlockSpec((C, 9 * C), lambda b: (0, 0)),     # w2 (resident)
            pl.BlockSpec((1, T), lambda b: (0, 0)),         # mask (resident)
        ],
        out_specs=pl.BlockSpec((1, C, HW), lambda b: (b, 0, 0)),
        scratch_shapes=([pltpu.VMEM((9 * C, T), jnp.bfloat16)]
                        if stack_taps else []),
        compiler_params=pltpu.CompilerParams(
            # Batch axis parallel -> both v7x TensorCores busy for N >= 2.
            dimension_semantics=("parallel",),
            vmem_limit_bytes=_vmem_limit_bytes(C, HW, T, Lp),
        ),
    )(x.reshape(N, C, HW), _wmat(w1), _wmat(w2), mask)
    return out_flat.reshape(N, C, H, W)   # free bitcast back to (N, C, H, W)


# ---------------------------------------------------------------------------
# Pure-JAX reference (PyTorch semantics); matmul_dtype=bf16 gives the
# precision-matched variant for checking the bf16-MXU kernel.
# ---------------------------------------------------------------------------
def residual_block_ref(x, w1, b1, w2, b2, matmul_dtype=jnp.float32):
    def conv(z, w, b):
        zp = jnp.pad(z, ((0, 0), (0, 0), (1, 1), (1, 1)), mode="reflect")
        y = lax.conv_general_dilated(
            zp.astype(matmul_dtype), w.astype(matmul_dtype), (1, 1), "VALID",
            dimension_numbers=("NCHW", "OIHW", "NCHW"),
            preferred_element_type=jnp.float32)
        return y + b.reshape(1, -1, 1, 1)

    def inorm(z):
        m = jnp.mean(z, axis=(2, 3), keepdims=True)
        v = jnp.mean((z - m) ** 2, axis=(2, 3), keepdims=True)
        return (z - m) * lax.rsqrt(v + EPS)

    y = jnp.maximum(inorm(conv(x, w1, b1)), 0.0)
    y = inorm(conv(y, w2, b2))
    return x + y


# ---------------------------------------------------------------------------
if __name__ == "__main__":
    N, C, H, W = 2, 4, 16, 16
    key = jax.random.PRNGKey(0)
    kx_, k1, k2, k3, k4 = jax.random.split(key, 5)

    x = jax.random.normal(kx_, (N, C, H, W), jnp.float32)

    # Deterministic parameter init (PyTorch Conv2d-style uniform bounds).
    bound = 1.0 / float(np.sqrt(C * 3 * 3))
    w1 = jax.random.uniform(k1, (C, C, 3, 3), jnp.float32, -bound, bound)
    b1 = jax.random.uniform(k2, (C,), jnp.float32, -bound, bound)
    w2 = jax.random.uniform(k3, (C, C, 3, 3), jnp.float32, -bound, bound)
    b2 = jax.random.uniform(k4, (C,), jnp.float32, -bound, bound)

    out = jax.block_until_ready(residual_block(x, w1, b1, w2, b2))
    assert out.shape == x.shape and out.dtype == jnp.float32

    # Precision-matched check: reference also feeds the convs bf16 operands
    # with f32 accumulation (same model as the kernel's bf16 MXU path).
    ref_bf16 = residual_block_ref(x, w1, b1, w2, b2, matmul_dtype=jnp.bfloat16)
    np.testing.assert_allclose(np.asarray(out), np.asarray(ref_bf16),
                               atol=1e-2, rtol=1e-2)

    # Coarse sanity check vs the exact f32 PyTorch-semantics reference; the gap
    # is purely the intended bf16 quantization of the matmul operands.
    ref_f32 = residual_block_ref(x, w1, b1, w2, b2)
    np.testing.assert_allclose(np.asarray(out), np.asarray(ref_f32),
                               atol=2e-1, rtol=2e-1)

    print("KERNEL_OK")
</pallas_src>

<mosaic_0001>
module attributes {stable_mosaic.version = 11 : i64} {
  func.func @_resblock_kernel(%arg0: i32, %arg1: memref<1x4x256xf32, #tpu.memory_space<vmem>>, %arg2: memref<4x36xbf16, #tpu.memory_space<vmem>>, %arg3: memref<4x36xbf16, #tpu.memory_space<vmem>>, %arg4: memref<1x288xf32, #tpu.memory_space<vmem>>, %arg5: memref<1x4x256xf32, #tpu.memory_space<vmem>>) attributes {dimension_semantics = [#tpu.dimension_semantics<parallel>], iteration_bounds = array<i64: 2>, scalar_prefetch = 0 : i64, scratch_operands = 0 : i64, tpu.core_type = #tpu.core_type<tc>, window_params = [{transform_indices = @transform_0, window_bounds = array<i64: 1, 4, 256>}, {pipeline_mode = #tpu.pipeline_mode<synchronous>, transform_indices = @transform_1, window_bounds = array<i64: 4, 36>}, {pipeline_mode = #tpu.pipeline_mode<synchronous>, transform_indices = @transform_2, window_bounds = array<i64: 4, 36>}, {pipeline_mode = #tpu.pipeline_mode<synchronous>, transform_indices = @transform_3, window_bounds = array<i64: 1, 288>}, {transform_indices = @transform_4, window_bounds = array<i64: 1, 4, 256>}]} {
    %c0 = arith.constant 0 : index
    %c0_0 = arith.constant 0 : index
    %0 = vector.load %arg4[%c0, %c0_0] : memref<1x288xf32, #tpu.memory_space<vmem>>, vector<1x288xf32>
    %c0_1 = arith.constant 0 : index
    %c0_2 = arith.constant 0 : index
    %c0_3 = arith.constant 0 : index
    %1 = vector.load %arg1[%c0_1, %c0_2, %c0_3] : memref<1x4x256xf32, #tpu.memory_space<vmem>>, vector<1x4x256xf32>
    %2 = vector.shape_cast %1 : vector<1x4x256xf32> to vector<4x256xf32>
    %3 = arith.truncf %2 : vector<4x256xf32> to vector<4x256xbf16>
    %4 = vector.extract_strided_slice %3 {offsets = [0, 0], sizes = [4, 16], strides = [1, 1]} : vector<4x256xbf16> to vector<4x16xbf16>
    %5 = vector.extract_strided_slice %4 {offsets = [0, 1], sizes = [4, 1], strides = [1, 1]} : vector<4x16xbf16> to vector<4x1xbf16>
    %6 = vector.extract_strided_slice %4 {offsets = [0, 14], sizes = [4, 1], strides = [1, 1]} : vector<4x16xbf16> to vector<4x1xbf16>
    %7 = tpu.concatenate %5, %4, %6 in 1 : vector<4x1xbf16>, vector<4x16xbf16>, vector<4x1xbf16> -> vector<4x18xbf16>
    %8 = vector.extract_strided_slice %3 {offsets = [0, 16], sizes = [4, 16], strides = [1, 1]} : vector<4x256xbf16> to vector<4x16xbf16>
    %9 = vector.extract_strided_slice %8 {offsets = [0, 1], sizes = [4, 1], strides = [1, 1]} : vector<4x16xbf16> to vector<4x1xbf16>
    %10 = vector.extract_strided_slice %8 {offsets = [0, 14], sizes = [4, 1], strides = [1, 1]} : vector<4x16xbf16> to vector<4x1xbf16>
    %11 = tpu.concatenate %9, %8, %10 in 1 : vector<4x1xbf16>, vector<4x16xbf16>, vector<4x1xbf16> -> vector<4x18xbf16>
    %12 = vector.extract_strided_slice %3 {offsets = [0, 32], sizes = [4, 16], strides = [1, 1]} : vector<4x256xbf16> to vector<4x16xbf16>
    %13 = vector.extract_strided_slice %12 {offsets = [0, 1], sizes = [4, 1], strides = [1, 1]} : vector<4x16xbf16> to vector<4x1xbf16>
    %14 = vector.extract_strided_slice %12 {offsets = [0, 14], sizes = [4, 1], strides = [1, 1]} : vector<4x16xbf16> to vector<4x1xbf16>
    %15 = tpu.concatenate %13, %12, %14 in 1 : vector<4x1xbf16>, vector<4x16xbf16>, vector<4x1xbf16> -> vector<4x18xbf16>
    %16 = vector.extract_strided_slice %3 {offsets = [0, 48], sizes = [4, 16], strides = [1, 1]} : vector<4x256xbf16> to vector<4x16xbf16>
    %17 = vector.extract_strided_slice %16 {offsets = [0, 1], sizes = [4, 1], strides = [1, 1]} : vector<4x16xbf16> to vector<4x1xbf16>
    %18 = vector.extract_strided_slice %16 {offsets = [0, 14], sizes = [4, 1], strides = [1, 1]} : vector<4x16xbf16> to vector<4x1xbf16>
    %19 = tpu.concatenate %17, %16, %18 in 1 : vector<4x1xbf16>, vector<4x16xbf16>, vector<4x1xbf16> -> vector<4x18xbf16>
    %20 = vector.extract_strided_slice %3 {offsets = [0, 64], sizes = [4, 16], strides = [1, 1]} : vector<4x256xbf16> to vector<4x16xbf16>
    %21 = vector.extract_strided_slice %20 {offsets = [0, 1], sizes = [4, 1], strides = [1, 1]} : vector<4x16xbf16> to vector<4x1xbf16>
    %22 = vector.extract_strided_slice %20 {offsets = [0, 14], sizes = [4, 1], strides = [1, 1]} : vector<4x16xbf16> to vector<4x1xbf16>
    %23 = tpu.concatenate %21, %20, %22 in 1 : vector<4x1xbf16>, vector<4x16xbf16>, vector<4x1xbf16> -> vector<4x18xbf16>
    %24 = vector.extract_strided_slice %3 {offsets = [0, 80], sizes = [4, 16], strides = [1, 1]} : vector<4x256xbf16> to vector<4x16xbf16>
    %25 = vector.extract_strided_slice %24 {offsets = [0, 1], sizes = [4, 1], strides = [1, 1]} : vector<4x16xbf16> to vector<4x1xbf16>
    %26 = vector.extract_strided_slice %24 {offsets = [0, 14], sizes = [4, 1], strides = [1, 1]} : vector<4x16xbf16> to vector<4x1xbf16>
    %27 = tpu.concatenate %25, %24, %26 in 1 : vector<4x1xbf16>, vector<4x16xbf16>, vector<4x1xbf16> -> vector<4x18xbf16>
    %28 = vector.extract_strided_slice %3 {offsets = [0, 96], sizes = [4, 16], strides = [1, 1]} : vector<4x256xbf16> to vector<4x16xbf16>
    %29 = vector.extract_strided_slice %28 {offsets = [0, 1], sizes = [4, 1], strides = [1, 1]} : vector<4x16xbf16> to vector<4x1xbf16>
    %30 = vector.extract_strided_slice %28 {offsets = [0, 14], sizes = [4, 1], strides = [1, 1]} : vector<4x16xbf16> to vector<4x1xbf16>
    %31 = tpu.concatenate %29, %28, %30 in 1 : vector<4x1xbf16>, vector<4x16xbf16>, vector<4x1xbf16> -> vector<4x18xbf16>
    %32 = vector.extract_strided_slice %3 {offsets = [0, 112], sizes = [4, 16], strides = [1, 1]} : vector<4x256xbf16> to vector<4x16xbf16>
    %33 = vector.extract_strided_slice %32 {offsets = [0, 1], sizes = [4, 1], strides = [1, 1]} : vector<4x16xbf16> to vector<4x1xbf16>
    %34 = vector.extract_strided_slice %32 {offsets = [0, 14], sizes = [4, 1], strides = [1, 1]} : vector<4x16xbf16> to vector<4x1xbf16>
    %35 = tpu.concatenate %33, %32, %34 in 1 : vector<4x1xbf16>, vector<4x16xbf16>, vector<4x1xbf16> -> vector<4x18xbf16>
    %36 = vector.extract_strided_slice %3 {offsets = [0, 128], sizes = [4, 16], strides = [1, 1]} : vector<4x256xbf16> to vector<4x16xbf16>
    %37 = vector.extract_strided_slice %36 {offsets = [0, 1], sizes = [4, 1], strides = [1, 1]} : vector<4x16xbf16> to vector<4x1xbf16>
    %38 = vector.extract_strided_slice %36 {offsets = [0, 14], sizes = [4, 1], strides = [1, 1]} : vector<4x16xbf16> to vector<4x1xbf16>
    %39 = tpu.concatenate %37, %36, %38 in 1 : vector<4x1xbf16>, vector<4x16xbf16>, vector<4x1xbf16> -> vector<4x18xbf16>
    %40 = vector.extract_strided_slice %3 {offsets = [0, 144], sizes = [4, 16], strides = [1, 1]} : vector<4x256xbf16> to vector<4x16xbf16>
    %41 = vector.extract_strided_slice %40 {offsets = [0, 1], sizes = [4, 1], strides = [1, 1]} : vector<4x16xbf16> to vector<4x1xbf16>
    %42 = vector.extract_strided_slice %40 {offsets = [0, 14], sizes = [4, 1], strides = [1, 1]} : vector<4x16xbf16> to vector<4x1xbf16>
    %43 = tpu.concatenate %41, %40, %42 in 1 : vector<4x1xbf16>, vector<4x16xbf16>, vector<4x1xbf16> -> vector<4x18xbf16>
    %44 = vector.extract_strided_slice %3 {offsets = [0, 160], sizes = [4, 16], strides = [1, 1]} : vector<4x256xbf16> to vector<4x16xbf16>
    %45 = vector.extract_strided_slice %44 {offsets = [0, 1], sizes = [4, 1], strides = [1, 1]} : vector<4x16xbf16> to vector<4x1xbf16>
    %46 = vector.extract_strided_slice %44 {offsets = [0, 14], sizes = [4, 1], strides = [1, 1]} : vector<4x16xbf16> to vector<4x1xbf16>
    %47 = tpu.concatenate %45, %44, %46 in 1 : vector<4x1xbf16>, vector<4x16xbf16>, vector<4x1xbf16> -> vector<4x18xbf16>
    %48 = vector.extract_strided_slice %3 {offsets = [0, 176], sizes = [4, 16], strides = [1, 1]} : vector<4x256xbf16> to vector<4x16xbf16>
    %49 = vector.extract_strided_slice %48 {offsets = [0, 1], sizes = [4, 1], strides = [1, 1]} : vector<4x16xbf16> to vector<4x1xbf16>
    %50 = vector.extract_strided_slice %48 {offsets = [0, 14], sizes = [4, 1], strides = [1, 1]} : vector<4x16xbf16> to vector<4x1xbf16>
    %51 = tpu.concatenate %49, %48, %50 in 1 : vector<4x1xbf16>, vector<4x16xbf16>, vector<4x1xbf16> -> vector<4x18xbf16>
    %52 = vector.extract_strided_slice %3 {offsets = [0, 192], sizes = [4, 16], strides = [1, 1]} : vector<4x256xbf16> to vector<4x16xbf16>
    %53 = vector.extract_strided_slice %52 {offsets = [0, 1], sizes = [4, 1], strides = [1, 1]} : vector<4x16xbf16> to vector<4x1xbf16>
    %54 = vector.extract_strided_slice %52 {offsets = [0, 14], sizes = [4, 1], strides = [1, 1]} : vector<4x16xbf16> to vector<4x1xbf16>
    %55 = tpu.concatenate %53, %52, %54 in 1 : vector<4x1xbf16>, vector<4x16xbf16>, vector<4x1xbf16> -> vector<4x18xbf16>
    %56 = vector.extract_strided_slice %3 {offsets = [0, 208], sizes = [4, 16], strides = [1, 1]} : vector<4x256xbf16> to vector<4x16xbf16>
    %57 = vector.extract_strided_slice %56 {offsets = [0, 1], sizes = [4, 1], strides = [1, 1]} : vector<4x16xbf16> to vector<4x1xbf16>
    %58 = vector.extract_strided_slice %56 {offsets = [0, 14], sizes = [4, 1], strides = [1, 1]} : vector<4x16xbf16> to vector<4x1xbf16>
    %59 = tpu.concatenate %57, %56, %58 in 1 : vector<4x1xbf16>, vector<4x16xbf16>, vector<4x1xbf16> -> vector<4x18xbf16>
    %60 = vector.extract_strided_slice %3 {offsets = [0, 224], sizes = [4, 16], strides = [1, 1]} : vector<4x256xbf16> to vector<4x16xbf16>
    %61 = vector.extract_strided_slice %60 {offsets = [0, 1], sizes = [4, 1], strides = [1, 1]} : vector<4x16xbf16> to vector<4x1xbf16>
    %62 = vector.extract_strided_slice %60 {offsets = [0, 14], sizes = [4, 1], strides = [1, 1]} : vector<4x16xbf16> to vector<4x1xbf16>
    %63 = tpu.concatenate %61, %60, %62 in 1 : vector<4x1xbf16>, vector<4x16xbf16>, vector<4x1xbf16> -> vector<4x18xbf16>
    %64 = vector.extract_strided_slice %3 {offsets = [0, 240], sizes = [4, 16], strides = [1, 1]} : vector<4x256xbf16> to vector<4x16xbf16>
    %65 = vector.extract_strided_slice %64 {offsets = [0, 1], sizes = [4, 1], strides = [1, 1]} : vector<4x16xbf16> to vector<4x1xbf16>
    %66 = vector.extract_strided_slice %64 {offsets = [0, 14], sizes = [4, 1], strides = [1, 1]} : vector<4x16xbf16> to vector<4x1xbf16>
    %67 = tpu.concatenate %65, %64, %66 in 1 : vector<4x1xbf16>, vector<4x16xbf16>, vector<4x1xbf16> -> vector<4x18xbf16>
    %cst = arith.constant 0.000000e+00 : bf16
    %68 = vector.broadcast %cst : bf16 to vector<4x2xbf16>
    %69 = tpu.concatenate %11, %7, %11, %15, %19, %23, %27, %31, %35, %39, %43, %47, %51, %55, %59, %63 in 1 : vector<4x18xbf16>, vector<4x18xbf16>, vector<4x18xbf16>, vector<4x18xbf16>, vector<4x18xbf16>, vector<4x18xbf16>, vector<4x18xbf16>, vector<4x18xbf16>, vector<4x18xbf16>, vector<4x18xbf16>, vector<4x18xbf16>, vector<4x18xbf16>, vector<4x18xbf16>, vector<4x18xbf16>, vector<4x18xbf16>, vector<4x18xbf16> -> vector<4x288xbf16>
    %70 = tpu.concatenate %67, %63, %68 in 1 : vector<4x18xbf16>, vector<4x18xbf16>, vector<4x2xbf16> -> vector<4x38xbf16>
    %71 = tpu.concatenate %69, %70 in 1 : vector<4x288xbf16>, vector<4x38xbf16> -> vector<4x326xbf16>
    %c0_4 = arith.constant 0 : index
    %c0_5 = arith.constant 0 : index
    %72 = vector.load %arg2[%c0_4, %c0_5] : memref<4x36xbf16, #tpu.memory_space<vmem>>, vector<4x36xbf16>
    %cst_6 = arith.constant 0.000000e+00 : f32
    %73 = vector.broadcast %cst_6 : f32 to vector<4x288xf32>
    %74 = vector.extract_strided_slice %72 {offsets = [0, 0], sizes = [4, 4], strides = [1, 1]} : vector<4x36xbf16> to vector<4x4xbf16>
    %75 = vector.extract_strided_slice %71 {offsets = [0, 0], sizes = [4, 288], strides = [1, 1]} : vector<4x326xbf16> to vector<4x288xbf16>
    %cst_7 = arith.constant dense<0.000000e+00> : vector<4x288xf32>
    %76 = tpu.matmul %74, %75, %cst_7 {dimension_numbers = #tpu.dot_dimension_numbers<[1], [0], [0], [1], [0, 0, 1, 1], [], []>} : vector<4x4xbf16>, vector<4x288xbf16>, vector<4x288xf32> -> vector<4x288xf32>
    %77 = arith.addf %73, %76 : vector<4x288xf32>
    %78 = vector.extract_strided_slice %72 {offsets = [0, 4], sizes = [4, 4], strides = [1, 1]} : vector<4x36xbf16> to vector<4x4xbf16>
    %79 = vector.extract_strided_slice %71 {offsets = [0, 1], sizes = [4, 288], strides = [1, 1]} : vector<4x326xbf16> to vector<4x288xbf16>
    %cst_8 = arith.constant dense<0.000000e+00> : vector<4x288xf32>
    %80 = tpu.matmul %78, %79, %cst_8 {dimension_numbers = #tpu.dot_dimension_numbers<[1], [0], [0], [1], [0, 0, 1, 1], [], []>} : vector<4x4xbf16>, vector<4x288xbf16>, vector<4x288xf32> -> vector<4x288xf32>
    %81 = arith.addf %77, %80 : vector<4x288xf32>
    %82 = vector.extract_strided_slice %72 {offsets = [0, 8], sizes = [4, 4], strides = [1, 1]} : vector<4x36xbf16> to vector<4x4xbf16>
    %83 = vector.extract_strided_slice %71 {offsets = [0, 2], sizes = [4, 288], strides = [1, 1]} : vector<4x326xbf16> to vector<4x288xbf16>
    %cst_9 = arith.constant dense<0.000000e+00> : vector<4x288xf32>
    %84 = tpu.matmul %82, %83, %cst_9 {dimension_numbers = #tpu.dot_dimension_numbers<[1], [0], [0], [1], [0, 0, 1, 1], [], []>} : vector<4x4xbf16>, vector<4x288xbf16>, vector<4x288xf32> -> vector<4x288xf32>
    %85 = arith.addf %81, %84 : vector<4x288xf32>
    %86 = vector.extract_strided_slice %72 {offsets = [0, 12], sizes = [4, 4], strides = [1, 1]} : vector<4x36xbf16> to vector<4x4xbf16>
    %87 = vector.extract_strided_slice %71 {offsets = [0, 18], sizes = [4, 288], strides = [1, 1]} : vector<4x326xbf16> to vector<4x288xbf16>
    %cst_10 = arith.constant dense<0.000000e+00> : vector<4x288xf32>
    %88 = tpu.matmul %86, %87, %cst_10 {dimension_numbers = #tpu.dot_dimension_numbers<[1], [0], [0], [1], [0, 0, 1, 1], [], []>} : vector<4x4xbf16>, vector<4x288xbf16>, vector<4x288xf32> -> vector<4x288xf32>
    %89 = arith.addf %85, %88 : vector<4x288xf32>
    %90 = vector.extract_strided_slice %72 {offsets = [0, 16], sizes = [4, 4], strides = [1, 1]} : vector<4x36xbf16> to vector<4x4xbf16>
    %91 = vector.extract_strided_slice %71 {offsets = [0, 19], sizes = [4, 288], strides = [1, 1]} : vector<4x326xbf16> to vector<4x288xbf16>
    %cst_11 = arith.constant dense<0.000000e+00> : vector<4x288xf32>
    %92 = tpu.matmul %90, %91, %cst_11 {dimension_numbers = #tpu.dot_dimension_numbers<[1], [0], [0], [1], [0, 0, 1, 1], [], []>} : vector<4x4xbf16>, vector<4x288xbf16>, vector<4x288xf32> -> vector<4x288xf32>
    %93 = arith.addf %89, %92 : vector<4x288xf32>
    %94 = vector.extract_strided_slice %72 {offsets = [0, 20], sizes = [4, 4], strides = [1, 1]} : vector<4x36xbf16> to vector<4x4xbf16>
    %95 = vector.extract_strided_slice %71 {offsets = [0, 20], sizes = [4, 288], strides = [1, 1]} : vector<4x326xbf16> to vector<4x288xbf16>
    %cst_12 = arith.constant dense<0.000000e+00> : vector<4x288xf32>
    %96 = tpu.matmul %94, %95, %cst_12 {dimension_numbers = #tpu.dot_dimension_numbers<[1], [0], [0], [1], [0, 0, 1, 1], [], []>} : vector<4x4xbf16>, vector<4x288xbf16>, vector<4x288xf32> -> vector<4x288xf32>
    %97 = arith.addf %93, %96 : vector<4x288xf32>
    %98 = vector.extract_strided_slice %72 {offsets = [0, 24], sizes = [4, 4], strides = [1, 1]} : vector<4x36xbf16> to vector<4x4xbf16>
    %99 = vector.extract_strided_slice %71 {offsets = [0, 36], sizes = [4, 288], strides = [1, 1]} : vector<4x326xbf16> to vector<4x288xbf16>
    %cst_13 = arith.constant dense<0.000000e+00> : vector<4x288xf32>
    %100 = tpu.matmul %98, %99, %cst_13 {dimension_numbers = #tpu.dot_dimension_numbers<[1], [0], [0], [1], [0, 0, 1, 1], [], []>} : vector<4x4xbf16>, vector<4x288xbf16>, vector<4x288xf32> -> vector<4x288xf32>
    %101 = arith.addf %97, %100 : vector<4x288xf32>
    %102 = vector.extract_strided_slice %72 {offsets = [0, 28], sizes = [4, 4], strides = [1, 1]} : vector<4x36xbf16> to vector<4x4xbf16>
    %103 = vector.extract_strided_slice %71 {offsets = [0, 37], sizes = [4, 288], strides = [1, 1]} : vector<4x326xbf16> to vector<4x288xbf16>
    %cst_14 = arith.constant dense<0.000000e+00> : vector<4x288xf32>
    %104 = tpu.matmul %102, %103, %cst_14 {dimension_numbers = #tpu.dot_dimension_numbers<[1], [0], [0], [1], [0, 0, 1, 1], [], []>} : vector<4x4xbf16>, vector<4x288xbf16>, vector<4x288xf32> -> vector<4x288xf32>
    %105 = arith.addf %101, %104 : vector<4x288xf32>
    %106 = vector.extract_strided_slice %72 {offsets = [0, 32], sizes = [4, 4], strides = [1, 1]} : vector<4x36xbf16> to vector<4x4xbf16>
    %107 = vector.extract_strided_slice %71 {offsets = [0, 38], sizes = [4, 288], strides = [1, 1]} : vector<4x326xbf16> to vector<4x288xbf16>
    %cst_15 = arith.constant dense<0.000000e+00> : vector<4x288xf32>
    %108 = tpu.matmul %106, %107, %cst_15 {dimension_numbers = #tpu.dot_dimension_numbers<[1], [0], [0], [1], [0, 0, 1, 1], [], []>} : vector<4x4xbf16>, vector<4x288xbf16>, vector<4x288xf32> -> vector<4x288xf32>
    %109 = arith.addf %105, %108 : vector<4x288xf32>
    %110 = vector.broadcast %0 : vector<1x288xf32> to vector<4x288xf32>
    %111 = arith.mulf %109, %110 : vector<4x288xf32>
    %cst_16 = arith.constant dense<0.000000e+00> : vector<4xf32>
    %112 = vector.multi_reduction <add>, %111, %cst_16 [1] : vector<4x288xf32> to vector<4xf32>
    %113 = vector.shape_cast %112 : vector<4xf32> to vector<4x1xf32>
    %cst_17 = arith.constant 3.906250e-03 : f32
    %114 = vector.broadcast %cst_17 : f32 to vector<4x1xf32>
    %115 = arith.mulf %113, %114 : vector<4x1xf32>
    %116 = vector.broadcast %115 : vector<4x1xf32> to vector<4x288xf32>
    %117 = arith.subf %109, %116 : vector<4x288xf32>
    %118 = vector.broadcast %0 : vector<1x288xf32> to vector<4x288xf32>
    %119 = arith.mulf %117, %118 : vector<4x288xf32>
    %120 = arith.mulf %119, %119 : vector<4x288xf32>
    %cst_18 = arith.constant dense<0.000000e+00> : vector<4xf32>
    %121 = vector.multi_reduction <add>, %120, %cst_18 [1] : vector<4x288xf32> to vector<4xf32>
    %122 = vector.shape_cast %121 : vector<4xf32> to vector<4x1xf32>
    %cst_19 = arith.constant 3.906250e-03 : f32
    %123 = vector.broadcast %cst_19 : f32 to vector<4x1xf32>
    %124 = arith.mulf %122, %123 : vector<4x1xf32>
    %125 = vector.broadcast %115 : vector<4x1xf32> to vector<4x288xf32>
    %126 = arith.subf %109, %125 : vector<4x288xf32>
    %cst_20 = arith.constant 9.99999974E-6 : f32
    %127 = vector.broadcast %cst_20 : f32 to vector<4x1xf32>
    %128 = arith.addf %124, %127 : vector<4x1xf32>
    %129 = math.rsqrt %128 : vector<4x1xf32>
    %130 = vector.broadcast %129 : vector<4x1xf32> to vector<4x288xf32>
    %131 = arith.mulf %126, %130 : vector<4x288xf32>
    %cst_21 = arith.constant 0.000000e+00 : f32
    %132 = vector.broadcast %cst_21 : f32 to vector<4x288xf32>
    %133 = arith.maximumf %131, %132 : vector<4x288xf32>
    %134 = arith.truncf %133 : vector<4x288xf32> to vector<4x288xbf16>
    %135 = vector.extract_strided_slice %134 {offsets = [0, 0], sizes = [4, 16], strides = [1, 1]} : vector<4x288xbf16> to vector<4x16xbf16>
    %136 = vector.extract_strided_slice %135 {offsets = [0, 1], sizes = [4, 1], strides = [1, 1]} : vector<4x16xbf16> to vector<4x1xbf16>
    %137 = vector.extract_strided_slice %135 {offsets = [0, 14], sizes = [4, 1], strides = [1, 1]} : vector<4x16xbf16> to vector<4x1xbf16>
    %138 = tpu.concatenate %136, %135, %137 in 1 : vector<4x1xbf16>, vector<4x16xbf16>, vector<4x1xbf16> -> vector<4x18xbf16>
    %139 = vector.extract_strided_slice %134 {offsets = [0, 18], sizes = [4, 16], strides = [1, 1]} : vector<4x288xbf16> to vector<4x16xbf16>
    %140 = vector.extract_strided_slice %139 {offsets = [0, 1], sizes = [4, 1], strides = [1, 1]} : vector<4x16xbf16> to vector<4x1xbf16>
    %141 = vector.extract_strided_slice %139 {offsets = [0, 14], sizes = [4, 1], strides = [1, 1]} : vector<4x16xbf16> to vector<4x1xbf16>
    %142 = tpu.concatenate %140, %139, %141 in 1 : vector<4x1xbf16>, vector<4x16xbf16>, vector<4x1xbf16> -> vector<4x18xbf16>
    %143 = vector.extract_strided_slice %134 {offsets = [0, 36], sizes = [4, 16], strides = [1, 1]} : vector<4x288xbf16> to vector<4x16xbf16>
    %144 = vector.extract_strided_slice %143 {offsets = [0, 1], sizes = [4, 1], strides = [1, 1]} : vector<4x16xbf16> to vector<4x1xbf16>
    %145 = vector.extract_strided_slice %143 {offsets = [0, 14], sizes = [4, 1], strides = [1, 1]} : vector<4x16xbf16> to vector<4x1xbf16>
    %146 = tpu.concatenate %144, %143, %145 in 1 : vector<4x1xbf16>, vector<4x16xbf16>, vector<4x1xbf16> -> vector<4x18xbf16>
    %147 = vector.extract_strided_slice %134 {offsets = [0, 54], sizes = [4, 16], strides = [1, 1]} : vector<4x288xbf16> to vector<4x16xbf16>
    %148 = vector.extract_strided_slice %147 {offsets = [0, 1], sizes = [4, 1], strides = [1, 1]} : vector<4x16xbf16> to vector<4x1xbf16>
    %149 = vector.extract_strided_slice %147 {offsets = [0, 14], sizes = [4, 1], strides = [1, 1]} : vector<4x16xbf16> to vector<4x1xbf16>
    %150 = tpu.concatenate %148, %147, %149 in 1 : vector<4x1xbf16>, vector<4x16xbf16>, vector<4x1xbf16> -> vector<4x18xbf16>
    %151 = vector.extract_strided_slice %134 {offsets = [0, 72], sizes = [4, 16], strides = [1, 1]} : vector<4x288xbf16> to vector<4x16xbf16>
    %152 = vector.extract_strided_slice %151 {offsets = [0, 1], sizes = [4, 1], strides = [1, 1]} : vector<4x16xbf16> to vector<4x1xbf16>
    %153 = vector.extract_strided_slice %151 {offsets = [0, 14], sizes = [4, 1], strides = [1, 1]} : vector<4x16xbf16> to vector<4x1xbf16>
    %154 = tpu.concatenate %152, %151, %153 in 1 : vector<4x1xbf16>, vector<4x16xbf16>, vector<4x1xbf16> -> vector<4x18xbf16>
    %155 = vector.extract_strided_slice %134 {offsets = [0, 90], sizes = [4, 16], strides = [1, 1]} : vector<4x288xbf16> to vector<4x16xbf16>
    %156 = vector.extract_strided_slice %155 {offsets = [0, 1], sizes = [4, 1], strides = [1, 1]} : vector<4x16xbf16> to vector<4x1xbf16>
    %157 = vector.extract_strided_slice %155 {offsets = [0, 14], sizes = [4, 1], strides = [1, 1]} : vector<4x16xbf16> to vector<4x1xbf16>
    %158 = tpu.concatenate %156, %155, %157 in 1 : vector<4x1xbf16>, vector<4x16xbf16>, vector<4x1xbf16> -> vector<4x18xbf16>
    %159 = vector.extract_strided_slice %134 {offsets = [0, 108], sizes = [4, 16], strides = [1, 1]} : vector<4x288xbf16> to vector<4x16xbf16>
    %160 = vector.extract_strided_slice %159 {offsets = [0, 1], sizes = [4, 1], strides = [1, 1]} : vector<4x16xbf16> to vector<4x1xbf16>
    %161 = vector.extract_strided_slice %159 {offsets = [0, 14], sizes = [4, 1], strides = [1, 1]} : vector<4x16xbf16> to vector<4x1xbf16>
    %162 = tpu.concatenate %160, %159, %161 in 1 : vector<4x1xbf16>, vector<4x16xbf16>, vector<4x1xbf16> -> vector<4x18xbf16>
    %163 = vector.extract_strided_slice %134 {offsets = [0, 126], sizes = [4, 16], strides = [1, 1]} : vector<4x288xbf16> to vector<4x16xbf16>
    %164 = vector.extract_strided_slice %163 {offsets = [0, 1], sizes = [4, 1], strides = [1, 1]} : vector<4x16xbf16> to vector<4x1xbf16>
    %165 = vector.extract_strided_slice %163 {offsets = [0, 14], sizes = [4, 1], strides = [1, 1]} : vector<4x16xbf16> to vector<4x1xbf16>
    %166 = tpu.concatenate %164, %163, %165 in 1 : vector<4x1xbf16>, vector<4x16xbf16>, vector<4x1xbf16> -> vector<4x18xbf16>
    %167 = vector.extract_strided_slice %134 {offsets = [0, 144], sizes = [4, 16], strides = [1, 1]} : vector<4x288xbf16> to vector<4x16xbf16>
    %168 = vector.extract_strided_slice %167 {offsets = [0, 1], sizes = [4, 1], strides = [1, 1]} : vector<4x16xbf16> to vector<4x1xbf16>
    %169 = vector.extract_strided_slice %167 {offsets = [0, 14], sizes = [4, 1], strides = [1, 1]} : vector<4x16xbf16> to vector<4x1xbf16>
    %170 = tpu.concatenate %168, %167, %169 in 1 : vector<4x1xbf16>, vector<4x16xbf16>, vector<4x1xbf16> -> vector<4x18xbf16>
    %171 = vector.extract_strided_slice %134 {offsets = [0, 162], sizes = [4, 16], strides = [1, 1]} : vector<4x288xbf16> to vector<4x16xbf16>
    %172 = vector.extract_strided_slice %171 {offsets = [0, 1], sizes = [4, 1], strides = [1, 1]} : vector<4x16xbf16> to vector<4x1xbf16>
    %173 = vector.extract_strided_slice %171 {offsets = [0, 14], sizes = [4, 1], strides = [1, 1]} : vector<4x16xbf16> to vector<4x1xbf16>
    %174 = tpu.concatenate %172, %171, %173 in 1 : vector<4x1xbf16>, vector<4x16xbf16>, vector<4x1xbf16> -> vector<4x18xbf16>
    %175 = vector.extract_strided_slice %134 {offsets = [0, 180], sizes = [4, 16], strides = [1, 1]} : vector<4x288xbf16> to vector<4x16xbf16>
    %176 = vector.extract_strided_slice %175 {offsets = [0, 1], sizes = [4, 1], strides = [1, 1]} : vector<4x16xbf16> to vector<4x1xbf16>
    %177 = vector.extract_strided_slice %175 {offsets = [0, 14], sizes = [4, 1], strides = [1, 1]} : vector<4x16xbf16> to vector<4x1xbf16>
    %178 = tpu.concatenate %176, %175, %177 in 1 : vector<4x1xbf16>, vector<4x16xbf16>, vector<4x1xbf16> -> vector<4x18xbf16>
    %179 = vector.extract_strided_slice %134 {offsets = [0, 198], sizes = [4, 16], strides = [1, 1]} : vector<4x288xbf16> to vector<4x16xbf16>
    %180 = vector.extract_strided_slice %179 {offsets = [0, 1], sizes = [4, 1], strides = [1, 1]} : vector<4x16xbf16> to vector<4x1xbf16>
    %181 = vector.extract_strided_slice %179 {offsets = [0, 14], sizes = [4, 1], strides = [1, 1]} : vector<4x16xbf16> to vector<4x1xbf16>
    %182 = tpu.concatenate %180, %179, %181 in 1 : vector<4x1xbf16>, vector<4x16xbf16>, vector<4x1xbf16> -> vector<4x18xbf16>
    %183 = vector.extract_strided_slice %134 {offsets = [0, 216], sizes = [4, 16], strides = [1, 1]} : vector<4x288xbf16> to vector<4x16xbf16>
    %184 = vector.extract_strided_slice %183 {offsets = [0, 1], sizes = [4, 1], strides = [1, 1]} : vector<4x16xbf16> to vector<4x1xbf16>
    %185 = vector.extract_strided_slice %183 {offsets = [0, 14], sizes = [4, 1], strides = [1, 1]} : vector<4x16xbf16> to vector<4x1xbf16>
    %186 = tpu.concatenate %184, %183, %185 in 1 : vector<4x1xbf16>, vector<4x16xbf16>, vector<4x1xbf16> -> vector<4x18xbf16>
    %187 = vector.extract_strided_slice %134 {offsets = [0, 234], sizes = [4, 16], strides = [1, 1]} : vector<4x288xbf16> to vector<4x16xbf16>
    %188 = vector.extract_strided_slice %187 {offsets = [0, 1], sizes = [4, 1], strides = [1, 1]} : vector<4x16xbf16> to vector<4x1xbf16>
    %189 = vector.extract_strided_slice %187 {offsets = [0, 14], sizes = [4, 1], strides = [1, 1]} : vector<4x16xbf16> to vector<4x1xbf16>
    %190 = tpu.concatenate %188, %187, %189 in 1 : vector<4x1xbf16>, vector<4x16xbf16>, vector<4x1xbf16> -> vector<4x18xbf16>
    %191 = vector.extract_strided_slice %134 {offsets = [0, 252], sizes = [4, 16], strides = [1, 1]} : vector<4x288xbf16> to vector<4x16xbf16>
    %192 = vector.extract_strided_slice %191 {offsets = [0, 1], sizes = [4, 1], strides = [1, 1]} : vector<4x16xbf16> to vector<4x1xbf16>
    %193 = vector.extract_strided_slice %191 {offsets = [0, 14], sizes = [4, 1], strides = [1, 1]} : vector<4x16xbf16> to vector<4x1xbf16>
    %194 = tpu.concatenate %192, %191, %193 in 1 : vector<4x1xbf16>, vector<4x16xbf16>, vector<4x1xbf16> -> vector<4x18xbf16>
    %195 = vector.extract_strided_slice %134 {offsets = [0, 270], sizes = [4, 16], strides = [1, 1]} : vector<4x288xbf16> to vector<4x16xbf16>
    %196 = vector.extract_strided_slice %195 {offsets = [0, 1], sizes = [4, 1], strides = [1, 1]} : vector<4x16xbf16> to vector<4x1xbf16>
    %197 = vector.extract_strided_slice %195 {offsets = [0, 14], sizes = [4, 1], strides = [1, 1]} : vector<4x16xbf16> to vector<4x1xbf16>
    %198 = tpu.concatenate %196, %195, %197 in 1 : vector<4x1xbf16>, vector<4x16xbf16>, vector<4x1xbf16> -> vector<4x18xbf16>
    %cst_22 = arith.constant 0.000000e+00 : bf16
    %199 = vector.broadcast %cst_22 : bf16 to vector<4x2xbf16>
    %200 = tpu.concatenate %142, %138, %142, %146, %150, %154, %158, %162, %166, %170, %174, %178, %182, %186, %190, %194 in 1 : vector<4x18xbf16>, vector<4x18xbf16>, vector<4x18xbf16>, vector<4x18xbf16>, vector<4x18xbf16>, vector<4x18xbf16>, vector<4x18xbf16>, vector<4x18xbf16>, vector<4x18xbf16>, vector<4x18xbf16>, vector<4x18xbf16>, vector<4x18xbf16>, vector<4x18xbf16>, vector<4x18xbf16>, vector<4x18xbf16>, vector<4x18xbf16> -> vector<4x288xbf16>
    %201 = tpu.concatenate %198, %194, %199 in 1 : vector<4x18xbf16>, vector<4x18xbf16>, vector<4x2xbf16> -> vector<4x38xbf16>
    %202 = tpu.concatenate %200, %201 in 1 : vector<4x288xbf16>, vector<4x38xbf16> -> vector<4x326xbf16>
    %c0_23 = arith.constant 0 : index
    %c0_24 = arith.constant 0 : index
    %203 = vector.load %arg3[%c0_23, %c0_24] : memref<4x36xbf16, #tpu.memory_space<vmem>>, vector<4x36xbf16>
    %cst_25 = arith.constant 0.000000e+00 : f32
    %204 = vector.broadcast %cst_25 : f32 to vector<4x288xf32>
    %205 = vector.extract_strided_slice %203 {offsets = [0, 0], sizes = [4, 4], strides = [1, 1]} : vector<4x36xbf16> to vector<4x4xbf16>
    %206 = vector.extract_strided_slice %202 {offsets = [0, 0], sizes = [4, 288], strides = [1, 1]} : vector<4x326xbf16> to vector<4x288xbf16>
    %cst_26 = arith.constant dense<0.000000e+00> : vector<4x288xf32>
    %207 = tpu.matmul %205, %206, %cst_26 {dimension_numbers = #tpu.dot_dimension_numbers<[1], [0], [0], [1], [0, 0, 1, 1], [], []>} : vector<4x4xbf16>, vector<4x288xbf16>, vector<4x288xf32> -> vector<4x288xf32>
    %208 = arith.addf %204, %207 : vector<4x288xf32>
    %209 = vector.extract_strided_slice %203 {offsets = [0, 4], sizes = [4, 4], strides = [1, 1]} : vector<4x36xbf16> to vector<4x4xbf16>
    %210 = vector.extract_strided_slice %202 {offsets = [0, 1], sizes = [4, 288], strides = [1, 1]} : vector<4x326xbf16> to vector<4x288xbf16>
    %cst_27 = arith.constant dense<0.000000e+00> : vector<4x288xf32>
    %211 = tpu.matmul %209, %210, %cst_27 {dimension_numbers = #tpu.dot_dimension_numbers<[1], [0], [0], [1], [0, 0, 1, 1], [], []>} : vector<4x4xbf16>, vector<4x288xbf16>, vector<4x288xf32> -> vector<4x288xf32>
    %212 = arith.addf %208, %211 : vector<4x288xf32>
    %213 = vector.extract_strided_slice %203 {offsets = [0, 8], sizes = [4, 4], strides = [1, 1]} : vector<4x36xbf16> to vector<4x4xbf16>
    %214 = vector.extract_strided_slice %202 {offsets = [0, 2], sizes = [4, 288], strides = [1, 1]} : vector<4x326xbf16> to vector<4x288xbf16>
    %cst_28 = arith.constant dense<0.000000e+00> : vector<4x288xf32>
    %215 = tpu.matmul %213, %214, %cst_28 {dimension_numbers = #tpu.dot_dimension_numbers<[1], [0], [0], [1], [0, 0, 1, 1], [], []>} : vector<4x4xbf16>, vector<4x288xbf16>, vector<4x288xf32> -> vector<4x288xf32>
    %216 = arith.addf %212, %215 : vector<4x288xf32>
    %217 = vector.extract_strided_slice %203 {offsets = [0, 12], sizes = [4, 4], strides = [1, 1]} : vector<4x36xbf16> to vector<4x4xbf16>
    %218 = vector.extract_strided_slice %202 {offsets = [0, 18], sizes = [4, 288], strides = [1, 1]} : vector<4x326xbf16> to vector<4x288xbf16>
    %cst_29 = arith.constant dense<0.000000e+00> : vector<4x288xf32>
    %219 = tpu.matmul %217, %218, %cst_29 {dimension_numbers = #tpu.dot_dimension_numbers<[1], [0], [0], [1], [0, 0, 1, 1], [], []>} : vector<4x4xbf16>, vector<4x288xbf16>, vector<4x288xf32> -> vector<4x288xf32>
    %220 = arith.addf %216, %219 : vector<4x288xf32>
    %221 = vector.extract_strided_slice %203 {offsets = [0, 16], sizes = [4, 4], strides = [1, 1]} : vector<4x36xbf16> to vector<4x4xbf16>
    %222 = vector.extract_strided_slice %202 {offsets = [0, 19], sizes = [4, 288], strides = [1, 1]} : vector<4x326xbf16> to vector<4x288xbf16>
    %cst_30 = arith.constant dense<0.000000e+00> : vector<4x288xf32>
    %223 = tpu.matmul %221, %222, %cst_30 {dimension_numbers = #tpu.dot_dimension_numbers<[1], [0], [0], [1], [0, 0, 1, 1], [], []>} : vector<4x4xbf16>, vector<4x288xbf16>, vector<4x288xf32> -> vector<4x288xf32>
    %224 = arith.addf %220, %223 : vector<4x288xf32>
    %225 = vector.extract_strided_slice %203 {offsets = [0, 20], sizes = [4, 4], strides = [1, 1]} : vector<4x36xbf16> to vector<4x4xbf16>
    %226 = vector.extract_strided_slice %202 {offsets = [0, 20], sizes = [4, 288], strides = [1, 1]} : vector<4x326xbf16> to vector<4x288xbf16>
    %cst_31 = arith.constant dense<0.000000e+00> : vector<4x288xf32>
    %227 = tpu.matmul %225, %226, %cst_31 {dimension_numbers = #tpu.dot_dimension_numbers<[1], [0], [0], [1], [0, 0, 1, 1], [], []>} : vector<4x4xbf16>, vector<4x288xbf16>, vector<4x288xf32> -> vector<4x288xf32>
    %228 = arith.addf %224, %227 : vector<4x288xf32>
    %229 = vector.extract_strided_slice %203 {offsets = [0, 24], sizes = [4, 4], strides = [1, 1]} : vector<4x36xbf16> to vector<4x4xbf16>
    %230 = vector.extract_strided_slice %202 {offsets = [0, 36], sizes = [4, 288], strides = [1, 1]} : vector<4x326xbf16> to vector<4x288xbf16>
    %cst_32 = arith.constant dense<0.000000e+00> : vector<4x288xf32>
    %231 = tpu.matmul %229, %230, %cst_32 {dimension_numbers = #tpu.dot_dimension_numbers<[1], [0], [0], [1], [0, 0, 1, 1], [], []>} : vector<4x4xbf16>, vector<4x288xbf16>, vector<4x288xf32> -> vector<4x288xf32>
    %232 = arith.addf %228, %231 : vector<4x288xf32>
    %233 = vector.extract_strided_slice %203 {offsets = [0, 28], sizes = [4, 4], strides = [1, 1]} : vector<4x36xbf16> to vector<4x4xbf16>
    %234 = vector.extract_strided_slice %202 {offsets = [0, 37], sizes = [4, 288], strides = [1, 1]} : vector<4x326xbf16> to vector<4x288xbf16>
    %cst_33 = arith.constant dense<0.000000e+00> : vector<4x288xf32>
    %235 = tpu.matmul %233, %234, %cst_33 {dimension_numbers = #tpu.dot_dimension_numbers<[1], [0], [0], [1], [0, 0, 1, 1], [], []>} : vector<4x4xbf16>, vector<4x288xbf16>, vector<4x288xf32> -> vector<4x288xf32>
    %236 = arith.addf %232, %235 : vector<4x288xf32>
    %237 = vector.extract_strided_slice %203 {offsets = [0, 32], sizes = [4, 4], strides = [1, 1]} : vector<4x36xbf16> to vector<4x4xbf16>
    %238 = vector.extract_strided_slice %202 {offsets = [0, 38], sizes = [4, 288], strides = [1, 1]} : vector<4x326xbf16> to vector<4x288xbf16>
    %cst_34 = arith.constant dense<0.000000e+00> : vector<4x288xf32>
    %239 = tpu.matmul %237, %238, %cst_34 {dimension_numbers = #tpu.dot_dimension_numbers<[1], [0], [0], [1], [0, 0, 1, 1], [], []>} : vector<4x4xbf16>, vector<4x288xbf16>, vector<4x288xf32> -> vector<4x288xf32>
    %240 = arith.addf %236, %239 : vector<4x288xf32>
    %241 = vector.broadcast %0 : vector<1x288xf32> to vector<4x288xf32>
    %242 = arith.mulf %240, %241 : vector<4x288xf32>
    %cst_35 = arith.constant dense<0.000000e+00> : vector<4xf32>
    %243 = vector.multi_reduction <add>, %242, %cst_35 [1] : vector<4x288xf32> to vector<4xf32>
    %244 = vector.shape_cast %243 : vector<4xf32> to vector<4x1xf32>
    %cst_36 = arith.constant 3.906250e-03 : f32
    %245 = vector.broadcast %cst_36 : f32 to vector<4x1xf32>
    %246 = arith.mulf %244, %245 : vector<4x1xf32>
    %247 = vector.broadcast %246 : vector<4x1xf32> to vector<4x288xf32>
    %248 = arith.subf %240, %247 : vector<4x288xf32>
    %249 = vector.broadcast %0 : vector<1x288xf32> to vector<4x288xf32>
    %250 = arith.mulf %248, %249 : vector<4x288xf32>
    %251 = arith.mulf %250, %250 : vector<4x288xf32>
    %cst_37 = arith.constant dense<0.000000e+00> : vector<4xf32>
    %252 = vector.multi_reduction <add>, %251, %cst_37 [1] : vector<4x288xf32> to vector<4xf32>
    %253 = vector.shape_cast %252 : vector<4xf32> to vector<4x1xf32>
    %cst_38 = arith.constant 3.906250e-03 : f32
    %254 = vector.broadcast %cst_38 : f32 to vector<4x1xf32>
    %255 = arith.mulf %253, %254 : vector<4x1xf32>
    %256 = vector.broadcast %246 : vector<4x1xf32> to vector<4x288xf32>
    %257 = arith.subf %240, %256 : vector<4x288xf32>
    %cst_39 = arith.constant 9.99999974E-6 : f32
    %258 = vector.broadcast %cst_39 : f32 to vector<4x1xf32>
    %259 = arith.addf %255, %258 : vector<4x1xf32>
    %260 = math.rsqrt %259 : vector<4x1xf32>
    %261 = vector.broadcast %260 : vector<4x1xf32> to vector<4x288xf32>
    %262 = arith.mulf %257, %261 : vector<4x288xf32>
    %263 = vector.extract_strided_slice %2 {offsets = [0, 0], sizes = [4, 16], strides = [1, 1]} : vector<4x256xf32> to vector<4x16xf32>
    %264 = vector.extract_strided_slice %262 {offsets = [0, 0], sizes = [4, 16], strides = [1, 1]} : vector<4x288xf32> to vector<4x16xf32>
    %265 = arith.addf %263, %264 : vector<4x16xf32>
    %266 = vector.extract_strided_slice %2 {offsets = [0, 16], sizes = [4, 16], strides = [1, 1]} : vector<4x256xf32> to vector<4x16xf32>
    %267 = vector.extract_strided_slice %262 {offsets = [0, 18], sizes = [4, 16], strides = [1, 1]} : vector<4x288xf32> to vector<4x16xf32>
    %268 = arith.addf %266, %267 : vector<4x16xf32>
    %269 = vector.extract_strided_slice %2 {offsets = [0, 32], sizes = [4, 16], strides = [1, 1]} : vector<4x256xf32> to vector<4x16xf32>
    %270 = vector.extract_strided_slice %262 {offsets = [0, 36], sizes = [4, 16], strides = [1, 1]} : vector<4x288xf32> to vector<4x16xf32>
    %271 = arith.addf %269, %270 : vector<4x16xf32>
    %272 = vector.extract_strided_slice %2 {offsets = [0, 48], sizes = [4, 16], strides = [1, 1]} : vector<4x256xf32> to vector<4x16xf32>
    %273 = vector.extract_strided_slice %262 {offsets = [0, 54], sizes = [4, 16], strides = [1, 1]} : vector<4x288xf32> to vector<4x16xf32>
    %274 = arith.addf %272, %273 : vector<4x16xf32>
    %275 = vector.extract_strided_slice %2 {offsets = [0, 64], sizes = [4, 16], strides = [1, 1]} : vector<4x256xf32> to vector<4x16xf32>
    %276 = vector.extract_strided_slice %262 {offsets = [0, 72], sizes = [4, 16], strides = [1, 1]} : vector<4x288xf32> to vector<4x16xf32>
    %277 = arith.addf %275, %276 : vector<4x16xf32>
    %278 = vector.extract_strided_slice %2 {offsets = [0, 80], sizes = [4, 16], strides = [1, 1]} : vector<4x256xf32> to vector<4x16xf32>
    %279 = vector.extract_strided_slice %262 {offsets = [0, 90], sizes = [4, 16], strides = [1, 1]} : vector<4x288xf32> to vector<4x16xf32>
    %280 = arith.addf %278, %279 : vector<4x16xf32>
    %281 = vector.extract_strided_slice %2 {offsets = [0, 96], sizes = [4, 16], strides = [1, 1]} : vector<4x256xf32> to vector<4x16xf32>
    %282 = vector.extract_strided_slice %262 {offsets = [0, 108], sizes = [4, 16], strides = [1, 1]} : vector<4x288xf32> to vector<4x16xf32>
    %283 = arith.addf %281, %282 : vector<4x16xf32>
    %284 = vector.extract_strided_slice %2 {offsets = [0, 112], sizes = [4, 16], strides = [1, 1]} : vector<4x256xf32> to vector<4x16xf32>
    %285 = vector.extract_strided_slice %262 {offsets = [0, 126], sizes = [4, 16], strides = [1, 1]} : vector<4x288xf32> to vector<4x16xf32>
    %286 = arith.addf %284, %285 : vector<4x16xf32>
    %287 = vector.extract_strided_slice %2 {offsets = [0, 128], sizes = [4, 16], strides = [1, 1]} : vector<4x256xf32> to vector<4x16xf32>
    %288 = vector.extract_strided_slice %262 {offsets = [0, 144], sizes = [4, 16], strides = [1, 1]} : vector<4x288xf32> to vector<4x16xf32>
    %289 = arith.addf %287, %288 : vector<4x16xf32>
    %290 = vector.extract_strided_slice %2 {offsets = [0, 144], sizes = [4, 16], strides = [1, 1]} : vector<4x256xf32> to vector<4x16xf32>
    %291 = vector.extract_strided_slice %262 {offsets = [0, 162], sizes = [4, 16], strides = [1, 1]} : vector<4x288xf32> to vector<4x16xf32>
    %292 = arith.addf %290, %291 : vector<4x16xf32>
    %293 = vector.extract_strided_slice %2 {offsets = [0, 160], sizes = [4, 16], strides = [1, 1]} : vector<4x256xf32> to vector<4x16xf32>
    %294 = vector.extract_strided_slice %262 {offsets = [0, 180], sizes = [4, 16], strides = [1, 1]} : vector<4x288xf32> to vector<4x16xf32>
    %295 = arith.addf %293, %294 : vector<4x16xf32>
    %296 = vector.extract_strided_slice %2 {offsets = [0, 176], sizes = [4, 16], strides = [1, 1]} : vector<4x256xf32> to vector<4x16xf32>
    %297 = vector.extract_strided_slice %262 {offsets = [0, 198], sizes = [4, 16], strides = [1, 1]} : vector<4x288xf32> to vector<4x16xf32>
    %298 = arith.addf %296, %297 : vector<4x16xf32>
    %299 = vector.extract_strided_slice %2 {offsets = [0, 192], sizes = [4, 16], strides = [1, 1]} : vector<4x256xf32> to vector<4x16xf32>
    %300 = vector.extract_strided_slice %262 {offsets = [0, 216], sizes = [4, 16], strides = [1, 1]} : vector<4x288xf32> to vector<4x16xf32>
    %301 = arith.addf %299, %300 : vector<4x16xf32>
    %302 = vector.extract_strided_slice %2 {offsets = [0, 208], sizes = [4, 16], strides = [1, 1]} : vector<4x256xf32> to vector<4x16xf32>
    %303 = vector.extract_strided_slice %262 {offsets = [0, 234], sizes = [4, 16], strides = [1, 1]} : vector<4x288xf32> to vector<4x16xf32>
    %304 = arith.addf %302, %303 : vector<4x16xf32>
    %305 = vector.extract_strided_slice %2 {offsets = [0, 224], sizes = [4, 16], strides = [1, 1]} : vector<4x256xf32> to vector<4x16xf32>
    %306 = vector.extract_strided_slice %262 {offsets = [0, 252], sizes = [4, 16], strides = [1, 1]} : vector<4x288xf32> to vector<4x16xf32>
    %307 = arith.addf %305, %306 : vector<4x16xf32>
    %308 = vector.extract_strided_slice %2 {offsets = [0, 240], sizes = [4, 16], strides = [1, 1]} : vector<4x256xf32> to vector<4x16xf32>
    %309 = vector.extract_strided_slice %262 {offsets = [0, 270], sizes = [4, 16], strides = [1, 1]} : vector<4x288xf32> to vector<4x16xf32>
    %310 = arith.addf %308, %309 : vector<4x16xf32>
    %311 = tpu.concatenate %265, %268, %271, %274, %277, %280, %283, %286, %289, %292, %295, %298, %301, %304, %307, %310 in 1 : vector<4x16xf32>, vector<4x16xf32>, vector<4x16xf32>, vector<4x16xf32>, vector<4x16xf32>, vector<4x16xf32>, vector<4x16xf32>, vector<4x16xf32>, vector<4x16xf32>, vector<4x16xf32>, vector<4x16xf32>, vector<4x16xf32>, vector<4x16xf32>, vector<4x16xf32>, vector<4x16xf32>, vector<4x16xf32> -> vector<4x256xf32>
    %c0_40 = arith.constant 0 : index
    %c0_41 = arith.constant 0 : index
    %c0_42 = arith.constant 0 : index
    %312 = vector.load %arg5[%c0_40, %c0_41, %c0_42] : memref<1x4x256xf32, #tpu.memory_space<vmem>>, vector<1x4x256xf32>
    %313 = vector.shape_cast %312 : vector<1x4x256xf32> to vector<4x256xf32>
    %314 = vector.shape_cast %311 : vector<4x256xf32> to vector<1x4x256xf32>
    tpu.vector_store %arg5[%c0_40, %c0_41, %c0_42], %314 {strides = array<i32>} : memref<1x4x256xf32, #tpu.memory_space<vmem>>, vector<1x4x256xf32>,
    return
  }
  func.func @transform_0(%arg0: i32) -> (i32, i32, i32) {
    %c0_i32 = arith.constant 0 : i32
    %c0_i32_0 = arith.constant 0 : i32
    %c0_i32_1 = arith.constant 0 : i32
    return %arg0, %c0_i32, %c0_i32_0 : i32, i32, i32
  }
  func.func @transform_1(%arg0: i32) -> (i32, i32) {
    %c0_i32 = arith.constant 0 : i32
    %c0_i32_0 = arith.constant 0 : i32
    %c0_i32_1 = arith.constant 0 : i32
    return %c0_i32, %c0_i32_0 : i32, i32
  }
  func.func @transform_2(%arg0: i32) -> (i32, i32) {
    %c0_i32 = arith.constant 0 : i32
    %c0_i32_0 = arith.constant 0 : i32
    %c0_i32_1 = arith.constant 0 : i32
    return %c0_i32, %c0_i32_0 : i32, i32
  }
  func.func @transform_3(%arg0: i32) -> (i32, i32) {
    %c0_i32 = arith.constant 0 : i32
    %c0_i32_0 = arith.constant 0 : i32
    %c0_i32_1 = arith.constant 0 : i32
    return %c0_i32, %c0_i32_0 : i32, i32
  }
  func.func @transform_4(%arg0: i32) -> (i32, i32, i32) {
    %c0_i32 = arith.constant 0 : i32
    %c0_i32_0 = arith.constant 0 : i32
    %c0_i32_1 = arith.constant 0 : i32
    return %arg0, %c0_i32, %c0_i32_0 : i32, i32, i32
  }
}

</mosaic_0001>

<llo_original>
// kernel: residual_block.1
$region0: #{residual_block.1}
  #allocation0 [shape = 'u32[]', space=smem, size = 0x4, offset = 0x4, fixed_abs, tag = 'smem constant byte address 0x4 - core index']
  #allocation1 [shape = 'u32[144,128]{1,0:T(1,128)}', space=vmem, size = 0x12000, scoped, tag = 'internal scratch']
  %s0 = inlined_call_operand.vmem [shape: f32[2,4,256], index: 0, kind: input, shape index: {}]
  %s1 = inlined_call_operand.vmem [shape: bf16[4,36], index: 1, kind: input, shape index: {}]
  %s2 = inlined_call_operand.vmem [shape: bf16[4,36], index: 2, kind: input, shape index: {}]
  %s3 = inlined_call_operand.vmem [shape: f32[1,288], index: 3, kind: input, shape index: {}]
  %s4 = inlined_call_operand.vmem [shape: f32[2,4,256], index: 4, kind: output, shape index: {}]
  %s5 = sld [smem:[#allocation0]]
  $region49: #{residual_block.1} parent=0
    _
  %s7 = ssub.s32 1, %s5
  %s8 = scalar_select 0, %s7, %s5
  loop: start=0, step=1, limit=4
  $region2: #{residual_block.1} parent=0 // loop_pre_header
    _
  $region3: #{residual_block.1} parent=0 // loop_header
    %s10 = sphi 0, %s14
    %p11 = scmp.ge.s32.totalorder %s10, 4
    %s20 = sphi 0, %s22
    %s23 = sphi 0, %s20
    %s24 = sphi 0, %s23
    %s40 = sphi 0, %s24
    %s44 = sphi 0, %s44
    %s46 = sphi 0, %s44
    %s47 = sphi 0, %s46
    %s61 = sphi 0, %s47
    %s65 = sphi 0, %s65
    %s67 = sphi 0, %s65
    %s68 = sphi 0, %s67
    %s82 = sphi 0, %s68
    %s86 = sphi 0, %s86
    %s88 = sphi 0, %s86
    %s89 = sphi 0, %s88
    %s103 = sphi 0, %s89
    %s109 = sphi 0, %s111
    %s112 = sphi 0, %s109
    %s113 = sphi 0, %s112
    %s129 = sphi 0, %s113
  $region4: #{residual_block.1} parent=0 // loop_header_branch
    %13 = sbr.rel (%p11) target = $region8
  $region5: #{residual_block.1} parent=0 // loop_body
    %s15 = ssub.s32 %s10, 1
    %s16 = ssub.s32 %s10, 2
    %s17 = sadd.s32 %s10, 1
    %s18 = ssub.s32 %s10, %s17
    %p19 = scmp.eq.s32.totalorder %s18, 0
    %s21 = sadd.s32 %s20, 1
    %s22 = scalar_select %p19, %s20, %s21
    %p25 = pneg %p19
    %p26 = scmp.eq.s32.totalorder %s10, 1
    %p27 = por %p25, %p26
    %p28 = scmp.ne.s32.totalorder %s20, %s23
    %p29 = scmp.eq.s32.totalorder %s10, 0
    %p30 = por %p28, %p29
    %p31 = scmp.ne.s32.totalorder %s20, %s23
    %p32 = scmp.eq.s32.totalorder %s15, 1
    %p33 = por %p31, %p32
    %p34 = scmp.ne.s32.totalorder %s23, %s24
    %p35 = scmp.eq.s32.totalorder %s15, 0
    %p36 = por %p34, %p35
    %p37 = scmp.ne.s32.totalorder %s23, %s24
    %p38 = scmp.eq.s32.totalorder %s16, 1
    %p39 = por %p37, %p38
    %p41 = scmp.ne.s32.totalorder %s24, %s40
    %p42 = scmp.eq.s32.totalorder %s16, 0
    %p43 = por %p41, %p42
    %s45 = sadd.s32 %s44, 1
    %p48 = scmp.eq.s32.totalorder %s10, 1
    %p49 = scmp.ne.s32.totalorder %s44, %s46
    %p50 = scmp.eq.s32.totalorder %s10, 0
    %p51 = por %p49, %p50
    %p52 = scmp.ne.s32.totalorder %s44, %s46
    %p53 = scmp.eq.s32.totalorder %s15, 1
    %p54 = por %p52, %p53
    %p55 = scmp.ne.s32.totalorder %s46, %s47
    %p56 = scmp.eq.s32.totalorder %s15, 0
    %p57 = por %p55, %p56
    %p58 = scmp.ne.s32.totalorder %s46, %s47
    %p59 = scmp.eq.s32.totalorder %s16, 1
    %p60 = por %p58, %p59
    %p62 = scmp.ne.s32.totalorder %s47, %s61
    %p63 = scmp.eq.s32.totalorder %s16, 0
    %p64 = por %p62, %p63
    %s66 = sadd.s32 %s65, 1
    %p69 = scmp.eq.s32.totalorder %s10, 1
    %p70 = scmp.ne.s32.totalorder %s65, %s67
    %p71 = scmp.eq.s32.totalorder %s10, 0
    %p72 = por %p70, %p71
    %p73 = scmp.ne.s32.totalorder %s65, %s67
    %p74 = scmp.eq.s32.totalorder %s15, 1
    %p75 = por %p73, %p74
    %p76 = scmp.ne.s32.totalorder %s67, %s68
    %p77 = scmp.eq.s32.totalorder %s15, 0
    %p78 = por %p76, %p77
    %p79 = scmp.ne.s32.totalorder %s67, %s68
    %p80 = scmp.eq.s32.totalorder %s16, 1
    %p81 = por %p79, %p80
    %p83 = scmp.ne.s32.totalorder %s68, %s82
    %p84 = scmp.eq.s32.totalorder %s16, 0
    %p85 = por %p83, %p84
    %s87 = sadd.s32 %s86, 1
    %p90 = scmp.eq.s32.totalorder %s10, 1
    %p91 = scmp.ne.s32.totalorder %s86, %s88
    %p92 = scmp.eq.s32.totalorder %s10, 0
    %p93 = por %p91, %p92
    %p94 = scmp.ne.s32.totalorder %s86, %s88
    %p95 = scmp.eq.s32.totalorder %s15, 1
    %p96 = por %p94, %p95
    %p97 = scmp.ne.s32.totalorder %s88, %s89
    %p98 = scmp.eq.s32.totalorder %s15, 0
    %p99 = por %p97, %p98
    %p100 = scmp.ne.s32.totalorder %s88, %s89
    %p101 = scmp.eq.s32.totalorder %s16, 1
    %p102 = por %p100, %p101
    %p104 = scmp.ne.s32.totalorder %s89, %s103
    %p105 = scmp.eq.s32.totalorder %s16, 0
    %p106 = por %p104, %p105
    %s107 = ssub.s32 %s10, %s17
    %p108 = scmp.eq.s32.totalorder %s107, 0
    %s110 = sadd.s32 %s109, 1
    %s111 = scalar_select %p108, %s109, %s110
    %p114 = pneg %p108
    %p115 = scmp.eq.s32.totalorder %s10, 1
    %p116 = por %p114, %p115
    %p117 = scmp.ne.s32.totalorder %s109, %s112
    %p118 = scmp.eq.s32.totalorder %s10, 0
    %p119 = por %p117, %p118
    %p120 = scmp.ne.s32.totalorder %s109, %s112
    %p121 = scmp.eq.s32.totalorder %s15, 1
    %p122 = por %p120, %p121
    %p123 = scmp.ne.s32.totalorder %s112, %s113
    %p124 = scmp.eq.s32.totalorder %s15, 0
    %p125 = por %p123, %p124
    %p126 = scmp.ne.s32.totalorder %s112, %s113
    %p127 = scmp.eq.s32.totalorder %s16, 1
    %p128 = por %p126, %p127
    %p130 = scmp.ne.s32.totalorder %s113, %s129
    %p131 = scmp.eq.s32.totalorder %s16, 0
    %p132 = por %p130, %p131
    %p133 = scmp.le.s32.totalorder 1, %s10
    %p134 = scmp.lt.s32.totalorder %s10, 3
    %p135 = pnand %p133, %p134
    %p136 = pneg %p135
    // Predicated region
    $region9: #{residual_block.1} parent=5 // pred_check
      _
    $region10: #{residual_block.1} parent=5 // pred_check_branch
      %138 = sbr.rel (%p135) target = $region12
    $region11: #{residual_block.1} parent=5 // pred_region
      %s139 = ssub.s32 %s10, 1
      // Predicated region
      $region13: #{residual_block.1} parent=11 // pred_check
        %p140 = pneg %p57
      $region14: #{residual_block.1} parent=11 // pred_check_branch
        %142 = sbr.rel (%p140) target = $region16
      $region15: #{residual_block.1} parent=11 // pred_region
        _
      $region16: #{residual_block.1} parent=11 // pred_fallthru
        _
      // Predicated region
      $region17: #{residual_block.1} parent=11 // pred_check
        %p143 = pneg %p78
      $region18: #{residual_block.1} parent=11 // pred_check_branch
        %145 = sbr.rel (%p143) target = $region20
      $region19: #{residual_block.1} parent=11 // pred_region
        _
      $region20: #{residual_block.1} parent=11 // pred_fallthru
        _
      // Predicated region
      $region21: #{residual_block.1} parent=11 // pred_check
        %p146 = pneg %p99
      $region22: #{residual_block.1} parent=11 // pred_check_branch
        %148 = sbr.rel (%p146) target = $region24
      $region23: #{residual_block.1} parent=11 // pred_region
        _
      $region24: #{residual_block.1} parent=11 // pred_fallthru
        _
    $region12: #{residual_block.1} parent=5 // pred_fallthru
      _
    %p149 = scmp.lt.s32.totalorder %s10, 2
    // Predicated region
    $region25: #{residual_block.1} parent=5 // pred_check
      %p150 = pneg %p149
    $region26: #{residual_block.1} parent=5 // pred_check_branch
      %152 = sbr.rel (%p150) target = $region28
    $region27: #{residual_block.1} parent=5 // pred_region
      // Predicated region
      $region29: #{residual_block.1} parent=27 // pred_check
        %p153 = pneg %p30
      $region30: #{residual_block.1} parent=27 // pred_check_branch
        %155 = sbr.rel (%p153) target = $region32
      $region31: #{residual_block.1} parent=27 // pred_region
        %p156 = scmp.lt.s32.totalorder %s10, 1
        %s157 = scalar_select %p156, %s10, 1
        %s158 = smul.addr %s157, 2
        %s159 = smul.addr %s158, 4
        %s160 = scalar_lea.vmem %s0, %s159
      $region32: #{residual_block.1} parent=27 // pred_fallthru
        _
    $region28: #{residual_block.1} parent=5 // pred_fallthru
      _
    %p161 = scmp.le.s32.totalorder 1, %s10
    %p162 = scmp.lt.s32.totalorder %s10, 3
    %p163 = pnand %p161, %p162
    %p164 = pneg %p163
    // Predicated region
    $region33: #{residual_block.1} parent=5 // pred_check
      _
    $region34: #{residual_block.1} parent=5 // pred_check_branch
      %166 = sbr.rel (%p163) target = $region36
    $region35: #{residual_block.1} parent=5 // pred_region
      %s167 = ssub.s32 %s10, 1
      %p168 = scmp.lt.s32.totalorder %s15, 1
      %s169 = scalar_select %p168, %s15, 1
      %s170 = smul.addr %s169, 2
      %s171 = smul.addr %s170, 4
      %s172 = scalar_lea.vmem %s0, %s171
      %p173 = pneg %p36
      %p174 = pneg %p33
      %p175 = pneg %p57
      %p176 = pneg %p54
      %p177 = pneg %p78
      %p178 = pneg %p75
      %p179 = pneg %p99
      %p180 = pneg %p96
      %p181 = pneg %p125
      %p182 = pneg %p122
      %p183 = scmp.lt.s32.totalorder %s15, 1
      %s184 = scalar_select %p183, %s15, 1
      %s185 = smul.addr %s184, 2
      %s186 = smul.addr %s185, 4
      %s187 = scalar_lea.vmem %s4, %s186
      %p188 = scmp.lt.s32.totalorder %s15, 1
      %s189 = scalar_select %p188, %s15, 1
      %s190 = smul.addr %s189, 2
      %s191 = smul.addr %s190, 4
      %s192 = scalar_lea.vmem %s0, %s191
      %p193 = scmp.lt.s32.totalorder %s15, 1
      %s194 = scalar_select %p193, %s15, 1
      %s195 = smul.addr %s194, 2
      %s196 = smul.addr %s195, 4
      %s197 = scalar_lea.vmem %s4, %s196
      %v199 = vld [vmem:[%s3] sm:$0x7]
      %v200 = vld [vmem:[%s192] sm:$0xff]
      %v202 = vcombine.high %v200, %v200
      %v204 = vpack.c.bf16 %v200, %v200
      %v205 = vpack.c.bf16 %v202, %v202
      %207 = vrot.lane.b32.xlu0 %v204, 127
      %v208 = vpop.permute.xlu0 %207
      %209 = vrot.lane.b32.xlu0 %v204, 1
      %v210 = vpop.permute.xlu0 %209
      %211 = vrot.lane.b32.xlu0 %v204, 3
      %v212 = vpop.permute.xlu0 %211
      %vm213 = vcmask 7168
      %v216 = vsel %vm213, %v208, %v210
      %vm217 = vcmask 138240
      %v219 = vsel %vm217, %v216, %v212
      %220 = vrot.lane.b32.xlu0 %v204, 111
      %v221 = vpop.permute.xlu0 %220
      %222 = vrot.lane.b32.xlu0 %v204, 113
      %v223 = vpop.permute.xlu0 %222
      %224 = vrot.lane.b32.xlu0 %v204, 115
      %v225 = vpop.permute.xlu0 %224
      %v228 = vsel %vm213, %v221, %v223
      %v230 = vsel %vm217, %v228, %v225
      %231 = vrot.lane.b32.xlu0 %v204, 95
      %v232 = vpop.permute.xlu0 %231
      %233 = vrot.lane.b32.xlu0 %v204, 97
      %v234 = vpop.permute.xlu0 %233
      %235 = vrot.lane.b32.xlu0 %v204, 99
      %v236 = vpop.permute.xlu0 %235
      %v239 = vsel %vm213, %v232, %v234
      %v241 = vsel %vm217, %v239, %v236
      %242 = vrot.lane.b32.xlu0 %v204, 79
      %v243 = vpop.permute.xlu0 %242
      %244 = vrot.lane.b32.xlu0 %v204, 81
      %v245 = vpop.permute.xlu0 %244
      %246 = vrot.lane.b32.xlu0 %v204, 83
      %v247 = vpop.permute.xlu0 %246
      %v250 = vsel %vm213, %v243, %v245
      %v252 = vsel %vm217, %v250, %v247
      %253 = vrot.lane.b32.xlu0 %v204, 63
      %v254 = vpop.permute.xlu0 %253
      %255 = vrot.lane.b32.xlu0 %v204, 65
      %v256 = vpop.permute.xlu0 %255
      %257 = vrot.lane.b32.xlu0 %v204, 67
      %v258 = vpop.permute.xlu0 %257
      %v261 = vsel %vm213, %v254, %v256
      %v263 = vsel %vm217, %v261, %v258
      %264 = vrot.lane.b32.xlu0 %v204, 47
      %v265 = vpop.permute.xlu0 %264
      %266 = vrot.lane.b32.xlu0 %v204, 49
      %v267 = vpop.permute.xlu0 %266
      %268 = vrot.lane.b32.xlu0 %v204, 51
      %v269 = vpop.permute.xlu0 %268
      %v272 = vsel %vm213, %v265, %v267
      %v274 = vsel %vm217, %v272, %v269
      %275 = vrot.lane.b32.xlu0 %v204, 31
      %v276 = vpop.permute.xlu0 %275
      %277 = vrot.lane.b32.xlu0 %v204, 33
      %v278 = vpop.permute.xlu0 %277
      %279 = vrot.lane.b32.xlu0 %v204, 35
      %v280 = vpop.permute.xlu0 %279
      %v283 = vsel %vm213, %v276, %v278
      %v285 = vsel %vm217, %v283, %v280
      %286 = vrot.lane.b32.xlu0 %v204, 15
      %v287 = vpop.permute.xlu0 %286
      %288 = vrot.lane.b32.xlu0 %v204, 17
      %v289 = vpop.permute.xlu0 %288
      %290 = vrot.lane.b32.xlu0 %v204, 19
      %v291 = vpop.permute.xlu0 %290
      %v294 = vsel %vm213, %v287, %v289
      %v296 = vsel %vm217, %v294, %v291
      %298 = vrot.lane.b32.xlu0 %v205, 127
      %v299 = vpop.permute.xlu0 %298
      %300 = vrot.lane.b32.xlu0 %v205, 1
      %v301 = vpop.permute.xlu0 %300
      %302 = vrot.lane.b32.xlu0 %v205, 3
      %v303 = vpop.permute.xlu0 %302
      %v306 = vsel %vm213, %v299, %v301
      %v308 = vsel %vm217, %v306, %v303
      %309 = vrot.lane.b32.xlu0 %v205, 111
      %v310 = vpop.permute.xlu0 %309
      %311 = vrot.lane.b32.xlu0 %v205, 113
      %v312 = vpop.permute.xlu0 %311
      %313 = vrot.lane.b32.xlu0 %v205, 115
      %v314 = vpop.permute.xlu0 %313
      %v317 = vsel %vm213, %v310, %v312
      %v319 = vsel %vm217, %v317, %v314
      %320 = vrot.lane.b32.xlu0 %v205, 95
      %v321 = vpop.permute.xlu0 %320
      %322 = vrot.lane.b32.xlu0 %v205, 97
      %v323 = vpop.permute.xlu0 %322
      %324 = vrot.lane.b32.xlu0 %v205, 99
      %v325 = vpop.permute.xlu0 %324
      %v328 = vsel %vm213, %v321, %v323
      %v330 = vsel %vm217, %v328, %v325
      %331 = vrot.lane.b32.xlu0 %v205, 79
      %v332 = vpop.permute.xlu0 %331
      %333 = vrot.lane.b32.xlu0 %v205, 81
      %v334 = vpop.permute.xlu0 %333
      %335 = vrot.lane.b32.xlu0 %v205, 83
      %v336 = vpop.permute.xlu0 %335
      %v339 = vsel %vm213, %v332, %v334
      %v341 = vsel %vm217, %v339, %v336
      %342 = vrot.lane.b32.xlu0 %v205, 63
      %v343 = vpop.permute.xlu0 %342
      %344 = vrot.lane.b32.xlu0 %v205, 65
      %v345 = vpop.permute.xlu0 %344
      %346 = vrot.lane.b32.xlu0 %v205, 67
      %v347 = vpop.permute.xlu0 %346
      %v350 = vsel %vm213, %v343, %v345
      %v352 = vsel %vm217, %v350, %v347
      %353 = vrot.lane.b32.xlu0 %v205, 47
      %v354 = vpop.permute.xlu0 %353
      %355 = vrot.lane.b32.xlu0 %v205, 49
      %v356 = vpop.permute.xlu0 %355
      %357 = vrot.lane.b32.xlu0 %v205, 51
      %v358 = vpop.permute.xlu0 %357
      %v361 = vsel %vm213, %v354, %v356
      %v363 = vsel %vm217, %v361, %v358
      %364 = vrot.lane.b32.xlu0 %v205, 31
      %v365 = vpop.permute.xlu0 %364
      %366 = vrot.lane.b32.xlu0 %v205, 33
      %v367 = vpop.permute.xlu0 %366
      %368 = vrot.lane.b32.xlu0 %v205, 35
      %v369 = vpop.permute.xlu0 %368
      %v372 = vsel %vm213, %v365, %v367
      %v374 = vsel %vm217, %v372, %v369
      %375 = vrot.lane.b32.xlu0 %v205, 15
      %v376 = vpop.permute.xlu0 %375
      %377 = vrot.lane.b32.xlu0 %v205, 17
      %v378 = vpop.permute.xlu0 %377
      %379 = vrot.lane.b32.xlu0 %v205, 19
      %v380 = vpop.permute.xlu0 %379
      %v383 = vsel %vm213, %v376, %v378
      %v385 = vsel %vm217, %v383, %v380
      %387 = vrot.lane.b32.xlu0 %v219, 18
      %v388 = vpop.permute.xlu0 %387
      %390 = vrot.lane.b32.xlu0 %v230, 36
      %v391 = vpop.permute.xlu0 %390
      %393 = vrot.lane.b32.xlu0 %v241, 54
      %v394 = vpop.permute.xlu0 %393
      %396 = vrot.lane.b32.xlu0 %v252, 72
      %v397 = vpop.permute.xlu0 %396
      %399 = vrot.lane.b32.xlu0 %v263, 90
      %v400 = vpop.permute.xlu0 %399
      %402 = vrot.lane.b32.xlu0 %v274, 108
      %v403 = vpop.permute.xlu0 %402
      %405 = vrot.lane.b32.xlu0 %v285, 126
      %v406 = vpop.permute.xlu0 %405
      %408 = vrot.lane.b32.xlu0 %v296, 16
      %v409 = vpop.permute.xlu0 %408
      %411 = vrot.lane.b32.xlu0 %v308, 34
      %v412 = vpop.permute.xlu0 %411
      %414 = vrot.lane.b32.xlu0 %v319, 52
      %v415 = vpop.permute.xlu0 %414
      %417 = vrot.lane.b32.xlu0 %v330, 70
      %v418 = vpop.permute.xlu0 %417
      %420 = vrot.lane.b32.xlu0 %v341, 88
      %v421 = vpop.permute.xlu0 %420
      %423 = vrot.lane.b32.xlu0 %v352, 106
      %v424 = vpop.permute.xlu0 %423
      %426 = vrot.lane.b32.xlu0 %v363, 124
      %v427 = vpop.permute.xlu0 %426
      %429 = vrot.lane.b32.xlu0 %v374, 14
      %v430 = vpop.permute.xlu0 %429
      %vm431 = vcmask 146432
      %v433 = vsel %vm431, %v230, %v388
      %vm434 = vcmask 293888
      %v436 = vsel %vm434, %v433, %v391
      %vm437 = vcmask 441344
      %v439 = vsel %vm437, %v436, %v394
      %vm440 = vcmask 588800
      %v442 = vsel %vm440, %v439, %v397
      %vm443 = vcmask 736256
      %v445 = vsel %vm443, %v442, %v400
      %vm446 = vcmask 883712
      %v448 = vsel %vm446, %v445, %v403
      %vm449 = vcmask 1031168
      %v451 = vsel %vm449, %v448, %v406
      %vm452 = vcmask 130048
      %v454 = vsel %vm452, %v406, %v409
      %vm455 = vcmask 277504
      %v457 = vsel %vm455, %v454, %v412
      %vm458 = vcmask 424960
      %v460 = vsel %vm458, %v457, %v415
      %vm461 = vcmask 572416
      %v463 = vsel %vm461, %v460, %v418
      %vm464 = vcmask 719872
      %v466 = vsel %vm464, %v463, %v421
      %vm467 = vcmask 867328
      %v469 = vsel %vm467, %v466, %v424
      %vm470 = vcmask 1014784
      %v472 = vsel %vm470, %v469, %v427
      %vm473 = vcmask 113664
      %v475 = vsel %vm473, %v427, %v430
      %476 = vrot.lane.b32.xlu0 %v374, 18
      %v477 = vpop.permute.xlu0 %476
      %v479 = vsel %vm431, %v385, %v477
      %v481 = vsel %vm434, %v479, 0
      %483 = vrot.lane.b32.xlu0 %v481, 32
      %v484 = vpop.permute.xlu0 %483
      %vm485 = vcmask 261120
      %v487 = vsel %vm485, %v475, %v484
      %v488 = vld [vmem:[%s1] sm:$0x3]
      %v491 = vunpack.c.l.s4 1983009808
      %v492 = vunpack.c.0.s8 %v491
      %v493 = vlaneseq
      %v494 = vshrl.u32 %v493, 7
      %v495 = vsub.s32 %v492, %v494
      %v496 = vrot.slane %v488, %v495
      %497 = vrot.lane.b32.xlu0 %v496, 124
      %v498 = vpop.permute.xlu0 %497
      %502 = vrot.lane.b32.xlu0 %v451, 127
      %v503 = vpop.permute.xlu0 %502
      %504 = vrot.lane.b32.xlu0 %v472, 127
      %v505 = vpop.permute.xlu0 %504
      %506 = vrot.lane.b32.xlu0 %v487, 127
      %v507 = vpop.permute.xlu0 %506
      %vm508 = vcmask 1039360
      %v509 = vsel %vm508, %v503, %v505
      %v510 = vsel %vm508, %v505, %v507
      %vm511 = vcmask 31744
      %v513 = vsel %vm511, %v498, 0
      %vm515 = vcmask 1041408
      %v517 = vsel %vm515, %v509, 0
      %v520 = vsel %vm515, %v510, 0
      %v523 = vsel %vm515, %v507, 0
      %525 = vmatprep.subr.bf16.mxu0 %v520
      %526 = vmatpush1.bf16.msra.mxu0 %v517
      %527 = vmatprep.subr.bf16.mxu0 0
      %528 = vmatpush1.bf16.msra.mxu0 0
      %529 = vmatprep.subr.bf16.mxu0 0
      %530 = vmatpush1.bf16.msra.mxu0 0
      %531 = vmatprep.subr.bf16.mxu0 0
      %532 = vmatpush1.bf16.msra.mxu0 0
      %533 = vmatprep.subr.bf16.mxu0 0
      %534 = vmatpush1.bf16.msra.mxu0 0
      %535 = vmatprep.subr.bf16.mxu0 0
      %536 = vmatpush1.bf16.msra.mxu0 0
      %537 = vmatprep.subr.bf16.mxu0 0
      %538 = vmatpush1.bf16.msra.mxu0 0
      %539 = vmatprep.subr.bf16.mxu0 0
      %540 = vmatpush1.bf16.msra.mxu0 0
      %541 = vmatprep.subr.bf16.mxu0 0
      %542 = vmatpush1.bf16.msra.mxu0 0
      %543 = vmatprep.subr.bf16.mxu0 0
      %544 = vmatpush1.bf16.msra.mxu0 0
      %545 = vmatprep.subr.bf16.mxu0 0
      %546 = vmatpush1.bf16.msra.mxu0 0
      %547 = vmatprep.subr.bf16.mxu0 0
      %548 = vmatpush1.bf16.msra.mxu0 0
      %549 = vmatprep.subr.bf16.mxu0 0
      %550 = vmatpush1.bf16.msra.mxu0 0
      %551 = vmatprep.subr.bf16.mxu0 0
      %552 = vmatpush1.bf16.msra.mxu0 0
      %553 = vmatprep.subr.bf16.mxu0 0
      %554 = vmatpush1.bf16.msra.mxu0 0
      %555 = vmatprep.subr.bf16.mxu0 0
      %556 = vmatpush1.bf16.msra.mxu0 0
      %557 = vmatprep.mubr.bf16.mxu0 0
      %558 = vmatmul.mubr.bf16.gmra.mrb[0].mxu0 %v513
      %v559 = vpop.f32.mrb[0].mxu0
      %v560 = vadd.f32 0.0, %v559
      %v561 = vpop.f32.mrb[0].mxu0
      %v562 = vadd.f32 0.0, %v561
      %v563 = vpop.f32.mrb[0].mxu0
      %v564 = vpop.f32.mrb[0].mxu0
      %565 = vdwg.mxu0
      %566 = vmatprep.subr.bf16.mxu0 0
      %567 = vmatpush1.bf16.msra.mxu0 %v523
      %568 = vmatprep.subr.bf16.mxu0 0
      %569 = vmatpush1.bf16.msra.mxu0 0
      %570 = vmatprep.subr.bf16.mxu0 0
      %571 = vmatpush1.bf16.msra.mxu0 0
      %572 = vmatprep.subr.bf16.mxu0 0
      %573 = vmatpush1.bf16.msra.mxu0 0
      %574 = vmatprep.subr.bf16.mxu0 0
      %575 = vmatpush1.bf16.msra.mxu0 0
      %576 = vmatprep.subr.bf16.mxu0 0
      %577 = vmatpush1.bf16.msra.mxu0 0
      %578 = vmatprep.subr.bf16.mxu0 0
      %579 = vmatpush1.bf16.msra.mxu0 0
      %580 = vmatprep.subr.bf16.mxu0 0
      %581 = vmatpush1.bf16.msra.mxu0 0
      %582 = vmatprep.subr.bf16.mxu0 0
      %583 = vmatpush1.bf16.msra.mxu0 0
      %584 = vmatprep.subr.bf16.mxu0 0
      %585 = vmatpush1.bf16.msra.mxu0 0
      %586 = vmatprep.subr.bf16.mxu0 0
      %587 = vmatpush1.bf16.msra.mxu0 0
      %588 = vmatprep.subr.bf16.mxu0 0
      %589 = vmatpush1.bf16.msra.mxu0 0
      %590 = vmatprep.subr.bf16.mxu0 0
      %591 = vmatpush1.bf16.msra.mxu0 0
      %592 = vmatprep.subr.bf16.mxu0 0
      %593 = vmatpush1.bf16.msra.mxu0 0
      %594 = vmatprep.subr.bf16.mxu0 0
      %595 = vmatpush1.bf16.msra.mxu0 0
      %596 = vmatprep.subr.bf16.mxu0 0
      %597 = vmatpush1.bf16.msra.mxu0 0
      %598 = vmatprep.mubr.bf16.mxu0 0
      %599 = vmatmul.mubr.bf16.gmra.mrb[0].mxu0 %v513
      %v600 = vpop.f32.mrb[0].mxu0
      %v601 = vadd.f32 0.0, %v600
      %v602 = vpop.f32.mrb[0].mxu0
      %v603 = vpop.f32.mrb[0].mxu0
      %v604 = vpop.f32.mrb[0].mxu0
      %605 = vdwg.mxu0
      %v607 = vsel %vm511, %v488, 0
      %v609 = vsel %vm515, %v451, 0
      %v611 = vsel %vm515, %v472, 0
      %v613 = vsel %vm515, %v487, 0
      %615 = vmatprep.subr.bf16.mxu0 %v611
      %616 = vmatpush1.bf16.msra.mxu0 %v609
      %617 = vmatprep.subr.bf16.mxu0 0
      %618 = vmatpush1.bf16.msra.mxu0 0
      %619 = vmatprep.subr.bf16.mxu0 0
      %620 = vmatpush1.bf16.msra.mxu0 0
      %621 = vmatprep.subr.bf16.mxu0 0
      %622 = vmatpush1.bf16.msra.mxu0 0
      %623 = vmatprep.subr.bf16.mxu0 0
      %624 = vmatpush1.bf16.msra.mxu0 0
      %625 = vmatprep.subr.bf16.mxu0 0
      %626 = vmatpush1.bf16.msra.mxu0 0
      %627 = vmatprep.subr.bf16.mxu0 0
      %628 = vmatpush1.bf16.msra.mxu0 0
      %629 = vmatprep.subr.bf16.mxu0 0
      %630 = vmatpush1.bf16.msra.mxu0 0
      %631 = vmatprep.subr.bf16.mxu0 0
      %632 = vmatpush1.bf16.msra.mxu0 0
      %633 = vmatprep.subr.bf16.mxu0 0
      %634 = vmatpush1.bf16.msra.mxu0 0
      %635 = vmatprep.subr.bf16.mxu0 0
      %636 = vmatpush1.bf16.msra.mxu0 0
      %637 = vmatprep.subr.bf16.mxu0 0
      %638 = vmatpush1.bf16.msra.mxu0 0
      %639 = vmatprep.subr.bf16.mxu0 0
      %640 = vmatpush1.bf16.msra.mxu0 0
      %641 = vmatprep.subr.bf16.mxu0 0
      %642 = vmatpush1.bf16.msra.mxu0 0
      %643 = vmatprep.subr.bf16.mxu0 0
      %644 = vmatpush1.bf16.msra.mxu0 0
      %645 = vmatprep.subr.bf16.mxu0 0
      %646 = vmatpush1.bf16.msra.mxu0 0
      %647 = vmatprep.mubr.bf16.mxu0 0
      %648 = vmatmul.mubr.bf16.gmra.mrb[0].mxu0 %v607
      %v649 = vpop.f32.mrb[0].mxu0
      %v650 = vadd.f32 %v560, %v649
      %v651 = vpop.f32.mrb[0].mxu0
      %v652 = vadd.f32 %v562, %v651
      %v653 = vpop.f32.mrb[0].mxu0
      %v654 = vpop.f32.mrb[0].mxu0
      %655 = vdwg.mxu0
      %656 = vmatprep.subr.bf16.mxu0 0
      %657 = vmatpush1.bf16.msra.mxu0 %v613
      %658 = vmatprep.subr.bf16.mxu0 0
      %659 = vmatpush1.bf16.msra.mxu0 0
      %660 = vmatprep.subr.bf16.mxu0 0
      %661 = vmatpush1.bf16.msra.mxu0 0
      %662 = vmatprep.subr.bf16.mxu0 0
      %663 = vmatpush1.bf16.msra.mxu0 0
      %664 = vmatprep.subr.bf16.mxu0 0
      %665 = vmatpush1.bf16.msra.mxu0 0
      %666 = vmatprep.subr.bf16.mxu0 0
      %667 = vmatpush1.bf16.msra.mxu0 0
      %668 = vmatprep.subr.bf16.mxu0 0
      %669 = vmatpush1.bf16.msra.mxu0 0
      %670 = vmatprep.subr.bf16.mxu0 0
      %671 = vmatpush1.bf16.msra.mxu0 0
      %672 = vmatprep.subr.bf16.mxu0 0
      %673 = vmatpush1.bf16.msra.mxu0 0
      %674 = vmatprep.subr.bf16.mxu0 0
      %675 = vmatpush1.bf16.msra.mxu0 0
      %676 = vmatprep.subr.bf16.mxu0 0
      %677 = vmatpush1.bf16.msra.mxu0 0
      %678 = vmatprep.subr.bf16.mxu0 0
      %679 = vmatpush1.bf16.msra.mxu0 0
      %680 = vmatprep.subr.bf16.mxu0 0
      %681 = vmatpush1.bf16.msra.mxu0 0
      %682 = vmatprep.subr.bf16.mxu0 0
      %683 = vmatpush1.bf16.msra.mxu0 0
      %684 = vmatprep.subr.bf16.mxu0 0
      %685 = vmatpush1.bf16.msra.mxu0 0
      %686 = vmatprep.subr.bf16.mxu0 0
      %687 = vmatpush1.bf16.msra.mxu0 0
      %688 = vmatprep.mubr.bf16.mxu0 0
      %689 = vmatmul.mubr.bf16.gmra.mrb[0].mxu0 %v607
      %v690 = vpop.f32.mrb[0].mxu0
      %v691 = vadd.f32 %v601, %v690
      %v692 = vpop.f32.mrb[0].mxu0
      %v693 = vpop.f32.mrb[0].mxu0
      %v694 = vpop.f32.mrb[0].mxu0
      %695 = vdwg.mxu0
      %696 = vrot.lane.b32.xlu0 %v496, 120
      %v697 = vpop.permute.xlu0 %696
      %698 = vrot.lane.b32.xlu0 %v451, 126
      %v699 = vpop.permute.xlu0 %698
      %700 = vrot.lane.b32.xlu0 %v472, 126
      %v701 = vpop.permute.xlu0 %700
      %702 = vrot.lane.b32.xlu0 %v487, 126
      %v703 = vpop.permute.xlu0 %702
      %vm704 = vcmask 1031168
      %v705 = vsel %vm704, %v699, %v701
      %v706 = vsel %vm704, %v701, %v703
      %v708 = vsel %vm511, %v697, 0
      %v711 = vsel %vm515, %v705, 0
      %v714 = vsel %vm515, %v706, 0
      %v717 = vsel %vm515, %v703, 0
      %719 = vmatprep.subr.bf16.mxu0 %v714
      %720 = vmatpush1.bf16.msra.mxu0 %v711
      %721 = vmatprep.subr.bf16.mxu0 0
      %722 = vmatpush1.bf16.msra.mxu0 0
      %723 = vmatprep.subr.bf16.mxu0 0
      %724 = vmatpush1.bf16.msra.mxu0 0
      %725 = vmatprep.subr.bf16.mxu0 0
      %726 = vmatpush1.bf16.msra.mxu0 0
      %727 = vmatprep.subr.bf16.mxu0 0
      %728 = vmatpush1.bf16.msra.mxu0 0
      %729 = vmatprep.subr.bf16.mxu0 0
      %730 = vmatpush1.bf16.msra.mxu0 0
      %731 = vmatprep.subr.bf16.mxu0 0
      %732 = vmatpush1.bf16.msra.mxu0 0
      %733 = vmatprep.subr.bf16.mxu0 0
      %734 = vmatpush1.bf16.msra.mxu0 0
      %735 = vmatprep.subr.bf16.mxu0 0
      %736 = vmatpush1.bf16.msra.mxu0 0
      %737 = vmatprep.subr.bf16.mxu0 0
      %738 = vmatpush1.bf16.msra.mxu0 0
      %739 = vmatprep.subr.bf16.mxu0 0
      %740 = vmatpush1.bf16.msra.mxu0 0
      %741 = vmatprep.subr.bf16.mxu0 0
      %742 = vmatpush1.bf16.msra.mxu0 0
      %743 = vmatprep.subr.bf16.mxu0 0
      %744 = vmatpush1.bf16.msra.mxu0 0
      %745 = vmatprep.subr.bf16.mxu0 0
      %746 = vmatpush1.bf16.msra.mxu0 0
      %747 = vmatprep.subr.bf16.mxu0 0
      %748 = vmatpush1.bf16.msra.mxu0 0
      %749 = vmatprep.subr.bf16.mxu0 0
      %750 = vmatpush1.bf16.msra.mxu0 0
      %751 = vmatprep.mubr.bf16.mxu0 0
      %752 = vmatmul.mubr.bf16.gmra.mrb[0].mxu0 %v708
      %v753 = vpop.f32.mrb[0].mxu0
      %v754 = vadd.f32 0.0, %v753
      %v755 = vpop.f32.mrb[0].mxu0
      %v756 = vadd.f32 0.0, %v755
      %v757 = vpop.f32.mrb[0].mxu0
      %v758 = vpop.f32.mrb[0].mxu0
      %759 = vdwg.mxu0
      %760 = vmatprep.subr.bf16.mxu0 0
      %761 = vmatpush1.bf16.msra.mxu0 %v717
      %762 = vmatprep.subr.bf16.mxu0 0
      %763 = vmatpush1.bf16.msra.mxu0 0
      %764 = vmatprep.subr.bf16.mxu0 0
      %765 = vmatpush1.bf16.msra.mxu0 0
      %766 = vmatprep.subr.bf16.mxu0 0
      %767 = vmatpush1.bf16.msra.mxu0 0
      %768 = vmatprep.subr.bf16.mxu0 0
      %769 = vmatpush1.bf16.msra.mxu0 0
      %770 = vmatprep.subr.bf16.mxu0 0
      %771 = vmatpush1.bf16.msra.mxu0 0
      %772 = vmatprep.subr.bf16.mxu0 0
      %773 = vmatpush1.bf16.msra.mxu0 0
      %774 = vmatprep.subr.bf16.mxu0 0
      %775 = vmatpush1.bf16.msra.mxu0 0
      %776 = vmatprep.subr.bf16.mxu0 0
      %777 = vmatpush1.bf16.msra.mxu0 0
      %778 = vmatprep.subr.bf16.mxu0 0
      %779 = vmatpush1.bf16.msra.mxu0 0
      %780 = vmatprep.subr.bf16.mxu0 0
      %781 = vmatpush1.bf16.msra.mxu0 0
      %782 = vmatprep.subr.bf16.mxu0 0
      %783 = vmatpush1.bf16.msra.mxu0 0
      %784 = vmatprep.subr.bf16.mxu0 0
      %785 = vmatpush1.bf16.msra.mxu0 0
      %786 = vmatprep.subr.bf16.mxu0 0
      %787 = vmatpush1.bf16.msra.mxu0 0
      %788 = vmatprep.subr.bf16.mxu0 0
      %789 = vmatpush1.bf16.msra.mxu0 0
      %790 = vmatprep.subr.bf16.mxu0 0
      %791 = vmatpush1.bf16.msra.mxu0 0
      %792 = vmatprep.mubr.bf16.mxu0 0
      %793 = vmatmul.mubr.bf16.gmra.mrb[0].mxu0 %v708
      %v794 = vpop.f32.mrb[0].mxu0
      %v795 = vadd.f32 0.0, %v794
      %v796 = vpop.f32.mrb[0].mxu0
      %v797 = vpop.f32.mrb[0].mxu0
      %v798 = vpop.f32.mrb[0].mxu0
      %799 = vdwg.mxu0
      %v800 = vadd.f32 %v650, %v754
      %v801 = vadd.f32 %v652, %v756
      %v802 = vadd.f32 %v691, %v795
      %803 = vrot.lane.b32.xlu0 %v496, 116
      %v804 = vpop.permute.xlu0 %803
      %805 = vrot.lane.b32.xlu0 %v451, 110
      %v806 = vpop.permute.xlu0 %805
      %807 = vrot.lane.b32.xlu0 %v472, 110
      %v808 = vpop.permute.xlu0 %807
      %809 = vrot.lane.b32.xlu0 %v487, 110
      %v810 = vpop.permute.xlu0 %809
      %vm811 = vcmask 900096
      %v812 = vsel %vm811, %v806, %v808
      %v813 = vsel %vm811, %v808, %v810
      %v815 = vsel %vm511, %v804, 0
      %v818 = vsel %vm515, %v812, 0
      %v821 = vsel %vm515, %v813, 0
      %v824 = vsel %vm515, %v810, 0
      %826 = vmatprep.subr.bf16.mxu0 %v821
      %827 = vmatpush1.bf16.msra.mxu0 %v818
      %828 = vmatprep.subr.bf16.mxu0 0
      %829 = vmatpush1.bf16.msra.mxu0 0
      %830 = vmatprep.subr.bf16.mxu0 0
      %831 = vmatpush1.bf16.msra.mxu0 0
      %832 = vmatprep.subr.bf16.mxu0 0
      %833 = vmatpush1.bf16.msra.mxu0 0
      %834 = vmatprep.subr.bf16.mxu0 0
      %835 = vmatpush1.bf16.msra.mxu0 0
      %836 = vmatprep.subr.bf16.mxu0 0
      %837 = vmatpush1.bf16.msra.mxu0 0
      %838 = vmatprep.subr.bf16.mxu0 0
      %839 = vmatpush1.bf16.msra.mxu0 0
      %840 = vmatprep.subr.bf16.mxu0 0
      %841 = vmatpush1.bf16.msra.mxu0 0
      %842 = vmatprep.subr.bf16.mxu0 0
      %843 = vmatpush1.bf16.msra.mxu0 0
      %844 = vmatprep.subr.bf16.mxu0 0
      %845 = vmatpush1.bf16.msra.mxu0 0
      %846 = vmatprep.subr.bf16.mxu0 0
      %847 = vmatpush1.bf16.msra.mxu0 0
      %848 = vmatprep.subr.bf16.mxu0 0
      %849 = vmatpush1.bf16.msra.mxu0 0
      %850 = vmatprep.subr.bf16.mxu0 0
      %851 = vmatpush1.bf16.msra.mxu0 0
      %852 = vmatprep.subr.bf16.mxu0 0
      %853 = vmatpush1.bf16.msra.mxu0 0
      %854 = vmatprep.subr.bf16.mxu0 0
      %855 = vmatpush1.bf16.msra.mxu0 0
      %856 = vmatprep.subr.bf16.mxu0 0
      %857 = vmatpush1.bf16.msra.mxu0 0
      %858 = vmatprep.mubr.bf16.mxu0 0
      %859 = vmatmul.mubr.bf16.gmra.mrb[0].mxu0 %v815
      %v860 = vpop.f32.mrb[0].mxu0
      %v861 = vadd.f32 0.0, %v860
      %v862 = vpop.f32.mrb[0].mxu0
      %v863 = vadd.f32 0.0, %v862
      %v864 = vpop.f32.mrb[0].mxu0
      %v865 = vpop.f32.mrb[0].mxu0
      %866 = vdwg.mxu0
      %867 = vmatprep.subr.bf16.mxu0 0
      %868 = vmatpush1.bf16.msra.mxu0 %v824
      %869 = vmatprep.subr.bf16.mxu0 0
      %870 = vmatpush1.bf16.msra.mxu0 0
      %871 = vmatprep.subr.bf16.mxu0 0
      %872 = vmatpush1.bf16.msra.mxu0 0
      %873 = vmatprep.subr.bf16.mxu0 0
      %874 = vmatpush1.bf16.msra.mxu0 0
      %875 = vmatprep.subr.bf16.mxu0 0
      %876 = vmatpush1.bf16.msra.mxu0 0
      %877 = vmatprep.subr.bf16.mxu0 0
      %878 = vmatpush1.bf16.msra.mxu0 0
      %879 = vmatprep.subr.bf16.mxu0 0
      %880 = vmatpush1.bf16.msra.mxu0 0
      %881 = vmatprep.subr.bf16.mxu0 0
      %882 = vmatpush1.bf16.msra.mxu0 0
      %883 = vmatprep.subr.bf16.mxu0 0
      %884 = vmatpush1.bf16.msra.mxu0 0
      %885 = vmatprep.subr.bf16.mxu0 0
      %886 = vmatpush1.bf16.msra.mxu0 0
      %887 = vmatprep.subr.bf16.mxu0 0
      %888 = vmatpush1.bf16.msra.mxu0 0
      %889 = vmatprep.subr.bf16.mxu0 0
      %890 = vmatpush1.bf16.msra.mxu0 0
      %891 = vmatprep.subr.bf16.mxu0 0
      %892 = vmatpush1.bf16.msra.mxu0 0
      %893 = vmatprep.subr.bf16.mxu0 0
      %894 = vmatpush1.bf16.msra.mxu0 0
      %895 = vmatprep.subr.bf16.mxu0 0
      %896 = vmatpush1.bf16.msra.mxu0 0
      %897 = vmatprep.subr.bf16.mxu0 0
      %898 = vmatpush1.bf16.msra.mxu0 0
      %899 = vmatprep.mubr.bf16.mxu0 0
      %900 = vmatmul.mubr.bf16.gmra.mrb[0].mxu0 %v815
      %v901 = vpop.f32.mrb[0].mxu0
      %v902 = vadd.f32 0.0, %v901
      %v903 = vpop.f32.mrb[0].mxu0
      %v904 = vpop.f32.mrb[0].mxu0
      %v905 = vpop.f32.mrb[0].mxu0
      %906 = vdwg.mxu0
      %v907 = vadd.f32 %v800, %v861
      %v908 = vadd.f32 %v801, %v863
      %v909 = vadd.f32 %v802, %v902
      %910 = vrot.lane.b32.xlu0 %v496, 112
      %v911 = vpop.permute.xlu0 %910
      %912 = vrot.lane.b32.xlu0 %v451, 109
      %v913 = vpop.permute.xlu0 %912
      %914 = vrot.lane.b32.xlu0 %v472, 109
      %v915 = vpop.permute.xlu0 %914
      %916 = vrot.lane.b32.xlu0 %v487, 109
      %v917 = vpop.permute.xlu0 %916
      %vm918 = vcmask 891904
      %v919 = vsel %vm918, %v913, %v915
      %v920 = vsel %vm918, %v915, %v917
      %v922 = vsel %vm511, %v911, 0
      %v925 = vsel %vm515, %v919, 0
      %v928 = vsel %vm515, %v920, 0
      %v931 = vsel %vm515, %v917, 0
      %933 = vmatprep.subr.bf16.mxu0 %v928
      %934 = vmatpush1.bf16.msra.mxu0 %v925
      %935 = vmatprep.subr.bf16.mxu0 0
      %936 = vmatpush1.bf16.msra.mxu0 0
      %937 = vmatprep.subr.bf16.mxu0 0
      %938 = vmatpush1.bf16.msra.mxu0 0
      %939 = vmatprep.subr.bf16.mxu0 0
      %940 = vmatpush1.bf16.msra.mxu0 0
      %941 = vmatprep.subr.bf16.mxu0 0
      %942 = vmatpush1.bf16.msra.mxu0 0
      %943 = vmatprep.subr.bf16.mxu0 0
      %944 = vmatpush1.bf16.msra.mxu0 0
      %945 = vmatprep.subr.bf16.mxu0 0
      %946 = vmatpush1.bf16.msra.mxu0 0
      %947 = vmatprep.subr.bf16.mxu0 0
      %948 = vmatpush1.bf16.msra.mxu0 0
      %949 = vmatprep.subr.bf16.mxu0 0
      %950 = vmatpush1.bf16.msra.mxu0 0
      %951 = vmatprep.subr.bf16.mxu0 0
      %952 = vmatpush1.bf16.msra.mxu0 0
      %953 = vmatprep.subr.bf16.mxu0 0
      %954 = vmatpush1.bf16.msra.mxu0 0
      %955 = vmatprep.subr.bf16.mxu0 0
      %956 = vmatpush1.bf16.msra.mxu0 0
      %957 = vmatprep.subr.bf16.mxu0 0
      %958 = vmatpush1.bf16.msra.mxu0 0
      %959 = vmatprep.subr.bf16.mxu0 0
      %960 = vmatpush1.bf16.msra.mxu0 0
      %961 = vmatprep.subr.bf16.mxu0 0
      %962 = vmatpush1.bf16.msra.mxu0 0
      %963 = vmatprep.subr.bf16.mxu0 0
      %964 = vmatpush1.bf16.msra.mxu0 0
      %965 = vmatprep.mubr.bf16.mxu0 0
      %966 = vmatmul.mubr.bf16.gmra.mrb[0].mxu0 %v922
      %v967 = vpop.f32.mrb[0].mxu0
      %v968 = vadd.f32 0.0, %v967
      %v969 = vpop.f32.mrb[0].mxu0
      %v970 = vadd.f32 0.0, %v969
      %v971 = vpop.f32.mrb[0].mxu0
      %v972 = vpop.f32.mrb[0].mxu0
      %973 = vdwg.mxu0
      %974 = vmatprep.subr.bf16.mxu0 0
      %975 = vmatpush1.bf16.msra.mxu0 %v931
      %976 = vmatprep.subr.bf16.mxu0 0
      %977 = vmatpush1.bf16.msra.mxu0 0
      %978 = vmatprep.subr.bf16.mxu0 0
      %979 = vmatpush1.bf16.msra.mxu0 0
      %980 = vmatprep.subr.bf16.mxu0 0
      %981 = vmatpush1.bf16.msra.mxu0 0
      %982 = vmatprep.subr.bf16.mxu0 0
      %983 = vmatpush1.bf16.msra.mxu0 0
      %984 = vmatprep.subr.bf16.mxu0 0
      %985 = vmatpush1.bf16.msra.mxu0 0
      %986 = vmatprep.subr.bf16.mxu0 0
      %987 = vmatpush1.bf16.msra.mxu0 0
      %988 = vmatprep.subr.bf16.mxu0 0
      %989 = vmatpush1.bf16.msra.mxu0 0
      %990 = vmatprep.subr.bf16.mxu0 0
      %991 = vmatpush1.bf16.msra.mxu0 0
      %992 = vmatprep.subr.bf16.mxu0 0
      %993 = vmatpush1.bf16.msra.mxu0 0
      %994 = vmatprep.subr.bf16.mxu0 0
      %995 = vmatpush1.bf16.msra.mxu0 0
      %996 = vmatprep.subr.bf16.mxu0 0
      %997 = vmatpush1.bf16.msra.mxu0 0
      %998 = vmatprep.subr.bf16.mxu0 0
      %999 = vmatpush1.bf16.msra.mxu0 0
      %1000 = vmatprep.subr.bf16.mxu0 0
      %1001 = vmatpush1.bf16.msra.mxu0 0
      %1002 = vmatprep.subr.bf16.mxu0 0
      %1003 = vmatpush1.bf16.msra.mxu0 0
      %1004 = vmatprep.subr.bf16.mxu0 0
      %1005 = vmatpush1.bf16.msra.mxu0 0
      %1006 = vmatprep.mubr.bf16.mxu0 0
      %1007 = vmatmul.mubr.bf16.gmra.mrb[0].mxu0 %v922
      %v1008 = vpop.f32.mrb[0].mxu0
      %v1009 = vadd.f32 0.0, %v1008
      %v1010 = vpop.f32.mrb[0].mxu0
      %v1011 = vpop.f32.mrb[0].mxu0
      %v1012 = vpop.f32.mrb[0].mxu0
      %1013 = vdwg.mxu0
      %v1014 = vadd.f32 %v907, %v968
      %v1015 = vadd.f32 %v908, %v970
      %v1016 = vadd.f32 %v909, %v1009
      %1017 = vrot.lane.b32.xlu0 %v496, 108
      %v1018 = vpop.permute.xlu0 %1017
      %1019 = vrot.lane.b32.xlu0 %v451, 108
      %v1020 = vpop.permute.xlu0 %1019
      %1021 = vrot.lane.b32.xlu0 %v472, 108
      %v1022 = vpop.permute.xlu0 %1021
      %1023 = vrot.lane.b32.xlu0 %v487, 108
      %v1024 = vpop.permute.xlu0 %1023
      %vm1025 = vcmask 883712
      %v1026 = vsel %vm1025, %v1020, %v1022
      %v1027 = vsel %vm1025, %v1022, %v1024
      %v1029 = vsel %vm511, %v1018, 0
      %v1032 = vsel %vm515, %v1026, 0
      %v1035 = vsel %vm515, %v1027, 0
      %v1038 = vsel %vm515, %v1024, 0
      %1040 = vmatprep.subr.bf16.mxu0 %v1035
      %1041 = vmatpush1.bf16.msra.mxu0 %v1032
      %1042 = vmatprep.subr.bf16.mxu0 0
      %1043 = vmatpush1.bf16.msra.mxu0 0
      %1044 = vmatprep.subr.bf16.mxu0 0
      %1045 = vmatpush1.bf16.msra.mxu0 0
      %1046 = vmatprep.subr.bf16.mxu0 0
      %1047 = vmatpush1.bf16.msra.mxu0 0
      %1048 = vmatprep.subr.bf16.mxu0 0
      %1049 = vmatpush1.bf16.msra.mxu0 0
      %1050 = vmatprep.subr.bf16.mxu0 0
      %1051 = vmatpush1.bf16.msra.mxu0 0
      %1052 = vmatprep.subr.bf16.mxu0 0
      %1053 = vmatpush1.bf16.msra.mxu0 0
      %1054 = vmatprep.subr.bf16.mxu0 0
      %1055 = vmatpush1.bf16.msra.mxu0 0
      %1056 = vmatprep.subr.bf16.mxu0 0
      %1057 = vmatpush1.bf16.msra.mxu0 0
      %1058 = vmatprep.subr.bf16.mxu0 0
      %1059 = vmatpush1.bf16.msra.mxu0 0
      %1060 = vmatprep.subr.bf16.mxu0 0
      %1061 = vmatpush1.bf16.msra.mxu0 0
      %1062 = vmatprep.subr.bf16.mxu0 0
      %1063 = vmatpush1.bf16.msra.mxu0 0
      %1064 = vmatprep.subr.bf16.mxu0 0
      %1065 = vmatpush1.bf16.msra.mxu0 0
      %1066 = vmatprep.subr.bf16.mxu0 0
      %1067 = vmatpush1.bf16.msra.mxu0 0
      %1068 = vmatprep.subr.bf16.mxu0 0
      %1069 = vmatpush1.bf16.msra.mxu0 0
      %1070 = vmatprep.subr.bf16.mxu0 0
      %1071 = vmatpush1.bf16.msra.mxu0 0
      %1072 = vmatprep.mubr.bf16.mxu0 0
      %1073 = vmatmul.mubr.bf16.gmra.mrb[0].mxu0 %v1029
      %v1074 = vpop.f32.mrb[0].mxu0
      %v1075 = vadd.f32 0.0, %v1074
      %v1076 = vpop.f32.mrb[0].mxu0
      %v1077 = vadd.f32 0.0, %v1076
      %v1078 = vpop.f32.mrb[0].mxu0
      %v1079 = vpop.f32.mrb[0].mxu0
      %1080 = vdwg.mxu0
      %1081 = vmatprep.subr.bf16.mxu0 0
      %1082 = vmatpush1.bf16.msra.mxu0 %v1038
      %1083 = vmatprep.subr.bf16.mxu0 0
      %1084 = vmatpush1.bf16.msra.mxu0 0
      %1085 = vmatprep.subr.bf16.mxu0 0
      %1086 = vmatpush1.bf16.msra.mxu0 0
      %1087 = vmatprep.subr.bf16.mxu0 0
      %1088 = vmatpush1.bf16.msra.mxu0 0
      %1089 = vmatprep.subr.bf16.mxu0 0
      %1090 = vmatpush1.bf16.msra.mxu0 0
      %1091 = vmatprep.subr.bf16.mxu0 0
      %1092 = vmatpush1.bf16.msra.mxu0 0
      %1093 = vmatprep.subr.bf16.mxu0 0
      %1094 = vmatpush1.bf16.msra.mxu0 0
      %1095 = vmatprep.subr.bf16.mxu0 0
      %1096 = vmatpush1.bf16.msra.mxu0 0
      %1097 = vmatprep.subr.bf16.mxu0 0
      %1098 = vmatpush1.bf16.msra.mxu0 0
      %1099 = vmatprep.subr.bf16.mxu0 0
      %1100 = vmatpush1.bf16.msra.mxu0 0
      %1101 = vmatprep.subr.bf16.mxu0 0
      %1102 = vmatpush1.bf16.msra.mxu0 0
      %1103 = vmatprep.subr.bf16.mxu0 0
      %1104 = vmatpush1.bf16.msra.mxu0 0
      %1105 = vmatprep.subr.bf16.mxu0 0
      %1106 = vmatpush1.bf16.msra.mxu0 0
      %1107 = vmatprep.subr.bf16.mxu0 0
      %1108 = vmatpush1.bf16.msra.mxu0 0
      %1109 = vmatprep.subr.bf16.mxu0 0
      %1110 = vmatpush1.bf16.msra.mxu0 0
      %1111 = vmatprep.subr.bf16.mxu0 0
      %1112 = vmatpush1.bf16.msra.mxu0 0
      %1113 = vmatprep.mubr.bf16.mxu0 0
      %1114 = vmatmul.mubr.bf16.gmra.mrb[0].mxu0 %v1029
      %v1115 = vpop.f32.mrb[0].mxu0
      %v1116 = vadd.f32 0.0, %v1115
      %v1117 = vpop.f32.mrb[0].mxu0
      %v1118 = vpop.f32.mrb[0].mxu0
      %v1119 = vpop.f32.mrb[0].mxu0
      %1120 = vdwg.mxu0
      %v1121 = vadd.f32 %v1014, %v1075
      %v1122 = vadd.f32 %v1015, %v1077
      %v1123 = vadd.f32 %v1016, %v1116
      %1124 = vrot.lane.b32.xlu0 %v496, 104
      %v1125 = vpop.permute.xlu0 %1124
      %1126 = vrot.lane.b32.xlu0 %v451, 92
      %v1127 = vpop.permute.xlu0 %1126
      %1128 = vrot.lane.b32.xlu0 %v472, 92
      %v1129 = vpop.permute.xlu0 %1128
      %1130 = vrot.lane.b32.xlu0 %v487, 92
      %v1131 = vpop.permute.xlu0 %1130
      %vm1132 = vcmask 752640
      %v1133 = vsel %vm1132, %v1127, %v1129
      %v1134 = vsel %vm1132, %v1129, %v1131
      %v1136 = vsel %vm511, %v1125, 0
      %v1139 = vsel %vm515, %v1133, 0
      %v1142 = vsel %vm515, %v1134, 0
      %v1145 = vsel %vm515, %v1131, 0
      %1147 = vmatprep.subr.bf16.mxu0 %v1142
      %1148 = vmatpush1.bf16.msra.mxu0 %v1139
      %1149 = vmatprep.subr.bf16.mxu0 0
      %1150 = vmatpush1.bf16.msra.mxu0 0
      %1151 = vmatprep.subr.bf16.mxu0 0
      %1152 = vmatpush1.bf16.msra.mxu0 0
      %1153 = vmatprep.subr.bf16.mxu0 0
      %1154 = vmatpush1.bf16.msra.mxu0 0
      %1155 = vmatprep.subr.bf16.mxu0 0
      %1156 = vmatpush1.bf16.msra.mxu0 0
      %1157 = vmatprep.subr.bf16.mxu0 0
      %1158 = vmatpush1.bf16.msra.mxu0 0
      %1159 = vmatprep.subr.bf16.mxu0 0
      %1160 = vmatpush1.bf16.msra.mxu0 0
      %1161 = vmatprep.subr.bf16.mxu0 0
      %1162 = vmatpush1.bf16.msra.mxu0 0
      %1163 = vmatprep.subr.bf16.mxu0 0
      %1164 = vmatpush1.bf16.msra.mxu0 0
      %1165 = vmatprep.subr.bf16.mxu0 0
      %1166 = vmatpush1.bf16.msra.mxu0 0
      %1167 = vmatprep.subr.bf16.mxu0 0
      %1168 = vmatpush1.bf16.msra.mxu0 0
      %1169 = vmatprep.subr.bf16.mxu0 0
      %1170 = vmatpush1.bf16.msra.mxu0 0
      %1171 = vmatprep.subr.bf16.mxu0 0
      %1172 = vmatpush1.bf16.msra.mxu0 0
      %1173 = vmatprep.subr.bf16.mxu0 0
      %1174 = vmatpush1.bf16.msra.mxu0 0
      %1175 = vmatprep.subr.bf16.mxu0 0
      %1176 = vmatpush1.bf16.msra.mxu0 0
      %1177 = vmatprep.subr.bf16.mxu0 0
      %1178 = vmatpush1.bf16.msra.mxu0 0
      %1179 = vmatprep.mubr.bf16.mxu0 0
      %1180 = vmatmul.mubr.bf16.gmra.mrb[0].mxu0 %v1136
      %v1181 = vpop.f32.mrb[0].mxu0
      %v1182 = vadd.f32 0.0, %v1181
      %v1183 = vpop.f32.mrb[0].mxu0
      %v1184 = vadd.f32 0.0, %v1183
      %v1185 = vpop.f32.mrb[0].mxu0
      %v1186 = vpop.f32.mrb[0].mxu0
      %1187 = vdwg.mxu0
      %1188 = vmatprep.subr.bf16.mxu0 0
      %1189 = vmatpush1.bf16.msra.mxu0 %v1145
      %1190 = vmatprep.subr.bf16.mxu0 0
      %1191 = vmatpush1.bf16.msra.mxu0 0
      %1192 = vmatprep.subr.bf16.mxu0 0
      %1193 = vmatpush1.bf16.msra.mxu0 0
      %1194 = vmatprep.subr.bf16.mxu0 0
      %1195 = vmatpush1.bf16.msra.mxu0 0
      %1196 = vmatprep.subr.bf16.mxu0 0
      %1197 = vmatpush1.bf16.msra.mxu0 0
      %1198 = vmatprep.subr.bf16.mxu0 0
      %1199 = vmatpush1.bf16.msra.mxu0 0
      %1200 = vmatprep.subr.bf16.mxu0 0
      %1201 = vmatpush1.bf16.msra.mxu0 0
      %1202 = vmatprep.subr.bf16.mxu0 0
      %1203 = vmatpush1.bf16.msra.mxu0 0
      %1204 = vmatprep.subr.bf16.mxu0 0
      %1205 = vmatpush1.bf16.msra.mxu0 0
      %1206 = vmatprep.subr.bf16.mxu0 0
      %1207 = vmatpush1.bf16.msra.mxu0 0
      %1208 = vmatprep.subr.bf16.mxu0 0
      %1209 = vmatpush1.bf16.msra.mxu0 0
      %1210 = vmatprep.subr.bf16.mxu0 0
      %1211 = vmatpush1.bf16.msra.mxu0 0
      %1212 = vmatprep.subr.bf16.mxu0 0
      %1213 = vmatpush1.bf16.msra.mxu0 0
      %1214 = vmatprep.subr.bf16.mxu0 0
      %1215 = vmatpush1.bf16.msra.mxu0 0
      %1216 = vmatprep.subr.bf16.mxu0 0
      %1217 = vmatpush1.bf16.msra.mxu0 0
      %1218 = vmatprep.subr.bf16.mxu0 0
      %1219 = vmatpush1.bf16.msra.mxu0 0
      %1220 = vmatprep.mubr.bf16.mxu0 0
      %1221 = vmatmul.mubr.bf16.gmra.mrb[0].mxu0 %v1136
      %v1222 = vpop.f32.mrb[0].mxu0
      %v1223 = vadd.f32 0.0, %v1222
      %v1224 = vpop.f32.mrb[0].mxu0
      %v1225 = vpop.f32.mrb[0].mxu0
      %v1226 = vpop.f32.mrb[0].mxu0
      %1227 = vdwg.mxu0
      %v1228 = vadd.f32 %v1121, %v1182
      %v1229 = vadd.f32 %v1122, %v1184
      %v1230 = vadd.f32 %v1123, %v1223
      %1231 = vrot.lane.b32.xlu0 %v496, 100
      %v1232 = vpop.permute.xlu0 %1231
      %1233 = vrot.lane.b32.xlu0 %v451, 91
      %v1234 = vpop.permute.xlu0 %1233
      %1235 = vrot.lane.b32.xlu0 %v472, 91
      %v1236 = vpop.permute.xlu0 %1235
      %1237 = vrot.lane.b32.xlu0 %v487, 91
      %v1238 = vpop.permute.xlu0 %1237
      %vm1239 = vcmask 744448
      %v1240 = vsel %vm1239, %v1234, %v1236
      %v1241 = vsel %vm1239, %v1236, %v1238
      %v1243 = vsel %vm511, %v1232, 0
      %v1246 = vsel %vm515, %v1240, 0
      %v1249 = vsel %vm515, %v1241, 0
      %v1252 = vsel %vm515, %v1238, 0
      %1254 = vmatprep.subr.bf16.mxu0 %v1249
      %1255 = vmatpush1.bf16.msra.mxu0 %v1246
      %1256 = vmatprep.subr.bf16.mxu0 0
      %1257 = vmatpush1.bf16.msra.mxu0 0
      %1258 = vmatprep.subr.bf16.mxu0 0
      %1259 = vmatpush1.bf16.msra.mxu0 0
      %1260 = vmatprep.subr.bf16.mxu0 0
      %1261 = vmatpush1.bf16.msra.mxu0 0
      %1262 = vmatprep.subr.bf16.mxu0 0
      %1263 = vmatpush1.bf16.msra.mxu0 0
      %1264 = vmatprep.subr.bf16.mxu0 0
      %1265 = vmatpush1.bf16.msra.mxu0 0
      %1266 = vmatprep.subr.bf16.mxu0 0
      %1267 = vmatpush1.bf16.msra.mxu0 0
      %1268 = vmatprep.subr.bf16.mxu0 0
      %1269 = vmatpush1.bf16.msra.mxu0 0
      %1270 = vmatprep.subr.bf16.mxu0 0
      %1271 = vmatpush1.bf16.msra.mxu0 0
      %1272 = vmatprep.subr.bf16.mxu0 0
      %1273 = vmatpush1.bf16.msra.mxu0 0
      %1274 = vmatprep.subr.bf16.mxu0 0
      %1275 = vmatpush1.bf16.msra.mxu0 0
      %1276 = vmatprep.subr.bf16.mxu0 0
      %1277 = vmatpush1.bf16.msra.mxu0 0
      %1278 = vmatprep.subr.bf16.mxu0 0
      %1279 = vmatpush1.bf16.msra.mxu0 0
      %1280 = vmatprep.subr.bf16.mxu0 0
      %1281 = vmatpush1.bf16.msra.mxu0 0
      %1282 = vmatprep.subr.bf16.mxu0 0
      %1283 = vmatpush1.bf16.msra.mxu0 0
      %1284 = vmatprep.subr.bf16.mxu0 0
      %1285 = vmatpush1.bf16.msra.mxu0 0
      %1286 = vmatprep.mubr.bf16.mxu0 0
      %1287 = vmatmul.mubr.bf16.gmra.mrb[0].mxu0 %v1243
      %v1288 = vpop.f32.mrb[0].mxu0
      %v1289 = vadd.f32 0.0, %v1288
      %v1290 = vpop.f32.mrb[0].mxu0
      %v1291 = vadd.f32 0.0, %v1290
      %v1292 = vpop.f32.mrb[0].mxu0
      %v1293 = vpop.f32.mrb[0].mxu0
      %1294 = vdwg.mxu0
      %1295 = vmatprep.subr.bf16.mxu0 0
      %1296 = vmatpush1.bf16.msra.mxu0 %v1252
      %1297 = vmatprep.subr.bf16.mxu0 0
      %1298 = vmatpush1.bf16.msra.mxu0 0
      %1299 = vmatprep.subr.bf16.mxu0 0
      %1300 = vmatpush1.bf16.msra.mxu0 0
      %1301 = vmatprep.subr.bf16.mxu0 0
      %1302 = vmatpush1.bf16.msra.mxu0 0
      %1303 = vmatprep.subr.bf16.mxu0 0
      %1304 = vmatpush1.bf16.msra.mxu0 0
      %1305 = vmatprep.subr.bf16.mxu0 0
      %1306 = vmatpush1.bf16.msra.mxu0 0
      %1307 = vmatprep.subr.bf16.mxu0 0
      %1308 = vmatpush1.bf16.msra.mxu0 0
      %1309 = vmatprep.subr.bf16.mxu0 0
      %1310 = vmatpush1.bf16.msra.mxu0 0
      %1311 = vmatprep.subr.bf16.mxu0 0
      %1312 = vmatpush1.bf16.msra.mxu0 0
      %1313 = vmatprep.subr.bf16.mxu0 0
      %1314 = vmatpush1.bf16.msra.mxu0 0
      %1315 = vmatprep.subr.bf16.mxu0 0
      %1316 = vmatpush1.bf16.msra.mxu0 0
      %1317 = vmatprep.subr.bf16.mxu0 0
      %1318 = vmatpush1.bf16.msra.mxu0 0
      %1319 = vmatprep.subr.bf16.mxu0 0
      %1320 = vmatpush1.bf16.msra.mxu0 0
      %1321 = vmatprep.subr.bf16.mxu0 0
      %1322 = vmatpush1.bf16.msra.mxu0 0
      %1323 = vmatprep.subr.bf16.mxu0 0
      %1324 = vmatpush1.bf16.msra.mxu0 0
      %1325 = vmatprep.subr.bf16.mxu0 0
      %1326 = vmatpush1.bf16.msra.mxu0 0
      %1327 = vmatprep.mubr.bf16.mxu0 0
      %1328 = vmatmul.mubr.bf16.gmra.mrb[0].mxu0 %v1243
      %v1329 = vpop.f32.mrb[0].mxu0
      %v1330 = vadd.f32 0.0, %v1329
      %v1331 = vpop.f32.mrb[0].mxu0
      %v1332 = vpop.f32.mrb[0].mxu0
      %v1333 = vpop.f32.mrb[0].mxu0
      %1334 = vdwg.mxu0
      %v1335 = vadd.f32 %v1228, %v1289
      %v1336 = vadd.f32 %v1229, %v1291
      %v1337 = vadd.f32 %v1230, %v1330
      %1338 = vrot.lane.b32.xlu0 %v496, 96
      %v1339 = vpop.permute.xlu0 %1338
      %1340 = vrot.lane.b32.xlu0 %v451, 90
      %v1341 = vpop.permute.xlu0 %1340
      %1342 = vrot.lane.b32.xlu0 %v472, 90
      %v1343 = vpop.permute.xlu0 %1342
      %1344 = vrot.lane.b32.xlu0 %v487, 90
      %v1345 = vpop.permute.xlu0 %1344
      %vm1346 = vcmask 736256
      %v1347 = vsel %vm1346, %v1341, %v1343
      %v1348 = vsel %vm1346, %v1343, %v1345
      %v1350 = vsel %vm511, %v1339, 0
      %v1353 = vsel %vm515, %v1347, 0
      %v1356 = vsel %vm515, %v1348, 0
      %v1359 = vsel %vm515, %v1345, 0
      %1361 = vmatprep.subr.bf16.mxu0 %v1356
      %1362 = vmatpush1.bf16.msra.mxu0 %v1353
      %1363 = vmatprep.subr.bf16.mxu0 0
      %1364 = vmatpush1.bf16.msra.mxu0 0
      %1365 = vmatprep.subr.bf16.mxu0 0
      %1366 = vmatpush1.bf16.msra.mxu0 0
      %1367 = vmatprep.subr.bf16.mxu0 0
      %1368 = vmatpush1.bf16.msra.mxu0 0
      %1369 = vmatprep.subr.bf16.mxu0 0
      %1370 = vmatpush1.bf16.msra.mxu0 0
      %1371 = vmatprep.subr.bf16.mxu0 0
      %1372 = vmatpush1.bf16.msra.mxu0 0
      %1373 = vmatprep.subr.bf16.mxu0 0
      %1374 = vmatpush1.bf16.msra.mxu0 0
      %1375 = vmatprep.subr.bf16.mxu0 0
      %1376 = vmatpush1.bf16.msra.mxu0 0
      %1377 = vmatprep.subr.bf16.mxu0 0
      %1378 = vmatpush1.bf16.msra.mxu0 0
      %1379 = vmatprep.subr.bf16.mxu0 0
      %1380 = vmatpush1.bf16.msra.mxu0 0
      %1381 = vmatprep.subr.bf16.mxu0 0
      %1382 = vmatpush1.bf16.msra.mxu0 0
      %1383 = vmatprep.subr.bf16.mxu0 0
      %1384 = vmatpush1.bf16.msra.mxu0 0
      %1385 = vmatprep.subr.bf16.mxu0 0
      %1386 = vmatpush1.bf16.msra.mxu0 0
      %1387 = vmatprep.subr.bf16.mxu0 0
      %1388 = vmatpush1.bf16.msra.mxu0 0
      %1389 = vmatprep.subr.bf16.mxu0 0
      %1390 = vmatpush1.bf16.msra.mxu0 0
      %1391 = vmatprep.subr.bf16.mxu0 0
      %1392 = vmatpush1.bf16.msra.mxu0 0
      %1393 = vmatprep.mubr.bf16.mxu0 0
      %1394 = vmatmul.mubr.bf16.gmra.mrb[0].mxu0 %v1350
      %v1395 = vpop.f32.mrb[0].mxu0
      %v1396 = vadd.f32 0.0, %v1395
      %v1397 = vpop.f32.mrb[0].mxu0
      %v1398 = vadd.f32 0.0, %v1397
      %v1399 = vpop.f32.mrb[0].mxu0
      %v1400 = vpop.f32.mrb[0].mxu0
      %1401 = vdwg.mxu0
      %1402 = vmatprep.subr.bf16.mxu0 0
      %1403 = vmatpush1.bf16.msra.mxu0 %v1359
      %1404 = vmatprep.subr.bf16.mxu0 0
      %1405 = vmatpush1.bf16.msra.mxu0 0
      %1406 = vmatprep.subr.bf16.mxu0 0
      %1407 = vmatpush1.bf16.msra.mxu0 0
      %1408 = vmatprep.subr.bf16.mxu0 0
      %1409 = vmatpush1.bf16.msra.mxu0 0
      %1410 = vmatprep.subr.bf16.mxu0 0
      %1411 = vmatpush1.bf16.msra.mxu0 0
      %1412 = vmatprep.subr.bf16.mxu0 0
      %1413 = vmatpush1.bf16.msra.mxu0 0
      %1414 = vmatprep.subr.bf16.mxu0 0
      %1415 = vmatpush1.bf16.msra.mxu0 0
      %1416 = vmatprep.subr.bf16.mxu0 0
      %1417 = vmatpush1.bf16.msra.mxu0 0
      %1418 = vmatprep.subr.bf16.mxu0 0
      %1419 = vmatpush1.bf16.msra.mxu0 0
      %1420 = vmatprep.subr.bf16.mxu0 0
      %1421 = vmatpush1.bf16.msra.mxu0 0
      %1422 = vmatprep.subr.bf16.mxu0 0
      %1423 = vmatpush1.bf16.msra.mxu0 0
      %1424 = vmatprep.subr.bf16.mxu0 0
      %1425 = vmatpush1.bf16.msra.mxu0 0
      %1426 = vmatprep.subr.bf16.mxu0 0
      %1427 = vmatpush1.bf16.msra.mxu0 0
      %1428 = vmatprep.subr.bf16.mxu0 0
      %1429 = vmatpush1.bf16.msra.mxu0 0
      %1430 = vmatprep.subr.bf16.mxu0 0
      %1431 = vmatpush1.bf16.msra.mxu0 0
      %1432 = vmatprep.subr.bf16.mxu0 0
      %1433 = vmatpush1.bf16.msra.mxu0 0
      %1434 = vmatprep.mubr.bf16.mxu0 0
      %1435 = vmatmul.mubr.bf16.gmra.mrb[0].mxu0 %v1350
      %v1436 = vpop.f32.mrb[0].mxu0
      %v1437 = vadd.f32 0.0, %v1436
      %v1438 = vpop.f32.mrb[0].mxu0
      %v1439 = vpop.f32.mrb[0].mxu0
      %v1440 = vpop.f32.mrb[0].mxu0
      %1441 = vdwg.mxu0
      %v1442 = vadd.f32 %v1335, %v1396
      %v1443 = vadd.f32 %v1336, %v1398
      %v1444 = vadd.f32 %v1337, %v1437
      %v1446 = vlaneseq
      %v1447 = vshrl.u32 %v1446, 7
      %v1448 = vsub.s32 0, %v1447
      %v1449 = vrot.slane %v199, %v1448
      %v1450 = vlaneseq
      %v1451 = vshrl.u32 %v1450, 7
      %v1452 = vsub.s32 1, %v1451
      %v1453 = vrot.slane %v199, %v1452
      %v1454 = vlaneseq
      %v1455 = vshrl.u32 %v1454, 7
      %v1456 = vsub.s32 2, %v1455
      %v1457 = vrot.slane %v199, %v1456
      %v1461 = vmul.f32 %v1442, %v1449
      %v1462 = vmul.f32 %v1443, %v1453
      %v1463 = vmul.f32 %v1444, %v1457
      %vm1464 = vcmask 1043456
      %v1465 = vsel %vm1464, %v1461, 0.0
      %v1466 = vsel %vm1464, %v1462, 0.0
      %v1467 = vadd.f32 %v1465, %v1466
      %vm1468 = vcmask 257024
      %v1469 = vsel %vm1468, %v1463, 0.0
      %v1470 = vadd.f32 %v1467, %v1469
      %1471 = vadd.xlane.f32.xlu0 %v1470
      %v1472 = vpop.xlane.xlu0 %1471
      %v1473 = vmul.f32 %v1472, 0.00390625
      %v1474 = vsub.f32 %v1442, %v1473
      %v1475 = vsub.f32 %v1443, %v1473
      %v1476 = vsub.f32 %v1444, %v1473
      %v1477 = vmul.f32 %v1474, %v1449
      %v1478 = vmul.f32 %v1475, %v1453
      %v1479 = vmul.f32 %v1476, %v1457
      %v1480 = vmul.f32 %v1477, %v1477
      %v1481 = vmul.f32 %v1478, %v1478
      %v1482 = vmul.f32 %v1479, %v1479
      %v1483 = vsel %vm1464, %v1480, 0.0
      %v1484 = vsel %vm1464, %v1481, 0.0
      %v1485 = vadd.f32 %v1483, %v1484
      %v1486 = vsel %vm1468, %v1482, 0.0
      %v1487 = vadd.f32 %v1485, %v1486
      %1488 = vadd.xlane.f32.xlu0 %v1487
      %v1489 = vpop.xlane.xlu0 %1488
      %v1490 = vmul.f32 %v1489, 0.00390625
      %v1491 = vadd.f32 %v1490, 1e-05
      %v1492 = vrsqrt.pop %v1491
      %v1493 = vmul.f32 %v1474, %v1492
      %v1494 = vmul.f32 %v1475, %v1492
      %v1495 = vmul.f32 %v1476, %v1492
      %v1496 = vmax.f32 %v1493, 0.0
      %v1497 = vmax.f32 %v1494, 0.0
      %v1498 = vmax.f32 %v1495, 0.0
      %v1499 = vpack.c.bf16 %v1496, %v1496
      %v1500 = vpack.c.bf16 %v1497, %v1497
      %v1501 = vpack.c.bf16 %v1498, %v1498
      %1503 = vrot.lane.b32.xlu0 %v1499, 127
      %v1504 = vpop.permute.xlu0 %1503
      %1505 = vrot.lane.b32.xlu0 %v1499, 1
      %v1506 = vpop.permute.xlu0 %1505
      %1507 = vrot.lane.b32.xlu0 %v1499, 3
      %v1508 = vpop.permute.xlu0 %1507
      %v1511 = vsel %vm213, %v1504, %v1506
      %v1513 = vsel %vm217, %v1511, %v1508
      %1514 = vrot.lane.b32.xlu0 %v1499, 109
      %v1515 = vpop.permute.xlu0 %1514
      %1516 = vrot.lane.b32.xlu0 %v1499, 111
      %v1517 = vpop.permute.xlu0 %1516
      %1518 = vrot.lane.b32.xlu0 %v1499, 113
      %v1519 = vpop.permute.xlu0 %1518
      %v1522 = vsel %vm213, %v1515, %v1517
      %v1524 = vsel %vm217, %v1522, %v1519
      %1525 = vrot.lane.b32.xlu0 %v1499, 91
      %v1526 = vpop.permute.xlu0 %1525
      %1527 = vrot.lane.b32.xlu0 %v1499, 93
      %v1528 = vpop.permute.xlu0 %1527
      %1529 = vrot.lane.b32.xlu0 %v1499, 95
      %v1530 = vpop.permute.xlu0 %1529
      %v1533 = vsel %vm213, %v1526, %v1528
      %v1535 = vsel %vm217, %v1533, %v1530
      %1536 = vrot.lane.b32.xlu0 %v1499, 73
      %v1537 = vpop.permute.xlu0 %1536
      %1538 = vrot.lane.b32.xlu0 %v1499, 75
      %v1539 = vpop.permute.xlu0 %1538
      %1540 = vrot.lane.b32.xlu0 %v1499, 77
      %v1541 = vpop.permute.xlu0 %1540
      %v1544 = vsel %vm213, %v1537, %v1539
      %v1546 = vsel %vm217, %v1544, %v1541
      %1547 = vrot.lane.b32.xlu0 %v1499, 55
      %v1548 = vpop.permute.xlu0 %1547
      %1549 = vrot.lane.b32.xlu0 %v1499, 57
      %v1550 = vpop.permute.xlu0 %1549
      %1551 = vrot.lane.b32.xlu0 %v1499, 59
      %v1552 = vpop.permute.xlu0 %1551
      %v1555 = vsel %vm213, %v1548, %v1550
      %v1557 = vsel %vm217, %v1555, %v1552
      %1558 = vrot.lane.b32.xlu0 %v1499, 37
      %v1559 = vpop.permute.xlu0 %1558
      %1560 = vrot.lane.b32.xlu0 %v1499, 39
      %v1561 = vpop.permute.xlu0 %1560
      %1562 = vrot.lane.b32.xlu0 %v1499, 41
      %v1563 = vpop.permute.xlu0 %1562
      %v1566 = vsel %vm213, %v1559, %v1561
      %v1568 = vsel %vm217, %v1566, %v1563
      %1569 = vrot.lane.b32.xlu0 %v1499, 19
      %v1570 = vpop.permute.xlu0 %1569
      %1571 = vrot.lane.b32.xlu0 %v1499, 21
      %v1572 = vpop.permute.xlu0 %1571
      %1573 = vrot.lane.b32.xlu0 %v1499, 23
      %v1574 = vpop.permute.xlu0 %1573
      %v1577 = vsel %vm213, %v1570, %v1572
      %v1579 = vsel %vm217, %v1577, %v1574
      %1581 = vrot.lane.b32.xlu0 %v1500, 3
      %v1582 = vpop.permute.xlu0 %1581
      %vm1583 = vcmask 23552
      %v1584 = vsel %vm1583, %v1508, %v1582
      %1585 = vrot.lane.b32.xlu0 %v1500, 5
      %v1586 = vpop.permute.xlu0 %1585
      %v1588 = vsel %vm213, %v1506, %v1584
      %v1590 = vsel %vm217, %v1588, %v1586
      %1591 = vrot.lane.b32.xlu0 %v1500, 111
      %v1592 = vpop.permute.xlu0 %1591
      %1593 = vrot.lane.b32.xlu0 %v1500, 113
      %v1594 = vpop.permute.xlu0 %1593
      %1595 = vrot.lane.b32.xlu0 %v1500, 115
      %v1596 = vpop.permute.xlu0 %1595
      %v1599 = vsel %vm213, %v1592, %v1594
      %v1601 = vsel %vm217, %v1599, %v1596
      %1602 = vrot.lane.b32.xlu0 %v1500, 93
      %v1603 = vpop.permute.xlu0 %1602
      %1604 = vrot.lane.b32.xlu0 %v1500, 95
      %v1605 = vpop.permute.xlu0 %1604
      %1606 = vrot.lane.b32.xlu0 %v1500, 97
      %v1607 = vpop.permute.xlu0 %1606
      %v1610 = vsel %vm213, %v1603, %v1605
      %v1612 = vsel %vm217, %v1610, %v1607
      %1613 = vrot.lane.b32.xlu0 %v1500, 75
      %v1614 = vpop.permute.xlu0 %1613
      %1615 = vrot.lane.b32.xlu0 %v1500, 77
      %v1616 = vpop.permute.xlu0 %1615
      %1617 = vrot.lane.b32.xlu0 %v1500, 79
      %v1618 = vpop.permute.xlu0 %1617
      %v1621 = vsel %vm213, %v1614, %v1616
      %v1623 = vsel %vm217, %v1621, %v1618
      %1624 = vrot.lane.b32.xlu0 %v1500, 57
      %v1625 = vpop.permute.xlu0 %1624
      %1626 = vrot.lane.b32.xlu0 %v1500, 59
      %v1627 = vpop.permute.xlu0 %1626
      %1628 = vrot.lane.b32.xlu0 %v1500, 61
      %v1629 = vpop.permute.xlu0 %1628
      %v1632 = vsel %vm213, %v1625, %v1627
      %v1634 = vsel %vm217, %v1632, %v1629
      %1635 = vrot.lane.b32.xlu0 %v1500, 39
      %v1636 = vpop.permute.xlu0 %1635
      %1637 = vrot.lane.b32.xlu0 %v1500, 41
      %v1638 = vpop.permute.xlu0 %1637
      %1639 = vrot.lane.b32.xlu0 %v1500, 43
      %v1640 = vpop.permute.xlu0 %1639
      %v1643 = vsel %vm213, %v1636, %v1638
      %v1645 = vsel %vm217, %v1643, %v1640
      %1646 = vrot.lane.b32.xlu0 %v1500, 21
      %v1647 = vpop.permute.xlu0 %1646
      %1648 = vrot.lane.b32.xlu0 %v1500, 23
      %v1649 = vpop.permute.xlu0 %1648
      %1650 = vrot.lane.b32.xlu0 %v1500, 25
      %v1651 = vpop.permute.xlu0 %1650
      %v1654 = vsel %vm213, %v1647, %v1649
      %v1656 = vsel %vm217, %v1654, %v1651
      %1658 = vrot.lane.b32.xlu0 %v1501, 5
      %v1659 = vpop.permute.xlu0 %1658
      %vm1660 = vcmask 39936
      %v1661 = vsel %vm1660, %v1586, %v1659
      %1662 = vrot.lane.b32.xlu0 %v1501, 7
      %v1663 = vpop.permute.xlu0 %1662
      %v1666 = vsel %vm213, %v1582, %v1661
      %v1668 = vsel %vm217, %v1666, %v1663
      %1669 = vrot.lane.b32.xlu0 %v1501, 113
      %v1670 = vpop.permute.xlu0 %1669
      %1671 = vrot.lane.b32.xlu0 %v1501, 115
      %v1672 = vpop.permute.xlu0 %1671
      %1673 = vrot.lane.b32.xlu0 %v1501, 117
      %v1674 = vpop.permute.xlu0 %1673
      %v1677 = vsel %vm213, %v1670, %v1672
      %v1679 = vsel %vm217, %v1677, %v1674
      %1681 = vrot.lane.b32.xlu0 %v1513, 18
      %v1682 = vpop.permute.xlu0 %1681
      %1684 = vrot.lane.b32.xlu0 %v1524, 36
      %v1685 = vpop.permute.xlu0 %1684
      %1687 = vrot.lane.b32.xlu0 %v1535, 54
      %v1688 = vpop.permute.xlu0 %1687
      %1690 = vrot.lane.b32.xlu0 %v1546, 72
      %v1691 = vpop.permute.xlu0 %1690
      %1693 = vrot.lane.b32.xlu0 %v1557, 90
      %v1694 = vpop.permute.xlu0 %1693
      %1696 = vrot.lane.b32.xlu0 %v1568, 108
      %v1697 = vpop.permute.xlu0 %1696
      %1699 = vrot.lane.b32.xlu0 %v1579, 126
      %v1700 = vpop.permute.xlu0 %1699
      %1702 = vrot.lane.b32.xlu0 %v1590, 16
      %v1703 = vpop.permute.xlu0 %1702
      %1705 = vrot.lane.b32.xlu0 %v1601, 34
      %v1706 = vpop.permute.xlu0 %1705
      %1708 = vrot.lane.b32.xlu0 %v1612, 52
      %v1709 = vpop.permute.xlu0 %1708
      %1711 = vrot.lane.b32.xlu0 %v1623, 70
      %v1712 = vpop.permute.xlu0 %1711
      %1714 = vrot.lane.b32.xlu0 %v1634, 88
      %v1715 = vpop.permute.xlu0 %1714
      %1717 = vrot.lane.b32.xlu0 %v1645, 106
      %v1718 = vpop.permute.xlu0 %1717
      %1720 = vrot.lane.b32.xlu0 %v1656, 124
      %v1721 = vpop.permute.xlu0 %1720
      %1723 = vrot.lane.b32.xlu0 %v1668, 14
      %v1724 = vpop.permute.xlu0 %1723
      %v1726 = vsel %vm431, %v1524, %v1682
      %v1728 = vsel %vm434, %v1726, %v1685
      %v1730 = vsel %vm437, %v1728, %v1688
      %v1732 = vsel %vm440, %v1730, %v1691
      %v1734 = vsel %vm443, %v1732, %v1694
      %v1736 = vsel %vm446, %v1734, %v1697
      %v1738 = vsel %vm449, %v1736, %v1700
      %v1740 = vsel %vm452, %v1700, %v1703
      %v1742 = vsel %vm455, %v1740, %v1706
      %v1744 = vsel %vm458, %v1742, %v1709
      %v1746 = vsel %vm461, %v1744, %v1712
      %v1748 = vsel %vm464, %v1746, %v1715
      %v1750 = vsel %vm467, %v1748, %v1718
      %v1752 = vsel %vm470, %v1750, %v1721
      %v1754 = vsel %vm473, %v1721, %v1724
      %1755 = vrot.lane.b32.xlu0 %v1668, 18
      %v1756 = vpop.permute.xlu0 %1755
      %v1758 = vsel %vm431, %v1679, %v1756
      %v1759 = vsel %vm434, %v1758, 0
      %1761 = vrot.lane.b32.xlu0 %v1759, 32
      %v1762 = vpop.permute.xlu0 %1761
      %v1764 = vsel %vm485, %v1754, %v1762
      %v1765 = vld [vmem:[%s2] sm:$0x3]
      %v1768 = vunpack.c.l.s4 1983009808
      %v1769 = vunpack.c.0.s8 %v1768
      %v1770 = vlaneseq
      %v1771 = vshrl.u32 %v1770, 7
      %v1772 = vsub.s32 %v1769, %v1771
      %v1773 = vrot.slane %v1765, %v1772
      %1774 = vrot.lane.b32.xlu0 %v1773, 124
      %v1775 = vpop.permute.xlu0 %1774
      %1779 = vrot.lane.b32.xlu0 %v1738, 127
      %v1780 = vpop.permute.xlu0 %1779
      %1781 = vrot.lane.b32.xlu0 %v1752, 127
      %v1782 = vpop.permute.xlu0 %1781
      %1783 = vrot.lane.b32.xlu0 %v1764, 127
      %v1784 = vpop.permute.xlu0 %1783
      %v1785 = vsel %vm508, %v1780, %v1782
      %v1786 = vsel %vm508, %v1782, %v1784
      %v1788 = vsel %vm511, %v1775, 0
      %v1791 = vsel %vm515, %v1785, 0
      %v1794 = vsel %vm515, %v1786, 0
      %v1797 = vsel %vm515, %v1784, 0
      %1799 = vmatprep.subr.bf16.mxu0 %v1794
      %1800 = vmatpush1.bf16.msra.mxu0 %v1791
      %1801 = vmatprep.subr.bf16.mxu0 0
      %1802 = vmatpush1.bf16.msra.mxu0 0
      %1803 = vmatprep.subr.bf16.mxu0 0
      %1804 = vmatpush1.bf16.msra.mxu0 0
      %1805 = vmatprep.subr.bf16.mxu0 0
      %1806 = vmatpush1.bf16.msra.mxu0 0
      %1807 = vmatprep.subr.bf16.mxu0 0
      %1808 = vmatpush1.bf16.msra.mxu0 0
      %1809 = vmatprep.subr.bf16.mxu0 0
      %1810 = vmatpush1.bf16.msra.mxu0 0
      %1811 = vmatprep.subr.bf16.mxu0 0
      %1812 = vmatpush1.bf16.msra.mxu0 0
      %1813 = vmatprep.subr.bf16.mxu0 0
      %1814 = vmatpush1.bf16.msra.mxu0 0
      %1815 = vmatprep.subr.bf16.mxu0 0
      %1816 = vmatpush1.bf16.msra.mxu0 0
      %1817 = vmatprep.subr.bf16.mxu0 0
      %1818 = vmatpush1.bf16.msra.mxu0 0
      %1819 = vmatprep.subr.bf16.mxu0 0
      %1820 = vmatpush1.bf16.msra.mxu0 0
      %1821 = vmatprep.subr.bf16.mxu0 0
      %1822 = vmatpush1.bf16.msra.mxu0 0
      %1823 = vmatprep.subr.bf16.mxu0 0
      %1824 = vmatpush1.bf16.msra.mxu0 0
      %1825 = vmatprep.subr.bf16.mxu0 0
      %1826 = vmatpush1.bf16.msra.mxu0 0
      %1827 = vmatprep.subr.bf16.mxu0 0
      %1828 = vmatpush1.bf16.msra.mxu0 0
      %1829 = vmatprep.subr.bf16.mxu0 0
      %1830 = vmatpush1.bf16.msra.mxu0 0
      %1831 = vmatprep.mubr.bf16.mxu0 0
      %1832 = vmatmul.mubr.bf16.gmra.mrb[0].mxu0 %v1788
      %v1833 = vpop.f32.mrb[0].mxu0
      %v1834 = vadd.f32 0.0, %v1833
      %v1835 = vpop.f32.mrb[0].mxu0
      %v1836 = vadd.f32 0.0, %v1835
      %v1837 = vpop.f32.mrb[0].mxu0
      %v1838 = vpop.f32.mrb[0].mxu0
      %1839 = vdwg.mxu0
      %1840 = vmatprep.subr.bf16.mxu0 0
      %1841 = vmatpush1.bf16.msra.mxu0 %v1797
      %1842 = vmatprep.subr.bf16.mxu0 0
      %1843 = vmatpush1.bf16.msra.mxu0 0
      %1844 = vmatprep.subr.bf16.mxu0 0
      %1845 = vmatpush1.bf16.msra.mxu0 0
      %1846 = vmatprep.subr.bf16.mxu0 0
      %1847 = vmatpush1.bf16.msra.mxu0 0
      %1848 = vmatprep.subr.bf16.mxu0 0
      %1849 = vmatpush1.bf16.msra.mxu0 0
      %1850 = vmatprep.subr.bf16.mxu0 0
      %1851 = vmatpush1.bf16.msra.mxu0 0
      %1852 = vmatprep.subr.bf16.mxu0 0
      %1853 = vmatpush1.bf16.msra.mxu0 0
      %1854 = vmatprep.subr.bf16.mxu0 0
      %1855 = vmatpush1.bf16.msra.mxu0 0
      %1856 = vmatprep.subr.bf16.mxu0 0
      %1857 = vmatpush1.bf16.msra.mxu0 0
      %1858 = vmatprep.subr.bf16.mxu0 0
      %1859 = vmatpush1.bf16.msra.mxu0 0
      %1860 = vmatprep.subr.bf16.mxu0 0
      %1861 = vmatpush1.bf16.msra.mxu0 0
      %1862 = vmatprep.subr.bf16.mxu0 0
      %1863 = vmatpush1.bf16.msra.mxu0 0
      %1864 = vmatprep.subr.bf16.mxu0 0
      %1865 = vmatpush1.bf16.msra.mxu0 0
      %1866 = vmatprep.subr.bf16.mxu0 0
      %1867 = vmatpush1.bf16.msra.mxu0 0
      %1868 = vmatprep.subr.bf16.mxu0 0
      %1869 = vmatpush1.bf16.msra.mxu0 0
      %1870 = vmatprep.subr.bf16.mxu0 0
      %1871 = vmatpush1.bf16.msra.mxu0 0
      %1872 = vmatprep.mubr.bf16.mxu0 0
      %1873 = vmatmul.mubr.bf16.gmra.mrb[0].mxu0 %v1788
      %v1874 = vpop.f32.mrb[0].mxu0
      %v1875 = vadd.f32 0.0, %v1874
      %v1876 = vpop.f32.mrb[0].mxu0
      %v1877 = vpop.f32.mrb[0].mxu0
      %v1878 = vpop.f32.mrb[0].mxu0
      %1879 = vdwg.mxu0
      %v1881 = vsel %vm511, %v1765, 0
      %v1883 = vsel %vm515, %v1738, 0
      %v1885 = vsel %vm515, %v1752, 0
      %v1887 = vsel %vm515, %v1764, 0
      %1889 = vmatprep.subr.bf16.mxu0 %v1885
      %1890 = vmatpush1.bf16.msra.mxu0 %v1883
      %1891 = vmatprep.subr.bf16.mxu0 0
      %1892 = vmatpush1.bf16.msra.mxu0 0
      %1893 = vmatprep.subr.bf16.mxu0 0
      %1894 = vmatpush1.bf16.msra.mxu0 0
      %1895 = vmatprep.subr.bf16.mxu0 0
      %1896 = vmatpush1.bf16.msra.mxu0 0
      %1897 = vmatprep.subr.bf16.mxu0 0
      %1898 = vmatpush1.bf16.msra.mxu0 0
      %1899 = vmatprep.subr.bf16.mxu0 0
      %1900 = vmatpush1.bf16.msra.mxu0 0
      %1901 = vmatprep.subr.bf16.mxu0 0
      %1902 = vmatpush1.bf16.msra.mxu0 0
      %1903 = vmatprep.subr.bf16.mxu0 0
      %1904 = vmatpush1.bf16.msra.mxu0 0
      %1905 = vmatprep.subr.bf16.mxu0 0
      %1906 = vmatpush1.bf16.msra.mxu0 0
      %1907 = vmatprep.subr.bf16.mxu0 0
      %1908 = vmatpush1.bf16.msra.mxu0 0
      %1909 = vmatprep.subr.bf16.mxu0 0
      %1910 = vmatpush1.bf16.msra.mxu0 0
      %1911 = vmatprep.subr.bf16.mxu0 0
      %1912 = vmatpush1.bf16.msra.mxu0 0
      %1913 = vmatprep.subr.bf16.mxu0 0
      %1914 = vmatpush1.bf16.msra.mxu0 0
      %1915 = vmatprep.subr.bf16.mxu0 0
      %1916 = vmatpush1.bf16.msra.mxu0 0
      %1917 = vmatprep.subr.bf16.mxu0 0
      %1918 = vmatpush1.bf16.msra.mxu0 0
      %1919 = vmatprep.subr.bf16.mxu0 0
      %1920 = vmatpush1.bf16.msra.mxu0 0
      %1921 = vmatprep.mubr.bf16.mxu0 0
      %1922 = vmatmul.mubr.bf16.gmra.mrb[0].mxu0 %v1881
      %v1923 = vpop.f32.mrb[0].mxu0
      %v1924 = vadd.f32 %v1834, %v1923
      %v1925 = vpop.f32.mrb[0].mxu0
      %v1926 = vadd.f32 %v1836, %v1925
      %v1927 = vpop.f32.mrb[0].mxu0
      %v1928 = vpop.f32.mrb[0].mxu0
      %1929 = vdwg.mxu0
      %1930 = vmatprep.subr.bf16.mxu0 0
      %1931 = vmatpush1.bf16.msra.mxu0 %v1887
      %1932 = vmatprep.subr.bf16.mxu0 0
      %1933 = vmatpush1.bf16.msra.mxu0 0
      %1934 = vmatprep.subr.bf16.mxu0 0
      %1935 = vmatpush1.bf16.msra.mxu0 0
      %1936 = vmatprep.subr.bf16.mxu0 0
      %1937 = vmatpush1.bf16.msra.mxu0 0
      %1938 = vmatprep.subr.bf16.mxu0 0
      %1939 = vmatpush1.bf16.msra.mxu0 0
      %1940 = vmatprep.subr.bf16.mxu0 0
      %1941 = vmatpush1.bf16.msra.mxu0 0
      %1942 = vmatprep.subr.bf16.mxu0 0
      %1943 = vmatpush1.bf16.msra.mxu0 0
      %1944 = vmatprep.subr.bf16.mxu0 0
      %1945 = vmatpush1.bf16.msra.mxu0 0
      %1946 = vmatprep.subr.bf16.mxu0 0
      %1947 = vmatpush1.bf16.msra.mxu0 0
      %1948 = vmatprep.subr.bf16.mxu0 0
      %1949 = vmatpush1.bf16.msra.mxu0 0
      %1950 = vmatprep.subr.bf16.mxu0 0
      %1951 = vmatpush1.bf16.msra.mxu0 0
      %1952 = vmatprep.subr.bf16.mxu0 0
      %1953 = vmatpush1.bf16.msra.mxu0 0
      %1954 = vmatprep.subr.bf16.mxu0 0
      %1955 = vmatpush1.bf16.msra.mxu0 0
      %1956 = vmatprep.subr.bf16.mxu0 0
      %1957 = vmatpush1.bf16.msra.mxu0 0
      %1958 = vmatprep.subr.bf16.mxu0 0
      %1959 = vmatpush1.bf16.msra.mxu0 0
      %1960 = vmatprep.subr.bf16.mxu0 0
      %1961 = vmatpush1.bf16.msra.mxu0 0
      %1962 = vmatprep.mubr.bf16.mxu0 0
      %1963 = vmatmul.mubr.bf16.gmra.mrb[0].mxu0 %v1881
      %v1964 = vpop.f32.mrb[0].mxu0
      %v1965 = vadd.f32 %v1875, %v1964
      %v1966 = vpop.f32.mrb[0].mxu0
      %v1967 = vpop.f32.mrb[0].mxu0
      %v1968 = vpop.f32.mrb[0].mxu0
      %1969 = vdwg.mxu0
      %1970 = vrot.lane.b32.xlu0 %v1773, 120
      %v1971 = vpop.permute.xlu0 %1970
      %1972 = vrot.lane.b32.xlu0 %v1738, 126
      %v1973 = vpop.permute.xlu0 %1972
      %1974 = vrot.lane.b32.xlu0 %v1752, 126
      %v1975 = vpop.permute.xlu0 %1974
      %1976 = vrot.lane.b32.xlu0 %v1764, 126
      %v1977 = vpop.permute.xlu0 %1976
      %v1978 = vsel %vm704, %v1973, %v1975
      %v1979 = vsel %vm704, %v1975, %v1977
      %v1981 = vsel %vm511, %v1971, 0
      %v1984 = vsel %vm515, %v1978, 0
      %v1987 = vsel %vm515, %v1979, 0
      %v1990 = vsel %vm515, %v1977, 0
      %1992 = vmatprep.subr.bf16.mxu0 %v1987
      %1993 = vmatpush1.bf16.msra.mxu0 %v1984
      %1994 = vmatprep.subr.bf16.mxu0 0
      %1995 = vmatpush1.bf16.msra.mxu0 0
      %1996 = vmatprep.subr.bf16.mxu0 0
      %1997 = vmatpush1.bf16.msra.mxu0 0
      %1998 = vmatprep.subr.bf16.mxu0 0
      %1999 = vmatpush1.bf16.msra.mxu0 0
      %2000 = vmatprep.subr.bf16.mxu0 0
      %2001 = vmatpush1.bf16.msra.mxu0 0
      %2002 = vmatprep.subr.bf16.mxu0 0
      %2003 = vmatpush1.bf16.msra.mxu0 0
      %2004 = vmatprep.subr.bf16.mxu0 0
      %2005 = vmatpush1.bf16.msra.mxu0 0
      %2006 = vmatprep.subr.bf16.mxu0 0
      %2007 = vmatpush1.bf16.msra.mxu0 0
      %2008 = vmatprep.subr.bf16.mxu0 0
      %2009 = vmatpush1.bf16.msra.mxu0 0
      %2010 = vmatprep.subr.bf16.mxu0 0
      %2011 = vmatpush1.bf16.msra.mxu0 0
      %2012 = vmatprep.subr.bf16.mxu0 0
      %2013 = vmatpush1.bf16.msra.mxu0 0
      %2014 = vmatprep.subr.bf16.mxu0 0
      %2015 = vmatpush1.bf16.msra.mxu0 0
      %2016 = vmatprep.subr.bf16.mxu0 0
      %2017 = vmatpush1.bf16.msra.mxu0 0
      %2018 = vmatprep.subr.bf16.mxu0 0
      %2019 = vmatpush1.bf16.msra.mxu0 0
      %2020 = vmatprep.subr.bf16.mxu0 0
      %2021 = vmatpush1.bf16.msra.mxu0 0
      %2022 = vmatprep.subr.bf16.mxu0 0
      %2023 = vmatpush1.bf16.msra.mxu0 0
      %2024 = vmatprep.mubr.bf16.mxu0 0
      %2025 = vmatmul.mubr.bf16.gmra.mrb[0].mxu0 %v1981
      %v2026 = vpop.f32.mrb[0].mxu0
      %v2027 = vadd.f32 0.0, %v2026
      %v2028 = vpop.f32.mrb[0].mxu0
      %v2029 = vadd.f32 0.0, %v2028
      %v2030 = vpop.f32.mrb[0].mxu0
      %v2031 = vpop.f32.mrb[0].mxu0
      %2032 = vdwg.mxu0
      %2033 = vmatprep.subr.bf16.mxu0 0
      %2034 = vmatpush1.bf16.msra.mxu0 %v1990
      %2035 = vmatprep.subr.bf16.mxu0 0
      %2036 = vmatpush1.bf16.msra.mxu0 0
      %2037 = vmatprep.subr.bf16.mxu0 0
      %2038 = vmatpush1.bf16.msra.mxu0 0
      %2039 = vmatprep.subr.bf16.mxu0 0
      %2040 = vmatpush1.bf16.msra.mxu0 0
      %2041 = vmatprep.subr.bf16.mxu0 0
      %2042 = vmatpush1.bf16.msra.mxu0 0
      %2043 = vmatprep.subr.bf16.mxu0 0
      %2044 = vmatpush1.bf16.msra.mxu0 0
      %2045 = vmatprep.subr.bf16.mxu0 0
      %2046 = vmatpush1.bf16.msra.mxu0 0
      %2047 = vmatprep.subr.bf16.mxu0 0
      %2048 = vmatpush1.bf16.msra.mxu0 0
      %2049 = vmatprep.subr.bf16.mxu0 0
      %2050 = vmatpush1.bf16.msra.mxu0 0
      %2051 = vmatprep.subr.bf16.mxu0 0
      %2052 = vmatpush1.bf16.msra.mxu0 0
      %2053 = vmatprep.subr.bf16.mxu0 0
      %2054 = vmatpush1.bf16.msra.mxu0 0
      %2055 = vmatprep.subr.bf16.mxu0 0
      %2056 = vmatpush1.bf16.msra.mxu0 0
      %2057 = vmatprep.subr.bf16.mxu0 0
      %2058 = vmatpush1.bf16.msra.mxu0 0
      %2059 = vmatprep.subr.bf16.mxu0 0
      %2060 = vmatpush1.bf16.msra.mxu0 0
      %2061 = vmatprep.subr.bf16.mxu0 0
      %2062 = vmatpush1.bf16.msra.mxu0 0
      %2063 = vmatprep.subr.bf16.mxu0 0
      %2064 = vmatpush1.bf16.msra.mxu0 0
      %2065 = vmatprep.mubr.bf16.mxu0 0
      %2066 = vmatmul.mubr.bf16.gmra.mrb[0].mxu0 %v1981
      %v2067 = vpop.f32.mrb[0].mxu0
      %v2068 = vadd.f32 0.0, %v2067
      %v2069 = vpop.f32.mrb[0].mxu0
      %v2070 = vpop.f32.mrb[0].mxu0
      %v2071 = vpop.f32.mrb[0].mxu0
      %2072 = vdwg.mxu0
      %v2073 = vadd.f32 %v1924, %v2027
      %v2074 = vadd.f32 %v1926, %v2029
      %v2075 = vadd.f32 %v1965, %v2068
      %2076 = vrot.lane.b32.xlu0 %v1773, 116
      %v2077 = vpop.permute.xlu0 %2076
      %2078 = vrot.lane.b32.xlu0 %v1738, 110
      %v2079 = vpop.permute.xlu0 %2078
      %2080 = vrot.lane.b32.xlu0 %v1752, 110
      %v2081 = vpop.permute.xlu0 %2080
      %2082 = vrot.lane.b32.xlu0 %v1764, 110
      %v2083 = vpop.permute.xlu0 %2082
      %v2084 = vsel %vm811, %v2079, %v2081
      %v2085 = vsel %vm811, %v2081, %v2083
      %v2087 = vsel %vm511, %v2077, 0
      %v2090 = vsel %vm515, %v2084, 0
      %v2093 = vsel %vm515, %v2085, 0
      %v2096 = vsel %vm515, %v2083, 0
      %2098 = vmatprep.subr.bf16.mxu0 %v2093
      %2099 = vmatpush1.bf16.msra.mxu0 %v2090
      %2100 = vmatprep.subr.bf16.mxu0 0
      %2101 = vmatpush1.bf16.msra.mxu0 0
      %2102 = vmatprep.subr.bf16.mxu0 0
      %2103 = vmatpush1.bf16.msra.mxu0 0
      %2104 = vmatprep.subr.bf16.mxu0 0
      %2105 = vmatpush1.bf16.msra.mxu0 0
      %2106 = vmatprep.subr.bf16.mxu0 0
      %2107 = vmatpush1.bf16.msra.mxu0 0
      %2108 = vmatprep.subr.bf16.mxu0 0
      %2109 = vmatpush1.bf16.msra.mxu0 0
      %2110 = vmatprep.subr.bf16.mxu0 0
      %2111 = vmatpush1.bf16.msra.mxu0 0
      %2112 = vmatprep.subr.bf16.mxu0 0
      %2113 = vmatpush1.bf16.msra.mxu0 0
      %2114 = vmatprep.subr.bf16.mxu0 0
      %2115 = vmatpush1.bf16.msra.mxu0 0
      %2116 = vmatprep.subr.bf16.mxu0 0
      %2117 = vmatpush1.bf16.msra.mxu0 0
      %2118 = vmatprep.subr.bf16.mxu0 0
      %2119 = vmatpush1.bf16.msra.mxu0 0
      %2120 = vmatprep.subr.bf16.mxu0 0
      %2121 = vmatpush1.bf16.msra.mxu0 0
      %2122 = vmatprep.subr.bf16.mxu0 0
      %2123 = vmatpush1.bf16.msra.mxu0 0
      %2124 = vmatprep.subr.bf16.mxu0 0
      %2125 = vmatpush1.bf16.msra.mxu0 0
      %2126 = vmatprep.subr.bf16.mxu0 0
      %2127 = vmatpush1.bf16.msra.mxu0 0
      %2128 = vmatprep.subr.bf16.mxu0 0
      %2129 = vmatpush1.bf16.msra.mxu0 0
      %2130 = vmatprep.mubr.bf16.mxu0 0
      %2131 = vmatmul.mubr.bf16.gmra.mrb[0].mxu0 %v2087
      %v2132 = vpop.f32.mrb[0].mxu0
      %v2133 = vadd.f32 0.0, %v2132
      %v2134 = vpop.f32.mrb[0].mxu0
      %v2135 = vadd.f32 0.0, %v2134
      %v2136 = vpop.f32.mrb[0].mxu0
      %v2137 = vpop.f32.mrb[0].mxu0
      %2138 = vdwg.mxu0
      %2139 = vmatprep.subr.bf16.mxu0 0
      %2140 = vmatpush1.bf16.msra.mxu0 %v2096
      %2141 = vmatprep.subr.bf16.mxu0 0
      %2142 = vmatpush1.bf16.msra.mxu0 0
      %2143 = vmatprep.subr.bf16.mxu0 0
      %2144 = vmatpush1.bf16.msra.mxu0 0
      %2145 = vmatprep.subr.bf16.mxu0 0
      %2146 = vmatpush1.bf16.msra.mxu0 0
      %2147 = vmatprep.subr.bf16.mxu0 0
      %2148 = vmatpush1.bf16.msra.mxu0 0
      %2149 = vmatprep.subr.bf16.mxu0 0
      %2150 = vmatpush1.bf16.msra.mxu0 0
      %2151 = vmatprep.subr.bf16.mxu0 0
      %2152 = vmatpush1.bf16.msra.mxu0 0
      %2153 = vmatprep.subr.bf16.mxu0 0
      %2154 = vmatpush1.bf16.msra.mxu0 0
      %2155 = vmatprep.subr.bf16.mxu0 0
      %2156 = vmatpush1.bf16.msra.mxu0 0
      %2157 = vmatprep.subr.bf16.mxu0 0
      %2158 = vmatpush1.bf16.msra.mxu0 0
      %2159 = vmatprep.subr.bf16.mxu0 0
      %2160 = vmatpush1.bf16.msra.mxu0 0
      %2161 = vmatprep.subr.bf16.mxu0 0
      %2162 = vmatpush1.bf16.msra.mxu0 0
      %2163 = vmatprep.subr.bf16.mxu0 0
      %2164 = vmatpush1.bf16.msra.mxu0 0
      %2165 = vmatprep.subr.bf16.mxu0 0
      %2166 = vmatpush1.bf16.msra.mxu0 0
      %2167 = vmatprep.subr.bf16.mxu0 0
      %2168 = vmatpush1.bf16.msra.mxu0 0
      %2169 = vmatprep.subr.bf16.mxu0 0
      %2170 = vmatpush1.bf16.msra.mxu0 0
      %2171 = vmatprep.mubr.bf16.mxu0 0
      %2172 = vmatmul.mubr.bf16.gmra.mrb[0].mxu0 %v2087
      %v2173 = vpop.f32.mrb[0].mxu0
      %v2174 = vadd.f32 0.0, %v2173
      %v2175 = vpop.f32.mrb[0].mxu0
      %v2176 = vpop.f32.mrb[0].mxu0
      %v2177 = vpop.f32.mrb[0].mxu0
      %2178 = vdwg.mxu0
      %v2179 = vadd.f32 %v2073, %v2133
      %v2180 = vadd.f32 %v2074, %v2135
      %v2181 = vadd.f32 %v2075, %v2174
      %2182 = vrot.lane.b32.xlu0 %v1773, 112
      %v2183 = vpop.permute.xlu0 %2182
      %2184 = vrot.lane.b32.xlu0 %v1738, 109
      %v2185 = vpop.permute.xlu0 %2184
      %2186 = vrot.lane.b32.xlu0 %v1752, 109
      %v2187 = vpop.permute.xlu0 %2186
      %2188 = vrot.lane.b32.xlu0 %v1764, 109
      %v2189 = vpop.permute.xlu0 %2188
      %v2190 = vsel %vm918, %v2185, %v2187
      %v2191 = vsel %vm918, %v2187, %v2189
      %v2193 = vsel %vm511, %v2183, 0
      %v2196 = vsel %vm515, %v2190, 0
      %v2199 = vsel %vm515, %v2191, 0
      %v2202 = vsel %vm515, %v2189, 0
      %2204 = vmatprep.subr.bf16.mxu0 %v2199
      %2205 = vmatpush1.bf16.msra.mxu0 %v2196
      %2206 = vmatprep.subr.bf16.mxu0 0
      %2207 = vmatpush1.bf16.msra.mxu0 0
      %2208 = vmatprep.subr.bf16.mxu0 0
      %2209 = vmatpush1.bf16.msra.mxu0 0
      %2210 = vmatprep.subr.bf16.mxu0 0
      %2211 = vmatpush1.bf16.msra.mxu0 0
      %2212 = vmatprep.subr.bf16.mxu0 0
      %2213 = vmatpush1.bf16.msra.mxu0 0
      %2214 = vmatprep.subr.bf16.mxu0 0
      %2215 = vmatpush1.bf16.msra.mxu0 0
      %2216 = vmatprep.subr.bf16.mxu0 0
      %2217 = vmatpush1.bf16.msra.mxu0 0
      %2218 = vmatprep.subr.bf16.mxu0 0
      %2219 = vmatpush1.bf16.msra.mxu0 0
      %2220 = vmatprep.subr.bf16.mxu0 0
      %2221 = vmatpush1.bf16.msra.mxu0 0
      %2222 = vmatprep.subr.bf16.mxu0 0
      %2223 = vmatpush1.bf16.msra.mxu0 0
      %2224 = vmatprep.subr.bf16.mxu0 0
      %2225 = vmatpush1.bf16.msra.mxu0 0
      %2226 = vmatprep.subr.bf16.mxu0 0
      %2227 = vmatpush1.bf16.msra.mxu0 0
      %2228 = vmatprep.subr.bf16.mxu0 0
      %2229 = vmatpush1.bf16.msra.mxu0 0
      %2230 = vmatprep.subr.bf16.mxu0 0
      %2231 = vmatpush1.bf16.msra.mxu0 0
      %2232 = vmatprep.subr.bf16.mxu0 0
      %2233 = vmatpush1.bf16.msra.mxu0 0
      %2234 = vmatprep.subr.bf16.mxu0 0
      %2235 = vmatpush1.bf16.msra.mxu0 0
      %2236 = vmatprep.mubr.bf16.mxu0 0
      %2237 = vmatmul.mubr.bf16.gmra.mrb[0].mxu0 %v2193
      %v2238 = vpop.f32.mrb[0].mxu0
      %v2239 = vadd.f32 0.0, %v2238
      %v2240 = vpop.f32.mrb[0].mxu0
      %v2241 = vadd.f32 0.0, %v2240
      %v2242 = vpop.f32.mrb[0].mxu0
      %v2243 = vpop.f32.mrb[0].mxu0
      %2244 = vdwg.mxu0
      %2245 = vmatprep.subr.bf16.mxu0 0
      %2246 = vmatpush1.bf16.msra.mxu0 %v2202
      %2247 = vmatprep.subr.bf16.mxu0 0
      %2248 = vmatpush1.bf16.msra.mxu0 0
      %2249 = vmatprep.subr.bf16.mxu0 0
      %2250 = vmatpush1.bf16.msra.mxu0 0
      %2251 = vmatprep.subr.bf16.mxu0 0
      %2252 = vmatpush1.bf16.msra.mxu0 0
      %2253 = vmatprep.subr.bf16.mxu0 0
      %2254 = vmatpush1.bf16.msra.mxu0 0
      %2255 = vmatprep.subr.bf16.mxu0 0
      %2256 = vmatpush1.bf16.msra.mxu0 0
      %2257 = vmatprep.subr.bf16.mxu0 0
      %2258 = vmatpush1.bf16.msra.mxu0 0
      %2259 = vmatprep.subr.bf16.mxu0 0
      %2260 = vmatpush1.bf16.msra.mxu0 0
      %2261 = vmatprep.subr.bf16.mxu0 0
      %2262 = vmatpush1.bf16.msra.mxu0 0
      %2263 = vmatprep.subr.bf16.mxu0 0
      %2264 = vmatpush1.bf16.msra.mxu0 0
      %2265 = vmatprep.subr.bf16.mxu0 0
      %2266 = vmatpush1.bf16.msra.mxu0 0
      %2267 = vmatprep.subr.bf16.mxu0 0
      %2268 = vmatpush1.bf16.msra.mxu0 0
      %2269 = vmatprep.subr.bf16.mxu0 0
      %2270 = vmatpush1.bf16.msra.mxu0 0
      %2271 = vmatprep.subr.bf16.mxu0 0
      %2272 = vmatpush1.bf16.msra.mxu0 0
      %2273 = vmatprep.subr.bf16.mxu0 0
      %2274 = vmatpush1.bf16.msra.mxu0 0
      %2275 = vmatprep.subr.bf16.mxu0 0
      %2276 = vmatpush1.bf16.msra.mxu0 0
      %2277 = vmatprep.mubr.bf16.mxu0 0
      %2278 = vmatmul.mubr.bf16.gmra.mrb[0].mxu0 %v2193
      %v2279 = vpop.f32.mrb[0].mxu0
      %v2280 = vadd.f32 0.0, %v2279
      %v2281 = vpop.f32.mrb[0].mxu0
      %v2282 = vpop.f32.mrb[0].mxu0
      %v2283 = vpop.f32.mrb[0].mxu0
      %2284 = vdwg.mxu0
      %v2285 = vadd.f32 %v2179, %v2239
      %v2286 = vadd.f32 %v2180, %v2241
      %v2287 = vadd.f32 %v2181, %v2280
      %2288 = vrot.lane.b32.xlu0 %v1773, 108
      %v2289 = vpop.permute.xlu0 %2288
      %2290 = vrot.lane.b32.xlu0 %v1738, 108
      %v2291 = vpop.permute.xlu0 %2290
      %2292 = vrot.lane.b32.xlu0 %v1752, 108
      %v2293 = vpop.permute.xlu0 %2292
      %2294 = vrot.lane.b32.xlu0 %v1764, 108
      %v2295 = vpop.permute.xlu0 %2294
      %v2296 = vsel %vm1025, %v2291, %v2293
      %v2297 = vsel %vm1025, %v2293, %v2295
      %v2299 = vsel %vm511, %v2289, 0
      %v2302 = vsel %vm515, %v2296, 0
      %v2305 = vsel %vm515, %v2297, 0
      %v2308 = vsel %vm515, %v2295, 0
      %2310 = vmatprep.subr.bf16.mxu0 %v2305
      %2311 = vmatpush1.bf16.msra.mxu0 %v2302
      %2312 = vmatprep.subr.bf16.mxu0 0
      %2313 = vmatpush1.bf16.msra.mxu0 0
      %2314 = vmatprep.subr.bf16.mxu0 0
      %2315 = vmatpush1.bf16.msra.mxu0 0
      %2316 = vmatprep.subr.bf16.mxu0 0
      %2317 = vmatpush1.bf16.msra.mxu0 0
      %2318 = vmatprep.subr.bf16.mxu0 0
      %2319 = vmatpush1.bf16.msra.mxu0 0
      %2320 = vmatprep.subr.bf16.mxu0 0
      %2321 = vmatpush1.bf16.msra.mxu0 0
      %2322 = vmatprep.subr.bf16.mxu0 0
      %2323 = vmatpush1.bf16.msra.mxu0 0
      %2324 = vmatprep.subr.bf16.mxu0 0
      %2325 = vmatpush1.bf16.msra.mxu0 0
      %2326 = vmatprep.subr.bf16.mxu0 0
      %2327 = vmatpush1.bf16.msra.mxu0 0
      %2328 = vmatprep.subr.bf16.mxu0 0
      %2329 = vmatpush1.bf16.msra.mxu0 0
      %2330 = vmatprep.subr.bf16.mxu0 0
      %2331 = vmatpush1.bf16.msra.mxu0 0
      %2332 = vmatprep.subr.bf16.mxu0 0
      %2333 = vmatpush1.bf16.msra.mxu0 0
      %2334 = vmatprep.subr.bf16.mxu0 0
      %2335 = vmatpush1.bf16.msra.mxu0 0
      %2336 = vmatprep.subr.bf16.mxu0 0
      %2337 = vmatpush1.bf16.msra.mxu0 0
      %2338 = vmatprep.subr.bf16.mxu0 0
      %2339 = vmatpush1.bf16.msra.mxu0 0
      %2340 = vmatprep.subr.bf16.mxu0 0
      %2341 = vmatpush1.bf16.msra.mxu0 0
      %2342 = vmatprep.mubr.bf16.mxu0 0
      %2343 = vmatmul.mubr.bf16.gmra.mrb[0].mxu0 %v2299
      %v2344 = vpop.f32.mrb[0].mxu0
      %v2345 = vadd.f32 0.0, %v2344
      %v2346 = vpop.f32.mrb[0].mxu0
      %v2347 = vadd.f32 0.0, %v2346
      %v2348 = vpop.f32.mrb[0].mxu0
      %v2349 = vpop.f32.mrb[0].mxu0
      %2350 = vdwg.mxu0
      %2351 = vmatprep.subr.bf16.mxu0 0
      %2352 = vmatpush1.bf16.msra.mxu0 %v2308
      %2353 = vmatprep.subr.bf16.mxu0 0
      %2354 = vmatpush1.bf16.msra.mxu0 0
      %2355 = vmatprep.subr.bf16.mxu0 0
      %2356 = vmatpush1.bf16.msra.mxu0 0
      %2357 = vmatprep.subr.bf16.mxu0 0
      %2358 = vmatpush1.bf16.msra.mxu0 0
      %2359 = vmatprep.subr.bf16.mxu0 0
      %2360 = vmatpush1.bf16.msra.mxu0 0
      %2361 = vmatprep.subr.bf16.mxu0 0
      %2362 = vmatpush1.bf16.msra.mxu0 0
      %2363 = vmatprep.subr.bf16.mxu0 0
      %2364 = vmatpush1.bf16.msra.mxu0 0
      %2365 = vmatprep.subr.bf16.mxu0 0
      %2366 = vmatpush1.bf16.msra.mxu0 0
      %2367 = vmatprep.subr.bf16.mxu0 0
      %2368 = vmatpush1.bf16.msra.mxu0 0
      %2369 = vmatprep.subr.bf16.mxu0 0
      %2370 = vmatpush1.bf16.msra.mxu0 0
      %2371 = vmatprep.subr.bf16.mxu0 0
      %2372 = vmatpush1.bf16.msra.mxu0 0
      %2373 = vmatprep.subr.bf16.mxu0 0
      %2374 = vmatpush1.bf16.msra.mxu0 0
      %2375 = vmatprep.subr.bf16.mxu0 0
      %2376 = vmatpush1.bf16.msra.mxu0 0
      %2377 = vmatprep.subr.bf16.mxu0 0
      %2378 = vmatpush1.bf16.msra.mxu0 0
      %2379 = vmatprep.subr.bf16.mxu0 0
      %2380 = vmatpush1.bf16.msra.mxu0 0
      %2381 = vmatprep.subr.bf16.mxu0 0
      %2382 = vmatpush1.bf16.msra.mxu0 0
      %2383 = vmatprep.mubr.bf16.mxu0 0
      %2384 = vmatmul.mubr.bf16.gmra.mrb[0].mxu0 %v2299
      %v2385 = vpop.f32.mrb[0].mxu0
      %v2386 = vadd.f32 0.0, %v2385
      %v2387 = vpop.f32.mrb[0].mxu0
      %v2388 = vpop.f32.mrb[0].mxu0
      %v2389 = vpop.f32.mrb[0].mxu0
      %2390 = vdwg.mxu0
      %v2391 = vadd.f32 %v2285, %v2345
      %v2392 = vadd.f32 %v2286, %v2347
      %v2393 = vadd.f32 %v2287, %v2386
      %2394 = vrot.lane.b32.xlu0 %v1773, 104
      %v2395 = vpop.permute.xlu0 %2394
      %2396 = vrot.lane.b32.xlu0 %v1738, 92
      %v2397 = vpop.permute.xlu0 %2396
      %2398 = vrot.lane.b32.xlu0 %v1752, 92
      %v2399 = vpop.permute.xlu0 %2398
      %2400 = vrot.lane.b32.xlu0 %v1764, 92
      %v2401 = vpop.permute.xlu0 %2400
      %v2402 = vsel %vm1132, %v2397, %v2399
      %v2403 = vsel %vm1132, %v2399, %v2401
      %v2405 = vsel %vm511, %v2395, 0
      %v2408 = vsel %vm515, %v2402, 0
      %v2411 = vsel %vm515, %v2403, 0
      %v2414 = vsel %vm515, %v2401, 0
      %2416 = vmatprep.subr.bf16.mxu0 %v2411
      %2417 = vmatpush1.bf16.msra.mxu0 %v2408
      %2418 = vmatprep.subr.bf16.mxu0 0
      %2419 = vmatpush1.bf16.msra.mxu0 0
      %2420 = vmatprep.subr.bf16.mxu0 0
      %2421 = vmatpush1.bf16.msra.mxu0 0
      %2422 = vmatprep.subr.bf16.mxu0 0
      %2423 = vmatpush1.bf16.msra.mxu0 0
      %2424 = vmatprep.subr.bf16.mxu0 0
      %2425 = vmatpush1.bf16.msra.mxu0 0
      %2426 = vmatprep.subr.bf16.mxu0 0
      %2427 = vmatpush1.bf16.msra.mxu0 0
      %2428 = vmatprep.subr.bf16.mxu0 0
      %2429 = vmatpush1.bf16.msra.mxu0 0
      %2430 = vmatprep.subr.bf16.mxu0 0
      %2431 = vmatpush1.bf16.msra.mxu0 0
      %2432 = vmatprep.subr.bf16.mxu0 0
      %2433 = vmatpush1.bf16.msra.mxu0 0
      %2434 = vmatprep.subr.bf16.mxu0 0
      %2435 = vmatpush1.bf16.msra.mxu0 0
      %2436 = vmatprep.subr.bf16.mxu0 0
      %2437 = vmatpush1.bf16.msra.mxu0 0
      %2438 = vmatprep.subr.bf16.mxu0 0
      %2439 = vmatpush1.bf16.msra.mxu0 0
      %2440 = vmatprep.subr.bf16.mxu0 0
      %2441 = vmatpush1.bf16.msra.mxu0 0
      %2442 = vmatprep.subr.bf16.mxu0 0
      %2443 = vmatpush1.bf16.msra.mxu0 0
      %2444 = vmatprep.subr.bf16.mxu0 0
      %2445 = vmatpush1.bf16.msra.mxu0 0
      %2446 = vmatprep.subr.bf16.mxu0 0
      %2447 = vmatpush1.bf16.msra.mxu0 0
      %2448 = vmatprep.mubr.bf16.mxu0 0
      %2449 = vmatmul.mubr.bf16.gmra.mrb[0].mxu0 %v2405
      %v2450 = vpop.f32.mrb[0].mxu0
      %v2451 = vadd.f32 0.0, %v2450
      %v2452 = vpop.f32.mrb[0].mxu0
      %v2453 = vadd.f32 0.0, %v2452
      %v2454 = vpop.f32.mrb[0].mxu0
      %v2455 = vpop.f32.mrb[0].mxu0
      %2456 = vdwg.mxu0
      %2457 = vmatprep.subr.bf16.mxu0 0
      %2458 = vmatpush1.bf16.msra.mxu0 %v2414
      %2459 = vmatprep.subr.bf16.mxu0 0
      %2460 = vmatpush1.bf16.msra.mxu0 0
      %2461 = vmatprep.subr.bf16.mxu0 0
      %2462 = vmatpush1.bf16.msra.mxu0 0
      %2463 = vmatprep.subr.bf16.mxu0 0
      %2464 = vmatpush1.bf16.msra.mxu0 0
      %2465 = vmatprep.subr.bf16.mxu0 0
      %2466 = vmatpush1.bf16.msra.mxu0 0
      %2467 = vmatprep.subr.bf16.mxu0 0
      %2468 = vmatpush1.bf16.msra.mxu0 0
      %2469 = vmatprep.subr.bf16.mxu0 0
      %2470 = vmatpush1.bf16.msra.mxu0 0
      %2471 = vmatprep.subr.bf16.mxu0 0
      %2472 = vmatpush1.bf16.msra.mxu0 0
      %2473 = vmatprep.subr.bf16.mxu0 0
      %2474 = vmatpush1.bf16.msra.mxu0 0
      %2475 = vmatprep.subr.bf16.mxu0 0
      %2476 = vmatpush1.bf16.msra.mxu0 0
      %2477 = vmatprep.subr.bf16.mxu0 0
      %2478 = vmatpush1.bf16.msra.mxu0 0
      %2479 = vmatprep.subr.bf16.mxu0 0
      %2480 = vmatpush1.bf16.msra.mxu0 0
      %2481 = vmatprep.subr.bf16.mxu0 0
      %2482 = vmatpush1.bf16.msra.mxu0 0
      %2483 = vmatprep.subr.bf16.mxu0 0
      %2484 = vmatpush1.bf16.msra.mxu0 0
      %2485 = vmatprep.subr.bf16.mxu0 0
      %2486 = vmatpush1.bf16.msra.mxu0 0
      %2487 = vmatprep.subr.bf16.mxu0 0
      %2488 = vmatpush1.bf16.msra.mxu0 0
      %2489 = vmatprep.mubr.bf16.mxu0 0
      %2490 = vmatmul.mubr.bf16.gmra.mrb[0].mxu0 %v2405
      %v2491 = vpop.f32.mrb[0].mxu0
      %v2492 = vadd.f32 0.0, %v2491
      %v2493 = vpop.f32.mrb[0].mxu0
      %v2494 = vpop.f32.mrb[0].mxu0
      %v2495 = vpop.f32.mrb[0].mxu0
      %2496 = vdwg.mxu0
      %v2497 = vadd.f32 %v2391, %v2451
      %v2498 = vadd.f32 %v2392, %v2453
      %v2499 = vadd.f32 %v2393, %v2492
      %2500 = vrot.lane.b32.xlu0 %v1773, 100
      %v2501 = vpop.permute.xlu0 %2500
      %2502 = vrot.lane.b32.xlu0 %v1738, 91
      %v2503 = vpop.permute.xlu0 %2502
      %2504 = vrot.lane.b32.xlu0 %v1752, 91
      %v2505 = vpop.permute.xlu0 %2504
      %2506 = vrot.lane.b32.xlu0 %v1764, 91
      %v2507 = vpop.permute.xlu0 %2506
      %v2508 = vsel %vm1239, %v2503, %v2505
      %v2509 = vsel %vm1239, %v2505, %v2507
      %v2511 = vsel %vm511, %v2501, 0
      %v2514 = vsel %vm515, %v2508, 0
      %v2517 = vsel %vm515, %v2509, 0
      %v2520 = vsel %vm515, %v2507, 0
      %2522 = vmatprep.subr.bf16.mxu0 %v2517
      %2523 = vmatpush1.bf16.msra.mxu0 %v2514
      %2524 = vmatprep.subr.bf16.mxu0 0
      %2525 = vmatpush1.bf16.msra.mxu0 0
      %2526 = vmatprep.subr.bf16.mxu0 0
      %2527 = vmatpush1.bf16.msra.mxu0 0
      %2528 = vmatprep.subr.bf16.mxu0 0
      %2529 = vmatpush1.bf16.msra.mxu0 0
      %2530 = vmatprep.subr.bf16.mxu0 0
      %2531 = vmatpush1.bf16.msra.mxu0 0
      %2532 = vmatprep.subr.bf16.mxu0 0
      %2533 = vmatpush1.bf16.msra.mxu0 0
      %2534 = vmatprep.subr.bf16.mxu0 0
      %2535 = vmatpush1.bf16.msra.mxu0 0
      %2536 = vmatprep.subr.bf16.mxu0 0
      %2537 = vmatpush1.bf16.msra.mxu0 0
      %2538 = vmatprep.subr.bf16.mxu0 0
      %2539 = vmatpush1.bf16.msra.mxu0 0
      %2540 = vmatprep.subr.bf16.mxu0 0
      %2541 = vmatpush1.bf16.msra.mxu0 0
      %2542 = vmatprep.subr.bf16.mxu0 0
      %2543 = vmatpush1.bf16.msra.mxu0 0
      %2544 = vmatprep.subr.bf16.mxu0 0
      %2545 = vmatpush1.bf16.msra.mxu0 0
      %2546 = vmatprep.subr.bf16.mxu0 0
      %2547 = vmatpush1.bf16.msra.mxu0 0
      %2548 = vmatprep.subr.bf16.mxu0 0
      %2549 = vmatpush1.bf16.msra.mxu0 0
      %2550 = vmatprep.subr.bf16.mxu0 0
      %2551 = vmatpush1.bf16.msra.mxu0 0
      %2552 = vmatprep.subr.bf16.mxu0 0
      %2553 = vmatpush1.bf16.msra.mxu0 0
      %2554 = vmatprep.mubr.bf16.mxu0 0
      %2555 = vmatmul.mubr.bf16.gmra.mrb[0].mxu0 %v2511
      %v2556 = vpop.f32.mrb[0].mxu0
      %v2557 = vadd.f32 0.0, %v2556
      %v2558 = vpop.f32.mrb[0].mxu0
      %v2559 = vadd.f32 0.0, %v2558
      %v2560 = vpop.f32.mrb[0].mxu0
      %v2561 = vpop.f32.mrb[0].mxu0
      %2562 = vdwg.mxu0
      %2563 = vmatprep.subr.bf16.mxu0 0
      %2564 = vmatpush1.bf16.msra.mxu0 %v2520
      %2565 = vmatprep.subr.bf16.mxu0 0
      %2566 = vmatpush1.bf16.msra.mxu0 0
      %2567 = vmatprep.subr.bf16.mxu0 0
      %2568 = vmatpush1.bf16.msra.mxu0 0
      %2569 = vmatprep.subr.bf16.mxu0 0
      %2570 = vmatpush1.bf16.msra.mxu0 0
      %2571 = vmatprep.subr.bf16.mxu0 0
      %2572 = vmatpush1.bf16.msra.mxu0 0
      %2573 = vmatprep.subr.bf16.mxu0 0
      %2574 = vmatpush1.bf16.msra.mxu0 0
      %2575 = vmatprep.subr.bf16.mxu0 0
      %2576 = vmatpush1.bf16.msra.mxu0 0
      %2577 = vmatprep.subr.bf16.mxu0 0
      %2578 = vmatpush1.bf16.msra.mxu0 0
      %2579 = vmatprep.subr.bf16.mxu0 0
      %2580 = vmatpush1.bf16.msra.mxu0 0
      %2581 = vmatprep.subr.bf16.mxu0 0
      %2582 = vmatpush1.bf16.msra.mxu0 0
      %2583 = vmatprep.subr.bf16.mxu0 0
      %2584 = vmatpush1.bf16.msra.mxu0 0
      %2585 = vmatprep.subr.bf16.mxu0 0
      %2586 = vmatpush1.bf16.msra.mxu0 0
      %2587 = vmatprep.subr.bf16.mxu0 0
      %2588 = vmatpush1.bf16.msra.mxu0 0
      %2589 = vmatprep.subr.bf16.mxu0 0
      %2590 = vmatpush1.bf16.msra.mxu0 0
      %2591 = vmatprep.subr.bf16.mxu0 0
      %2592 = vmatpush1.bf16.msra.mxu0 0
      %2593 = vmatprep.subr.bf16.mxu0 0
      %2594 = vmatpush1.bf16.msra.mxu0 0
      %2595 = vmatprep.mubr.bf16.mxu0 0
      %2596 = vmatmul.mubr.bf16.gmra.mrb[0].mxu0 %v2511
      %v2597 = vpop.f32.mrb[0].mxu0
      %v2598 = vadd.f32 0.0, %v2597
      %v2599 = vpop.f32.mrb[0].mxu0
      %v2600 = vpop.f32.mrb[0].mxu0
      %v2601 = vpop.f32.mrb[0].mxu0
      %2602 = vdwg.mxu0
      %v2603 = vadd.f32 %v2497, %v2557
      %v2604 = vadd.f32 %v2498, %v2559
      %v2605 = vadd.f32 %v2499, %v2598
      %2606 = vrot.lane.b32.xlu0 %v1773, 96
      %v2607 = vpop.permute.xlu0 %2606
      %2608 = vrot.lane.b32.xlu0 %v1738, 90
      %v2609 = vpop.permute.xlu0 %2608
      %2610 = vrot.lane.b32.xlu0 %v1752, 90
      %v2611 = vpop.permute.xlu0 %2610
      %2612 = vrot.lane.b32.xlu0 %v1764, 90
      %v2613 = vpop.permute.xlu0 %2612
      %v2614 = vsel %vm1346, %v2609, %v2611
      %v2615 = vsel %vm1346, %v2611, %v2613
      %v2617 = vsel %vm511, %v2607, 0
      %v2620 = vsel %vm515, %v2614, 0
      %v2623 = vsel %vm515, %v2615, 0
      %v2626 = vsel %vm515, %v2613, 0
      %2628 = vmatprep.subr.bf16.mxu0 %v2623
      %2629 = vmatpush1.bf16.msra.mxu0 %v2620
      %2630 = vmatprep.subr.bf16.mxu0 0
      %2631 = vmatpush1.bf16.msra.mxu0 0
      %2632 = vmatprep.subr.bf16.mxu0 0
      %2633 = vmatpush1.bf16.msra.mxu0 0
      %2634 = vmatprep.subr.bf16.mxu0 0
      %2635 = vmatpush1.bf16.msra.mxu0 0
      %2636 = vmatprep.subr.bf16.mxu0 0
      %2637 = vmatpush1.bf16.msra.mxu0 0
      %2638 = vmatprep.subr.bf16.mxu0 0
      %2639 = vmatpush1.bf16.msra.mxu0 0
      %2640 = vmatprep.subr.bf16.mxu0 0
      %2641 = vmatpush1.bf16.msra.mxu0 0
      %2642 = vmatprep.subr.bf16.mxu0 0
      %2643 = vmatpush1.bf16.msra.mxu0 0
      %2644 = vmatprep.subr.bf16.mxu0 0
      %2645 = vmatpush1.bf16.msra.mxu0 0
      %2646 = vmatprep.subr.bf16.mxu0 0
      %2647 = vmatpush1.bf16.msra.mxu0 0
      %2648 = vmatprep.subr.bf16.mxu0 0
      %2649 = vmatpush1.bf16.msra.mxu0 0
      %2650 = vmatprep.subr.bf16.mxu0 0
      %2651 = vmatpush1.bf16.msra.mxu0 0
      %2652 = vmatprep.subr.bf16.mxu0 0
      %2653 = vmatpush1.bf16.msra.mxu0 0
      %2654 = vmatprep.subr.bf16.mxu0 0
      %2655 = vmatpush1.bf16.msra.mxu0 0
      %2656 = vmatprep.subr.bf16.mxu0 0
      %2657 = vmatpush1.bf16.msra.mxu0 0
      %2658 = vmatprep.subr.bf16.mxu0 0
      %2659 = vmatpush1.bf16.msra.mxu0 0
      %2660 = vmatprep.mubr.bf16.mxu0 0
      %2661 = vmatmul.mubr.bf16.gmra.mrb[0].mxu0 %v2617
      %v2662 = vpop.f32.mrb[0].mxu0
      %v2663 = vadd.f32 0.0, %v2662
      %v2664 = vpop.f32.mrb[0].mxu0
      %v2665 = vadd.f32 0.0, %v2664
      %v2666 = vpop.f32.mrb[0].mxu0
      %v2667 = vpop.f32.mrb[0].mxu0
      %2668 = vdwg.mxu0
      %2669 = vmatprep.subr.bf16.mxu0 0
      %2670 = vmatpush1.bf16.msra.mxu0 %v2626
      %2671 = vmatprep.subr.bf16.mxu0 0
      %2672 = vmatpush1.bf16.msra.mxu0 0
      %2673 = vmatprep.subr.bf16.mxu0 0
      %2674 = vmatpush1.bf16.msra.mxu0 0
      %2675 = vmatprep.subr.bf16.mxu0 0
      %2676 = vmatpush1.bf16.msra.mxu0 0
      %2677 = vmatprep.subr.bf16.mxu0 0
      %2678 = vmatpush1.bf16.msra.mxu0 0
      %2679 = vmatprep.subr.bf16.mxu0 0
      %2680 = vmatpush1.bf16.msra.mxu0 0
      %2681 = vmatprep.subr.bf16.mxu0 0
      %2682 = vmatpush1.bf16.msra.mxu0 0
      %2683 = vmatprep.subr.bf16.mxu0 0
      %2684 = vmatpush1.bf16.msra.mxu0 0
      %2685 = vmatprep.subr.bf16.mxu0 0
      %2686 = vmatpush1.bf16.msra.mxu0 0
      %2687 = vmatprep.subr.bf16.mxu0 0
      %2688 = vmatpush1.bf16.msra.mxu0 0
      %2689 = vmatprep.subr.bf16.mxu0 0
      %2690 = vmatpush1.bf16.msra.mxu0 0
      %2691 = vmatprep.subr.bf16.mxu0 0
      %2692 = vmatpush1.bf16.msra.mxu0 0
      %2693 = vmatprep.subr.bf16.mxu0 0
      %2694 = vmatpush1.bf16.msra.mxu0 0
      %2695 = vmatprep.subr.bf16.mxu0 0
      %2696 = vmatpush1.bf16.msra.mxu0 0
      %2697 = vmatprep.subr.bf16.mxu0 0
      %2698 = vmatpush1.bf16.msra.mxu0 0
      %2699 = vmatprep.subr.bf16.mxu0 0
      %2700 = vmatpush1.bf16.msra.mxu0 0
      %2701 = vmatprep.mubr.bf16.mxu0 0
      %2702 = vmatmul.mubr.bf16.gmra.mrb[0].mxu0 %v2617
      %v2703 = vpop.f32.mrb[0].mxu0
      %v2704 = vadd.f32 0.0, %v2703
      %v2705 = vpop.f32.mrb[0].mxu0
      %v2706 = vpop.f32.mrb[0].mxu0
      %v2707 = vpop.f32.mrb[0].mxu0
      %2708 = vdwg.mxu0
      %v2709 = vadd.f32 %v2603, %v2663
      %v2710 = vadd.f32 %v2604, %v2665
      %v2711 = vadd.f32 %v2605, %v2704
      %v2712 = vmul.f32 %v2709, %v1449
      %v2713 = vmul.f32 %v2710, %v1453
      %v2714 = vmul.f32 %v2711, %v1457
      %v2715 = vsel %vm1464, %v2712, 0.0
      %v2716 = vsel %vm1464, %v2713, 0.0
      %v2717 = vadd.f32 %v2715, %v2716
      %v2718 = vsel %vm1468, %v2714, 0.0
      %v2719 = vadd.f32 %v2717, %v2718
      %2720 = vadd.xlane.f32.xlu0 %v2719
      %v2721 = vpop.xlane.xlu0 %2720
      %v2722 = vmul.f32 %v2721, 0.00390625
      %v2723 = vsub.f32 %v2709, %v2722
      %v2724 = vsub.f32 %v2710, %v2722
      %v2725 = vsub.f32 %v2711, %v2722
      %v2726 = vmul.f32 %v2723, %v1449
      %v2727 = vmul.f32 %v2724, %v1453
      %v2728 = vmul.f32 %v2725, %v1457
      %v2729 = vmul.f32 %v2726, %v2726
      %v2730 = vmul.f32 %v2727, %v2727
      %v2731 = vmul.f32 %v2728, %v2728
      %v2732 = vsel %vm1464, %v2729, 0.0
      %v2733 = vsel %vm1464, %v2730, 0.0
      %v2734 = vadd.f32 %v2732, %v2733
      %v2735 = vsel %vm1468, %v2731, 0.0
      %v2736 = vadd.f32 %v2734, %v2735
      %2737 = vadd.xlane.f32.xlu0 %v2736
      %v2738 = vpop.xlane.xlu0 %2737
      %v2739 = vmul.f32 %v2738, 0.00390625
      %v2740 = vadd.f32 %v2739, 1e-05
      %v2741 = vrsqrt.pop %v2740
      %v2742 = vmul.f32 %v2723, %v2741
      %v2743 = vmul.f32 %v2724, %v2741
      %v2744 = vmul.f32 %v2725, %v2741
      %v2745 = vadd.f32 %v200, %v2742
      %2747 = vrot.lane.b32.xlu0 %v2742, 126
      %v2748 = vpop.permute.xlu0 %2747
      %v2750 = vadd.f32 %v200, %v2748
      %2751 = vrot.lane.b32.xlu0 %v2742, 124
      %v2752 = vpop.permute.xlu0 %2751
      %v2754 = vadd.f32 %v200, %v2752
      %2755 = vrot.lane.b32.xlu0 %v2742, 122
      %v2756 = vpop.permute.xlu0 %2755
      %v2758 = vadd.f32 %v200, %v2756
      %2759 = vrot.lane.b32.xlu0 %v2742, 120
      %v2760 = vpop.permute.xlu0 %2759
      %v2762 = vadd.f32 %v200, %v2760
      %2763 = vrot.lane.b32.xlu0 %v2742, 118
      %v2764 = vpop.permute.xlu0 %2763
      %v2766 = vadd.f32 %v200, %v2764
      %2767 = vrot.lane.b32.xlu0 %v2742, 116
      %v2768 = vpop.permute.xlu0 %2767
      %v2770 = vadd.f32 %v200, %v2768
      %v2772 = vcombine.low %v2742, %v2743
      %2773 = vrot.lane.b32.xlu0 %v2772, 114
      %v2774 = vpop.permute.xlu0 %2773
      %v2775 = vrot.slane %v2774, 4
      %vm2776 = vcmask 932864
      %v2777 = vsel %vm2776, %v2774, %v2775
      %v2779 = vadd.f32 %v200, %v2777
      %v2780 = vrot.slane %v200, 4
      %2782 = vrot.lane.b32.xlu0 %v2743, 112
      %v2783 = vpop.permute.xlu0 %2782
      %v2785 = vadd.f32 %v2780, %v2783
      %2786 = vrot.lane.b32.xlu0 %v200, 112
      %v2787 = vpop.permute.xlu0 %2786
      %v2788 = vrot.slane %v2787, 4
      %2790 = vrot.lane.b32.xlu0 %v2743, 94
      %v2791 = vpop.permute.xlu0 %2790
      %v2793 = vadd.f32 %v2788, %v2791
      %2794 = vrot.lane.b32.xlu0 %v200, 96
      %v2795 = vpop.permute.xlu0 %2794
      %v2796 = vrot.slane %v2795, 4
      %2798 = vrot.lane.b32.xlu0 %v2743, 76
      %v2799 = vpop.permute.xlu0 %2798
      %v2801 = vadd.f32 %v2796, %v2799
      %2802 = vrot.lane.b32.xlu0 %v200, 80
      %v2803 = vpop.permute.xlu0 %2802
      %v2804 = vrot.slane %v2803, 4
      %2806 = vrot.lane.b32.xlu0 %v2743, 58
      %v2807 = vpop.permute.xlu0 %2806
      %v2809 = vadd.f32 %v2804, %v2807
      %2810 = vrot.lane.b32.xlu0 %v200, 64
      %v2811 = vpop.permute.xlu0 %2810
      %v2812 = vrot.slane %v2811, 4
      %2814 = vrot.lane.b32.xlu0 %v2743, 40
      %v2815 = vpop.permute.xlu0 %2814
      %v2817 = vadd.f32 %v2812, %v2815
      %2818 = vrot.lane.b32.xlu0 %v200, 48
      %v2819 = vpop.permute.xlu0 %2818
      %v2820 = vrot.slane %v2819, 4
      %2822 = vrot.lane.b32.xlu0 %v2743, 22
      %v2823 = vpop.permute.xlu0 %2822
      %v2825 = vadd.f32 %v2820, %v2823
      %2826 = vrot.lane.b32.xlu0 %v200, 32
      %v2827 = vpop.permute.xlu0 %2826
      %v2828 = vrot.slane %v2827, 4
      %v2831 = vcombine.low %v2743, %v2744
      %2832 = vrot.lane.b32.xlu0 %v2831, 4
      %v2833 = vpop.permute.xlu0 %2832
      %v2834 = vrot.slane %v2833, 4
      %v2835 = vsel %vm511, %v2833, %v2834
      %v2837 = vadd.f32 %v2828, %v2835
      %2838 = vrot.lane.b32.xlu0 %v200, 16
      %v2839 = vpop.permute.xlu0 %2838
      %v2840 = vrot.slane %v2839, 4
      %2842 = vrot.lane.b32.xlu0 %v2744, 114
      %v2843 = vpop.permute.xlu0 %2842
      %v2845 = vadd.f32 %v2840, %v2843
      %2847 = vrot.lane.b32.xlu0 %v2793, 16
      %v2848 = vpop.permute.xlu0 %2847
      %2851 = vrot.lane.b32.xlu0 %v2801, 32
      %v2852 = vpop.permute.xlu0 %2851
      %2855 = vrot.lane.b32.xlu0 %v2809, 48
      %v2856 = vpop.permute.xlu0 %2855
      %2859 = vrot.lane.b32.xlu0 %v2817, 64
      %v2860 = vpop.permute.xlu0 %2859
      %2863 = vrot.lane.b32.xlu0 %v2825, 80
      %v2864 = vpop.permute.xlu0 %2863
      %2867 = vrot.lane.b32.xlu0 %v2837, 96
      %v2868 = vpop.permute.xlu0 %2867
      %2871 = vrot.lane.b32.xlu0 %v2845, 112
      %v2872 = vpop.permute.xlu0 %2871
      %v2874 = vsel %vm452, %v2745, %v2750
      %v2875 = vsel %vm485, %v2874, %v2754
      %vm2876 = vcmask 392192
      %v2877 = vsel %vm2876, %v2875, %v2758
      %vm2878 = vcmask 523264
      %v2879 = vsel %vm2878, %v2877, %v2762
      %vm2880 = vcmask 654336
      %v2881 = vsel %vm2880, %v2879, %v2766
      %vm2882 = vcmask 785408
      %v2883 = vsel %vm2882, %v2881, %v2770
      %vm2884 = vcmask 916480
      %v2885 = vsel %vm2884, %v2883, %v2779
      %v2886 = vsel %vm452, %v2785, %v2848
      %v2887 = vsel %vm485, %v2886, %v2852
      %v2888 = vsel %vm2876, %v2887, %v2856
      %v2889 = vsel %vm2878, %v2888, %v2860
      %v2890 = vsel %vm2880, %v2889, %v2864
      %v2891 = vsel %vm2882, %v2890, %v2868
      %v2892 = vsel %vm2884, %v2891, %v2872
      %v2895 = vcombine.low %v2885, %v2892
      %2897 = vst [vmem:[%s197] sm:$0xff] %v2895
      %p2898 = scmp.lt.s32.totalorder %s15, 1
      %s2899 = scalar_select %p2898, %s15, 1
      %s2900 = smul.addr %s2899, 2
      %s2901 = smul.addr %s2900, 4
      %s2902 = scalar_lea.vmem %s4, %s2901
      // Predicated region
      $region37: #{residual_block.1} parent=35 // pred_check
        %p2903 = pneg %p122
      $region38: #{residual_block.1} parent=35 // pred_check_branch
        %2905 = sbr.rel (%p2903) target = $region40
      $region39: #{residual_block.1} parent=35 // pred_region
        _
      $region40: #{residual_block.1} parent=35 // pred_fallthru
        _
    $region36: #{residual_block.1} parent=5 // pred_fallthru
      _
    %p2906 = scmp.le.s32.totalorder 2, %s10
    // Predicated region
    $region41: #{residual_block.1} parent=5 // pred_check
      %p2907 = pneg %p2906
    $region42: #{residual_block.1} parent=5 // pred_check_branch
      %2909 = sbr.rel (%p2907) target = $region44
    $region43: #{residual_block.1} parent=5 // pred_region
      %s2910 = ssub.s32 %s10, 2
      // Predicated region
      $region45: #{residual_block.1} parent=43 // pred_check
        %p2911 = pneg %p128
      $region46: #{residual_block.1} parent=43 // pred_check_branch
        %2913 = sbr.rel (%p2911) target = $region48
      $region47: #{residual_block.1} parent=43 // pred_region
        %p2914 = scmp.lt.s32.totalorder %s16, 1
        %s2915 = scalar_select %p2914, %s16, 1
        %s2916 = smul.addr %s2915, 2
        %s2917 = smul.addr %s2916, 4
        %s2918 = scalar_lea.vmem %s4, %s2917
      $region48: #{residual_block.1} parent=43 // pred_fallthru
        _
    $region44: #{residual_block.1} parent=5 // pred_fallthru
      _
  $region6: #{residual_block.1} parent=0 // loop_footer
    %s14 = sadd.s32 1, %s10
  $region7: #{residual_block.1} parent=0 // loop_footer_branch
    %9 = sbr.rel target = $region3
  $region8: #{residual_block.1} parent=0 // loop_exit
    _

</llo_original>
